<compile_context>
chip_gen: v5e
topology: v5e:2x2
jax: 0.10.0
libtpu: 0.0.40
codegen_flags: <defaults>
</compile_context>

<pallas_src>
import jax
import jax.numpy as jnp
from jax.experimental import pallas as pl
from jax.experimental.pallas import tpu as pltpu


def make_actor_kernel(num_layers, seq_len, batch_pad, gru_dim):
    L, T, Bp, H = num_layers, seq_len, batch_pad, gru_dim

    def kernel(x_ref, seq_ref, *refs):
        gru_refs = refs[:3 * L]
        (w_fc_ref, b_fc_ref, w1_ref, b1_ref, w2x_ref, w2g_ref, b2_ref,
         w3_ref, b3_ref, out_ref, hseq_scr) = refs[3 * L:]

        # ---- stacked GRU (cuDNN-style: batched input projections) ----------
        h_last = None
        for l in range(L):                       # static, small layer loop
            w_ih = gru_refs[3 * l]               # (3, in_l, H) stacked r/z/n
            w_hh = gru_refs[3 * l + 1]           # (3, H, H)    stacked r/z/n
            b = gru_refs[3 * l + 2]              # (4, 1, H): [br, bz, b_in, b_hn]

            if l == 0:
                layer_in = seq_ref[...]          # (T*Bp, F)
            else:
                layer_in = hseq_scr[...]         # (T*Bp, H), written by layer l-1

            # One matmul per gate for ALL timesteps (folded biases for r, z).
            gi_r = jnp.dot(layer_in, w_ih[0],
                           preferred_element_type=jnp.float32) + b[0]
            gi_z = jnp.dot(layer_in, w_ih[1],
                           preferred_element_type=jnp.float32) + b[1]
            gi_n = jnp.dot(layer_in, w_ih[2],
                           preferred_element_type=jnp.float32) + b[2]

            w_hr, w_hz, w_hn = w_hh[0], w_hh[1], w_hh[2]
            b_hn = b[3]

            h = jnp.zeros((Bp, H), jnp.float32)
            for t in range(T):                   # static unroll of recurrence
                s = t * Bp
                r = jax.nn.sigmoid(
                    gi_r[s:s + Bp]
                    + jnp.dot(h, w_hr, preferred_element_type=jnp.float32))
                z = jax.nn.sigmoid(
                    gi_z[s:s + Bp]
                    + jnp.dot(h, w_hz, preferred_element_type=jnp.float32))
                n = jnp.tanh(
                    gi_n[s:s + Bp]
                    + r * (jnp.dot(h, w_hn, preferred_element_type=jnp.float32)
                           + b_hn))
                h = (1.0 - z) * n + z * h
                if l < L - 1:                    # stash per-step outputs for
                    hseq_scr[pl.ds(s, Bp), :] = h  # next layer's batched proj
            h_last = h

        # ---- MLP head --------------------------------------------------------
        gru_out = (jnp.dot(h_last, w_fc_ref[...],
                           preferred_element_type=jnp.float32) + b_fc_ref[...])
        x1 = jnp.maximum(
            jnp.dot(x_ref[...], w1_ref[...],
                    preferred_element_type=jnp.float32) + b1_ref[...], 0.0)
        # cat([x1, gru_out], 1) @ W2  ==  x1 @ W2x + gru_out @ W2g
        x2 = jnp.maximum(
            jnp.dot(x1, w2x_ref[...], preferred_element_type=jnp.float32)
            + jnp.dot(gru_out, w2g_ref[...], preferred_element_type=jnp.float32)
            + b2_ref[...], 0.0)
        out_ref[...] = jnp.tanh(
            jnp.dot(x2, w3_ref[...], preferred_element_type=jnp.float32)
            + b3_ref[...])

    return kernel


def actor_forward(x, time_seq, params, *, num_layers, gru_dim):
    B, n_states = x.shape
    _, T, F = time_seq.shape
    H = gru_dim
    n_actions = params["b3"].shape[-1]
    Bp = ((B + 7) // 8) * 8                         # pad batch to full sublanes

    x_p = jnp.zeros((Bp, n_states), jnp.float32).at[:B].set(x)
    seq_tm = jnp.transpose(time_seq, (1, 0, 2))     # (T, B, F) time-major
    seq_p = jnp.zeros((T, Bp, F), jnp.float32).at[:, :B].set(seq_tm)
    seq_flat = seq_p.reshape(T * Bp, F)             # (T*Bp, F) slab

    # ---- pack GRU params: lane-aligned per-gate stacks + folded biases ------
    flat_inputs = [x_p, seq_flat]
    for l in range(num_layers):
        w_ih = params[f"w_ih_{l}"]                  # (in_l, 3H), gate order r,z,n
        w_hh = params[f"w_hh_{l}"]                  # (H, 3H)
        b_ih = params[f"b_ih_{l}"]                  # (1, 3H)
        b_hh = params[f"b_hh_{l}"]                  # (1, 3H)
        w_ih_s = jnp.stack([w_ih[:, 0:H], w_ih[:, H:2 * H], w_ih[:, 2 * H:3 * H]])
        w_hh_s = jnp.stack([w_hh[:, 0:H], w_hh[:, H:2 * H], w_hh[:, 2 * H:3 * H]])
        b_s = jnp.stack([
            b_ih[:, 0:H] + b_hh[:, 0:H],            # r: fold b_ir + b_hr
            b_ih[:, H:2 * H] + b_hh[:, H:2 * H],    # z: fold b_iz + b_hz
            b_ih[:, 2 * H:3 * H],                   # n: b_in (outside r*)
            b_hh[:, 2 * H:3 * H],                   # n: b_hn (inside r*)
        ])
        flat_inputs += [w_ih_s, w_hh_s, b_s]
    for name in ["w_fc", "b_fc", "w1", "b1", "w2x", "w2g", "b2", "w3", "b3"]:
        flat_inputs.append(params[name])

    in_specs = [pl.BlockSpec(a.shape, lambda i, nd=a.ndim: (0,) * nd)
                for a in flat_inputs]

    kernel = make_actor_kernel(num_layers, T, Bp, H)
    out = pl.pallas_call(
        kernel,
        out_shape=jax.ShapeDtypeStruct((Bp, n_actions), jnp.float32),
        grid_spec=pltpu.PrefetchScalarGridSpec(
            num_scalar_prefetch=0,
            grid=(1,),
            in_specs=in_specs,
            out_specs=pl.BlockSpec((Bp, n_actions), lambda i: (0, 0)),
            scratch_shapes=[pltpu.VMEM((T * Bp, H), jnp.float32)],
        ),
        compiler_params=pltpu.CompilerParams(dimension_semantics=("arbitrary",)),
    )(*flat_inputs)
    return out[:B]


def init_params(key, n_states, n_actions, hidden_dim, gru_dim, gru_layers,
                time_step_features, init_w=0.003):
    """Deterministic synthetic init (PyTorch-style uniform bounds)."""
    params = {}
    n_keys = 4 * gru_layers + 16
    keys = iter(jax.random.split(key, n_keys))

    def uni(shape, bound):
        return jax.random.uniform(next(keys), shape, jnp.float32, -bound, bound)

    gb = 1.0 / (gru_dim ** 0.5)
    for l in range(gru_layers):
        in_l = time_step_features if l == 0 else gru_dim
        params[f"w_ih_{l}"] = uni((in_l, 3 * gru_dim), gb)
        params[f"w_hh_{l}"] = uni((gru_dim, 3 * gru_dim), gb)
        params[f"b_ih_{l}"] = uni((1, 3 * gru_dim), gb)
        params[f"b_hh_{l}"] = uni((1, 3 * gru_dim), gb)

    params["w_fc"] = uni((gru_dim, gru_dim), gb)
    params["b_fc"] = uni((1, gru_dim), gb)

    b1 = 1.0 / (n_states ** 0.5)
    params["w1"] = uni((n_states, hidden_dim), b1)
    params["b1"] = uni((1, hidden_dim), b1)

    b2 = 1.0 / ((hidden_dim + gru_dim) ** 0.5)
    params["w2x"] = uni((hidden_dim, hidden_dim), b2)   # rows matching x1
    params["w2g"] = uni((gru_dim, hidden_dim), b2)      # rows matching gru_out
    params["b2"] = uni((1, hidden_dim), b2)

    params["w3"] = uni((hidden_dim, n_actions), init_w)
    params["b3"] = uni((1, n_actions), init_w)
    return params


def actor_ref(x, time_seq, params, num_layers, gru_dim):
    """Pure-JAX reference (mirrors torch.nn.GRU + Actor.forward)."""
    H = gru_dim
    B, T, _ = time_seq.shape
    h = [jnp.zeros((B, H), jnp.float32) for _ in range(num_layers)]
    for t in range(T):
        layer_in = time_seq[:, t, :]
        for l in range(num_layers):
            gi = layer_in @ params[f"w_ih_{l}"] + params[f"b_ih_{l}"]
            gh = h[l] @ params[f"w_hh_{l}"] + params[f"b_hh_{l}"]
            r = jax.nn.sigmoid(gi[:, :H] + gh[:, :H])
            z = jax.nn.sigmoid(gi[:, H:2 * H] + gh[:, H:2 * H])
            n = jnp.tanh(gi[:, 2 * H:] + r * gh[:, 2 * H:])
            h[l] = (1.0 - z) * n + z * h[l]
            layer_in = h[l]
    gru_out = h[-1] @ params["w_fc"] + params["b_fc"]
    x1 = jax.nn.relu(x @ params["w1"] + params["b1"])
    x2 = jax.nn.relu(x1 @ params["w2x"] + gru_out @ params["w2g"] + params["b2"])
    return jnp.tanh(x2 @ params["w3"] + params["b3"])


if __name__ == "__main__":
    # Small shapes consistent with the module's forward.
    B = 4
    n_states = 16
    n_actions = 4
    hidden_dim = 32
    gru_dim = 16
    gru_layers = 2
    time_step_features = 8
    seq_len = 8

    key = jax.random.PRNGKey(0)
    k_par, k_x, k_seq = jax.random.split(key, 3)
    params = init_params(k_par, n_states, n_actions, hidden_dim, gru_dim,
                         gru_layers, time_step_features)
    x = jax.random.normal(k_x, (B, n_states), jnp.float32)
    time_seq = jax.random.normal(k_seq, (B, seq_len, time_step_features),
                                 jnp.float32)

    out = actor_forward(x, time_seq, params, num_layers=gru_layers,
                        gru_dim=gru_dim)
    out = jax.block_until_ready(out)

    ref = actor_ref(x, time_seq, params, gru_layers, gru_dim)
    assert out.shape == (B, n_actions)
    assert jnp.allclose(out, ref, atol=1e-5, rtol=1e-5), (
        f"max abs err {jnp.max(jnp.abs(out - ref))}")
    print("KERNEL_OK")
</pallas_src>

<mosaic_0001>
module attributes {stable_mosaic.version = 11 : i64} {
  func.func @kernel(%arg0: i32, %arg1: memref<8x16xf32, #tpu.memory_space<vmem>>, %arg2: memref<64x8xf32, #tpu.memory_space<vmem>>, %arg3: memref<3x8x16xf32, #tpu.memory_space<vmem>>, %arg4: memref<3x16x16xf32, #tpu.memory_space<vmem>>, %arg5: memref<4x1x16xf32, #tpu.memory_space<vmem>>, %arg6: memref<3x16x16xf32, #tpu.memory_space<vmem>>, %arg7: memref<3x16x16xf32, #tpu.memory_space<vmem>>, %arg8: memref<4x1x16xf32, #tpu.memory_space<vmem>>, %arg9: memref<16x16xf32, #tpu.memory_space<vmem>>, %arg10: memref<1x16xf32, #tpu.memory_space<vmem>>, %arg11: memref<16x32xf32, #tpu.memory_space<vmem>>, %arg12: memref<1x32xf32, #tpu.memory_space<vmem>>, %arg13: memref<32x32xf32, #tpu.memory_space<vmem>>, %arg14: memref<16x32xf32, #tpu.memory_space<vmem>>, %arg15: memref<1x32xf32, #tpu.memory_space<vmem>>, %arg16: memref<32x4xf32, #tpu.memory_space<vmem>>, %arg17: memref<1x4xf32, #tpu.memory_space<vmem>>, %arg18: memref<8x4xf32, #tpu.memory_space<vmem>>, %arg19: memref<64x16xf32, #tpu.memory_space<vmem>>) attributes {dimension_semantics = [#tpu.dimension_semantics<arbitrary>], iteration_bounds = array<i64: 1>, scalar_prefetch = 0 : i64, scratch_operands = 1 : i64, tpu.core_type = #tpu.core_type<tc>, window_params = [{pipeline_mode = #tpu.pipeline_mode<synchronous>, transform_indices = @transform_0, window_bounds = array<i64: 8, 16>}, {pipeline_mode = #tpu.pipeline_mode<synchronous>, transform_indices = @transform_1, window_bounds = array<i64: 64, 8>}, {pipeline_mode = #tpu.pipeline_mode<synchronous>, transform_indices = @transform_2, window_bounds = array<i64: 3, 8, 16>}, {pipeline_mode = #tpu.pipeline_mode<synchronous>, transform_indices = @transform_3, window_bounds = array<i64: 3, 16, 16>}, {pipeline_mode = #tpu.pipeline_mode<synchronous>, transform_indices = @transform_4, window_bounds = array<i64: 4, 1, 16>}, {pipeline_mode = #tpu.pipeline_mode<synchronous>, transform_indices = @transform_5, window_bounds = array<i64: 3, 16, 16>}, {pipeline_mode = #tpu.pipeline_mode<synchronous>, transform_indices = @transform_6, window_bounds = array<i64: 3, 16, 16>}, {pipeline_mode = #tpu.pipeline_mode<synchronous>, transform_indices = @transform_7, window_bounds = array<i64: 4, 1, 16>}, {pipeline_mode = #tpu.pipeline_mode<synchronous>, transform_indices = @transform_8, window_bounds = array<i64: 16, 16>}, {pipeline_mode = #tpu.pipeline_mode<synchronous>, transform_indices = @transform_9, window_bounds = array<i64: 1, 16>}, {pipeline_mode = #tpu.pipeline_mode<synchronous>, transform_indices = @transform_10, window_bounds = array<i64: 16, 32>}, {pipeline_mode = #tpu.pipeline_mode<synchronous>, transform_indices = @transform_11, window_bounds = array<i64: 1, 32>}, {pipeline_mode = #tpu.pipeline_mode<synchronous>, transform_indices = @transform_12, window_bounds = array<i64: 32, 32>}, {pipeline_mode = #tpu.pipeline_mode<synchronous>, transform_indices = @transform_13, window_bounds = array<i64: 16, 32>}, {pipeline_mode = #tpu.pipeline_mode<synchronous>, transform_indices = @transform_14, window_bounds = array<i64: 1, 32>}, {pipeline_mode = #tpu.pipeline_mode<synchronous>, transform_indices = @transform_15, window_bounds = array<i64: 32, 4>}, {pipeline_mode = #tpu.pipeline_mode<synchronous>, transform_indices = @transform_16, window_bounds = array<i64: 1, 4>}, {pipeline_mode = #tpu.pipeline_mode<synchronous>, transform_indices = @transform_17, window_bounds = array<i64: 8, 4>}]} {
    %c0 = arith.constant 0 : index
    %c0_0 = arith.constant 0 : index
    %0 = vector.load %arg2[%c0, %c0_0] : memref<64x8xf32, #tpu.memory_space<vmem>>, vector<64x8xf32>
    %c0_1 = arith.constant 0 : index
    %c0_2 = arith.constant 0 : index
    %c0_3 = arith.constant 0 : index
    %1 = vector.load %arg3[%c0_1, %c0_2, %c0_3] : memref<3x8x16xf32, #tpu.memory_space<vmem>>, vector<1x8x16xf32>
    %2 = vector.shape_cast %1 : vector<1x8x16xf32> to vector<8x16xf32>
    %cst = arith.constant dense<0.000000e+00> : vector<64x16xf32>
    %3 = tpu.matmul %0, %2, %cst {dimension_numbers = #tpu.dot_dimension_numbers<[1], [0], [0], [1], [0, 0, 1, 1], [], []>} : vector<64x8xf32>, vector<8x16xf32>, vector<64x16xf32> -> vector<64x16xf32>
    %c0_4 = arith.constant 0 : index
    %c0_5 = arith.constant 0 : index
    %c0_6 = arith.constant 0 : index
    %4 = vector.load %arg5[%c0_4, %c0_5, %c0_6] : memref<4x1x16xf32, #tpu.memory_space<vmem>>, vector<1x1x16xf32>
    %5 = vector.shape_cast %4 : vector<1x1x16xf32> to vector<1x16xf32>
    %6 = vector.broadcast %5 : vector<1x16xf32> to vector<64x16xf32>
    %7 = arith.addf %3, %6 : vector<64x16xf32>
    %c1 = arith.constant 1 : index
    %c0_7 = arith.constant 0 : index
    %c0_8 = arith.constant 0 : index
    %8 = vector.load %arg3[%c1, %c0_7, %c0_8] : memref<3x8x16xf32, #tpu.memory_space<vmem>>, vector<1x8x16xf32>
    %9 = vector.shape_cast %8 : vector<1x8x16xf32> to vector<8x16xf32>
    %cst_9 = arith.constant dense<0.000000e+00> : vector<64x16xf32>
    %10 = tpu.matmul %0, %9, %cst_9 {dimension_numbers = #tpu.dot_dimension_numbers<[1], [0], [0], [1], [0, 0, 1, 1], [], []>} : vector<64x8xf32>, vector<8x16xf32>, vector<64x16xf32> -> vector<64x16xf32>
    %c1_10 = arith.constant 1 : index
    %c0_11 = arith.constant 0 : index
    %c0_12 = arith.constant 0 : index
    %11 = vector.load %arg5[%c1_10, %c0_11, %c0_12] : memref<4x1x16xf32, #tpu.memory_space<vmem>>, vector<1x1x16xf32>
    %12 = vector.shape_cast %11 : vector<1x1x16xf32> to vector<1x16xf32>
    %13 = vector.broadcast %12 : vector<1x16xf32> to vector<64x16xf32>
    %14 = arith.addf %10, %13 : vector<64x16xf32>
    %c2 = arith.constant 2 : index
    %c0_13 = arith.constant 0 : index
    %c0_14 = arith.constant 0 : index
    %15 = vector.load %arg3[%c2, %c0_13, %c0_14] : memref<3x8x16xf32, #tpu.memory_space<vmem>>, vector<1x8x16xf32>
    %16 = vector.shape_cast %15 : vector<1x8x16xf32> to vector<8x16xf32>
    %cst_15 = arith.constant dense<0.000000e+00> : vector<64x16xf32>
    %17 = tpu.matmul %0, %16, %cst_15 {dimension_numbers = #tpu.dot_dimension_numbers<[1], [0], [0], [1], [0, 0, 1, 1], [], []>} : vector<64x8xf32>, vector<8x16xf32>, vector<64x16xf32> -> vector<64x16xf32>
    %c2_16 = arith.constant 2 : index
    %c0_17 = arith.constant 0 : index
    %c0_18 = arith.constant 0 : index
    %18 = vector.load %arg5[%c2_16, %c0_17, %c0_18] : memref<4x1x16xf32, #tpu.memory_space<vmem>>, vector<1x1x16xf32>
    %19 = vector.shape_cast %18 : vector<1x1x16xf32> to vector<1x16xf32>
    %20 = vector.broadcast %19 : vector<1x16xf32> to vector<64x16xf32>
    %21 = arith.addf %17, %20 : vector<64x16xf32>
    %c0_19 = arith.constant 0 : index
    %c0_20 = arith.constant 0 : index
    %c0_21 = arith.constant 0 : index
    %22 = vector.load %arg4[%c0_19, %c0_20, %c0_21] : memref<3x16x16xf32, #tpu.memory_space<vmem>>, vector<1x16x16xf32>
    %23 = vector.shape_cast %22 : vector<1x16x16xf32> to vector<16x16xf32>
    %c1_22 = arith.constant 1 : index
    %c0_23 = arith.constant 0 : index
    %c0_24 = arith.constant 0 : index
    %24 = vector.load %arg4[%c1_22, %c0_23, %c0_24] : memref<3x16x16xf32, #tpu.memory_space<vmem>>, vector<1x16x16xf32>
    %25 = vector.shape_cast %24 : vector<1x16x16xf32> to vector<16x16xf32>
    %c2_25 = arith.constant 2 : index
    %c0_26 = arith.constant 0 : index
    %c0_27 = arith.constant 0 : index
    %26 = vector.load %arg4[%c2_25, %c0_26, %c0_27] : memref<3x16x16xf32, #tpu.memory_space<vmem>>, vector<1x16x16xf32>
    %27 = vector.shape_cast %26 : vector<1x16x16xf32> to vector<16x16xf32>
    %c3 = arith.constant 3 : index
    %c0_28 = arith.constant 0 : index
    %c0_29 = arith.constant 0 : index
    %28 = vector.load %arg5[%c3, %c0_28, %c0_29] : memref<4x1x16xf32, #tpu.memory_space<vmem>>, vector<1x1x16xf32>
    %29 = vector.shape_cast %28 : vector<1x1x16xf32> to vector<1x16xf32>
    %cst_30 = arith.constant 0.000000e+00 : f32
    %30 = vector.broadcast %cst_30 : f32 to vector<8x16xf32>
    %31 = vector.extract_strided_slice %7 {offsets = [0, 0], sizes = [8, 16], strides = [1, 1]} : vector<64x16xf32> to vector<8x16xf32>
    %cst_31 = arith.constant dense<0.000000e+00> : vector<8x16xf32>
    %32 = tpu.matmul %30, %23, %cst_31 {dimension_numbers = #tpu.dot_dimension_numbers<[1], [0], [0], [1], [0, 0, 1, 1], [], []>} : vector<8x16xf32>, vector<16x16xf32>, vector<8x16xf32> -> vector<8x16xf32>
    %33 = arith.addf %31, %32 : vector<8x16xf32>
    %34 = arith.negf %33 : vector<8x16xf32>
    %35 = math.exp %34 : vector<8x16xf32>
    %cst_32 = arith.constant 1.000000e+00 : f32
    %36 = vector.broadcast %cst_32 : f32 to vector<8x16xf32>
    %37 = arith.addf %36, %35 : vector<8x16xf32>
    %38 = arith.divf %36, %37 : vector<8x16xf32>
    %39 = vector.extract_strided_slice %14 {offsets = [0, 0], sizes = [8, 16], strides = [1, 1]} : vector<64x16xf32> to vector<8x16xf32>
    %cst_33 = arith.constant dense<0.000000e+00> : vector<8x16xf32>
    %40 = tpu.matmul %30, %25, %cst_33 {dimension_numbers = #tpu.dot_dimension_numbers<[1], [0], [0], [1], [0, 0, 1, 1], [], []>} : vector<8x16xf32>, vector<16x16xf32>, vector<8x16xf32> -> vector<8x16xf32>
    %41 = arith.addf %39, %40 : vector<8x16xf32>
    %42 = arith.negf %41 : vector<8x16xf32>
    %43 = math.exp %42 : vector<8x16xf32>
    %cst_34 = arith.constant 1.000000e+00 : f32
    %44 = vector.broadcast %cst_34 : f32 to vector<8x16xf32>
    %45 = arith.addf %44, %43 : vector<8x16xf32>
    %46 = arith.divf %44, %45 : vector<8x16xf32>
    %47 = vector.extract_strided_slice %21 {offsets = [0, 0], sizes = [8, 16], strides = [1, 1]} : vector<64x16xf32> to vector<8x16xf32>
    %cst_35 = arith.constant dense<0.000000e+00> : vector<8x16xf32>
    %48 = tpu.matmul %30, %27, %cst_35 {dimension_numbers = #tpu.dot_dimension_numbers<[1], [0], [0], [1], [0, 0, 1, 1], [], []>} : vector<8x16xf32>, vector<16x16xf32>, vector<8x16xf32> -> vector<8x16xf32>
    %49 = vector.broadcast %29 : vector<1x16xf32> to vector<8x16xf32>
    %50 = arith.addf %48, %49 : vector<8x16xf32>
    %51 = arith.mulf %38, %50 : vector<8x16xf32>
    %52 = arith.addf %47, %51 : vector<8x16xf32>
    %53 = math.tanh %52 : vector<8x16xf32>
    %cst_36 = arith.constant 1.000000e+00 : f32
    %54 = vector.broadcast %cst_36 : f32 to vector<8x16xf32>
    %55 = arith.subf %54, %46 : vector<8x16xf32>
    %56 = arith.mulf %55, %53 : vector<8x16xf32>
    %57 = arith.mulf %46, %30 : vector<8x16xf32>
    %58 = arith.addf %56, %57 : vector<8x16xf32>
    %c0_37 = arith.constant 0 : index
    %c0_38 = arith.constant 0 : index
    %59 = vector.load %arg19[%c0_37, %c0_38] : memref<64x16xf32, #tpu.memory_space<vmem>>, vector<8x16xf32>
    tpu.vector_store %arg19[%c0_37, %c0_38], %58 {strides = array<i32>} : memref<64x16xf32, #tpu.memory_space<vmem>>, vector<8x16xf32>,
    %60 = vector.extract_strided_slice %7 {offsets = [8, 0], sizes = [8, 16], strides = [1, 1]} : vector<64x16xf32> to vector<8x16xf32>
    %cst_39 = arith.constant dense<0.000000e+00> : vector<8x16xf32>
    %61 = tpu.matmul %58, %23, %cst_39 {dimension_numbers = #tpu.dot_dimension_numbers<[1], [0], [0], [1], [0, 0, 1, 1], [], []>} : vector<8x16xf32>, vector<16x16xf32>, vector<8x16xf32> -> vector<8x16xf32>
    %62 = arith.addf %60, %61 : vector<8x16xf32>
    %63 = arith.negf %62 : vector<8x16xf32>
    %64 = math.exp %63 : vector<8x16xf32>
    %cst_40 = arith.constant 1.000000e+00 : f32
    %65 = vector.broadcast %cst_40 : f32 to vector<8x16xf32>
    %66 = arith.addf %65, %64 : vector<8x16xf32>
    %67 = arith.divf %65, %66 : vector<8x16xf32>
    %68 = vector.extract_strided_slice %14 {offsets = [8, 0], sizes = [8, 16], strides = [1, 1]} : vector<64x16xf32> to vector<8x16xf32>
    %cst_41 = arith.constant dense<0.000000e+00> : vector<8x16xf32>
    %69 = tpu.matmul %58, %25, %cst_41 {dimension_numbers = #tpu.dot_dimension_numbers<[1], [0], [0], [1], [0, 0, 1, 1], [], []>} : vector<8x16xf32>, vector<16x16xf32>, vector<8x16xf32> -> vector<8x16xf32>
    %70 = arith.addf %68, %69 : vector<8x16xf32>
    %71 = arith.negf %70 : vector<8x16xf32>
    %72 = math.exp %71 : vector<8x16xf32>
    %cst_42 = arith.constant 1.000000e+00 : f32
    %73 = vector.broadcast %cst_42 : f32 to vector<8x16xf32>
    %74 = arith.addf %73, %72 : vector<8x16xf32>
    %75 = arith.divf %73, %74 : vector<8x16xf32>
    %76 = vector.extract_strided_slice %21 {offsets = [8, 0], sizes = [8, 16], strides = [1, 1]} : vector<64x16xf32> to vector<8x16xf32>
    %cst_43 = arith.constant dense<0.000000e+00> : vector<8x16xf32>
    %77 = tpu.matmul %58, %27, %cst_43 {dimension_numbers = #tpu.dot_dimension_numbers<[1], [0], [0], [1], [0, 0, 1, 1], [], []>} : vector<8x16xf32>, vector<16x16xf32>, vector<8x16xf32> -> vector<8x16xf32>
    %78 = vector.broadcast %29 : vector<1x16xf32> to vector<8x16xf32>
    %79 = arith.addf %77, %78 : vector<8x16xf32>
    %80 = arith.mulf %67, %79 : vector<8x16xf32>
    %81 = arith.addf %76, %80 : vector<8x16xf32>
    %82 = math.tanh %81 : vector<8x16xf32>
    %cst_44 = arith.constant 1.000000e+00 : f32
    %83 = vector.broadcast %cst_44 : f32 to vector<8x16xf32>
    %84 = arith.subf %83, %75 : vector<8x16xf32>
    %85 = arith.mulf %84, %82 : vector<8x16xf32>
    %86 = arith.mulf %75, %58 : vector<8x16xf32>
    %87 = arith.addf %85, %86 : vector<8x16xf32>
    %c8 = arith.constant 8 : index
    %c0_45 = arith.constant 0 : index
    %88 = vector.load %arg19[%c8, %c0_45] : memref<64x16xf32, #tpu.memory_space<vmem>>, vector<8x16xf32>
    tpu.vector_store %arg19[%c8, %c0_45], %87 {strides = array<i32>} : memref<64x16xf32, #tpu.memory_space<vmem>>, vector<8x16xf32>,
    %89 = vector.extract_strided_slice %7 {offsets = [16, 0], sizes = [8, 16], strides = [1, 1]} : vector<64x16xf32> to vector<8x16xf32>
    %cst_46 = arith.constant dense<0.000000e+00> : vector<8x16xf32>
    %90 = tpu.matmul %87, %23, %cst_46 {dimension_numbers = #tpu.dot_dimension_numbers<[1], [0], [0], [1], [0, 0, 1, 1], [], []>} : vector<8x16xf32>, vector<16x16xf32>, vector<8x16xf32> -> vector<8x16xf32>
    %91 = arith.addf %89, %90 : vector<8x16xf32>
    %92 = arith.negf %91 : vector<8x16xf32>
    %93 = math.exp %92 : vector<8x16xf32>
    %cst_47 = arith.constant 1.000000e+00 : f32
    %94 = vector.broadcast %cst_47 : f32 to vector<8x16xf32>
    %95 = arith.addf %94, %93 : vector<8x16xf32>
    %96 = arith.divf %94, %95 : vector<8x16xf32>
    %97 = vector.extract_strided_slice %14 {offsets = [16, 0], sizes = [8, 16], strides = [1, 1]} : vector<64x16xf32> to vector<8x16xf32>
    %cst_48 = arith.constant dense<0.000000e+00> : vector<8x16xf32>
    %98 = tpu.matmul %87, %25, %cst_48 {dimension_numbers = #tpu.dot_dimension_numbers<[1], [0], [0], [1], [0, 0, 1, 1], [], []>} : vector<8x16xf32>, vector<16x16xf32>, vector<8x16xf32> -> vector<8x16xf32>
    %99 = arith.addf %97, %98 : vector<8x16xf32>
    %100 = arith.negf %99 : vector<8x16xf32>
    %101 = math.exp %100 : vector<8x16xf32>
    %cst_49 = arith.constant 1.000000e+00 : f32
    %102 = vector.broadcast %cst_49 : f32 to vector<8x16xf32>
    %103 = arith.addf %102, %101 : vector<8x16xf32>
    %104 = arith.divf %102, %103 : vector<8x16xf32>
    %105 = vector.extract_strided_slice %21 {offsets = [16, 0], sizes = [8, 16], strides = [1, 1]} : vector<64x16xf32> to vector<8x16xf32>
    %cst_50 = arith.constant dense<0.000000e+00> : vector<8x16xf32>
    %106 = tpu.matmul %87, %27, %cst_50 {dimension_numbers = #tpu.dot_dimension_numbers<[1], [0], [0], [1], [0, 0, 1, 1], [], []>} : vector<8x16xf32>, vector<16x16xf32>, vector<8x16xf32> -> vector<8x16xf32>
    %107 = vector.broadcast %29 : vector<1x16xf32> to vector<8x16xf32>
    %108 = arith.addf %106, %107 : vector<8x16xf32>
    %109 = arith.mulf %96, %108 : vector<8x16xf32>
    %110 = arith.addf %105, %109 : vector<8x16xf32>
    %111 = math.tanh %110 : vector<8x16xf32>
    %cst_51 = arith.constant 1.000000e+00 : f32
    %112 = vector.broadcast %cst_51 : f32 to vector<8x16xf32>
    %113 = arith.subf %112, %104 : vector<8x16xf32>
    %114 = arith.mulf %113, %111 : vector<8x16xf32>
    %115 = arith.mulf %104, %87 : vector<8x16xf32>
    %116 = arith.addf %114, %115 : vector<8x16xf32>
    %c16 = arith.constant 16 : index
    %c0_52 = arith.constant 0 : index
    %117 = vector.load %arg19[%c16, %c0_52] : memref<64x16xf32, #tpu.memory_space<vmem>>, vector<8x16xf32>
    tpu.vector_store %arg19[%c16, %c0_52], %116 {strides = array<i32>} : memref<64x16xf32, #tpu.memory_space<vmem>>, vector<8x16xf32>,
    %118 = vector.extract_strided_slice %7 {offsets = [24, 0], sizes = [8, 16], strides = [1, 1]} : vector<64x16xf32> to vector<8x16xf32>
    %cst_53 = arith.constant dense<0.000000e+00> : vector<8x16xf32>
    %119 = tpu.matmul %116, %23, %cst_53 {dimension_numbers = #tpu.dot_dimension_numbers<[1], [0], [0], [1], [0, 0, 1, 1], [], []>} : vector<8x16xf32>, vector<16x16xf32>, vector<8x16xf32> -> vector<8x16xf32>
    %120 = arith.addf %118, %119 : vector<8x16xf32>
    %121 = arith.negf %120 : vector<8x16xf32>
    %122 = math.exp %121 : vector<8x16xf32>
    %cst_54 = arith.constant 1.000000e+00 : f32
    %123 = vector.broadcast %cst_54 : f32 to vector<8x16xf32>
    %124 = arith.addf %123, %122 : vector<8x16xf32>
    %125 = arith.divf %123, %124 : vector<8x16xf32>
    %126 = vector.extract_strided_slice %14 {offsets = [24, 0], sizes = [8, 16], strides = [1, 1]} : vector<64x16xf32> to vector<8x16xf32>
    %cst_55 = arith.constant dense<0.000000e+00> : vector<8x16xf32>
    %127 = tpu.matmul %116, %25, %cst_55 {dimension_numbers = #tpu.dot_dimension_numbers<[1], [0], [0], [1], [0, 0, 1, 1], [], []>} : vector<8x16xf32>, vector<16x16xf32>, vector<8x16xf32> -> vector<8x16xf32>
    %128 = arith.addf %126, %127 : vector<8x16xf32>
    %129 = arith.negf %128 : vector<8x16xf32>
    %130 = math.exp %129 : vector<8x16xf32>
    %cst_56 = arith.constant 1.000000e+00 : f32
    %131 = vector.broadcast %cst_56 : f32 to vector<8x16xf32>
    %132 = arith.addf %131, %130 : vector<8x16xf32>
    %133 = arith.divf %131, %132 : vector<8x16xf32>
    %134 = vector.extract_strided_slice %21 {offsets = [24, 0], sizes = [8, 16], strides = [1, 1]} : vector<64x16xf32> to vector<8x16xf32>
    %cst_57 = arith.constant dense<0.000000e+00> : vector<8x16xf32>
    %135 = tpu.matmul %116, %27, %cst_57 {dimension_numbers = #tpu.dot_dimension_numbers<[1], [0], [0], [1], [0, 0, 1, 1], [], []>} : vector<8x16xf32>, vector<16x16xf32>, vector<8x16xf32> -> vector<8x16xf32>
    %136 = vector.broadcast %29 : vector<1x16xf32> to vector<8x16xf32>
    %137 = arith.addf %135, %136 : vector<8x16xf32>
    %138 = arith.mulf %125, %137 : vector<8x16xf32>
    %139 = arith.addf %134, %138 : vector<8x16xf32>
    %140 = math.tanh %139 : vector<8x16xf32>
    %cst_58 = arith.constant 1.000000e+00 : f32
    %141 = vector.broadcast %cst_58 : f32 to vector<8x16xf32>
    %142 = arith.subf %141, %133 : vector<8x16xf32>
    %143 = arith.mulf %142, %140 : vector<8x16xf32>
    %144 = arith.mulf %133, %116 : vector<8x16xf32>
    %145 = arith.addf %143, %144 : vector<8x16xf32>
    %c24 = arith.constant 24 : index
    %c0_59 = arith.constant 0 : index
    %146 = vector.load %arg19[%c24, %c0_59] : memref<64x16xf32, #tpu.memory_space<vmem>>, vector<8x16xf32>
    tpu.vector_store %arg19[%c24, %c0_59], %145 {strides = array<i32>} : memref<64x16xf32, #tpu.memory_space<vmem>>, vector<8x16xf32>,
    %147 = vector.extract_strided_slice %7 {offsets = [32, 0], sizes = [8, 16], strides = [1, 1]} : vector<64x16xf32> to vector<8x16xf32>
    %cst_60 = arith.constant dense<0.000000e+00> : vector<8x16xf32>
    %148 = tpu.matmul %145, %23, %cst_60 {dimension_numbers = #tpu.dot_dimension_numbers<[1], [0], [0], [1], [0, 0, 1, 1], [], []>} : vector<8x16xf32>, vector<16x16xf32>, vector<8x16xf32> -> vector<8x16xf32>
    %149 = arith.addf %147, %148 : vector<8x16xf32>
    %150 = arith.negf %149 : vector<8x16xf32>
    %151 = math.exp %150 : vector<8x16xf32>
    %cst_61 = arith.constant 1.000000e+00 : f32
    %152 = vector.broadcast %cst_61 : f32 to vector<8x16xf32>
    %153 = arith.addf %152, %151 : vector<8x16xf32>
    %154 = arith.divf %152, %153 : vector<8x16xf32>
    %155 = vector.extract_strided_slice %14 {offsets = [32, 0], sizes = [8, 16], strides = [1, 1]} : vector<64x16xf32> to vector<8x16xf32>
    %cst_62 = arith.constant dense<0.000000e+00> : vector<8x16xf32>
    %156 = tpu.matmul %145, %25, %cst_62 {dimension_numbers = #tpu.dot_dimension_numbers<[1], [0], [0], [1], [0, 0, 1, 1], [], []>} : vector<8x16xf32>, vector<16x16xf32>, vector<8x16xf32> -> vector<8x16xf32>
    %157 = arith.addf %155, %156 : vector<8x16xf32>
    %158 = arith.negf %157 : vector<8x16xf32>
    %159 = math.exp %158 : vector<8x16xf32>
    %cst_63 = arith.constant 1.000000e+00 : f32
    %160 = vector.broadcast %cst_63 : f32 to vector<8x16xf32>
    %161 = arith.addf %160, %159 : vector<8x16xf32>
    %162 = arith.divf %160, %161 : vector<8x16xf32>
    %163 = vector.extract_strided_slice %21 {offsets = [32, 0], sizes = [8, 16], strides = [1, 1]} : vector<64x16xf32> to vector<8x16xf32>
    %cst_64 = arith.constant dense<0.000000e+00> : vector<8x16xf32>
    %164 = tpu.matmul %145, %27, %cst_64 {dimension_numbers = #tpu.dot_dimension_numbers<[1], [0], [0], [1], [0, 0, 1, 1], [], []>} : vector<8x16xf32>, vector<16x16xf32>, vector<8x16xf32> -> vector<8x16xf32>
    %165 = vector.broadcast %29 : vector<1x16xf32> to vector<8x16xf32>
    %166 = arith.addf %164, %165 : vector<8x16xf32>
    %167 = arith.mulf %154, %166 : vector<8x16xf32>
    %168 = arith.addf %163, %167 : vector<8x16xf32>
    %169 = math.tanh %168 : vector<8x16xf32>
    %cst_65 = arith.constant 1.000000e+00 : f32
    %170 = vector.broadcast %cst_65 : f32 to vector<8x16xf32>
    %171 = arith.subf %170, %162 : vector<8x16xf32>
    %172 = arith.mulf %171, %169 : vector<8x16xf32>
    %173 = arith.mulf %162, %145 : vector<8x16xf32>
    %174 = arith.addf %172, %173 : vector<8x16xf32>
    %c32 = arith.constant 32 : index
    %c0_66 = arith.constant 0 : index
    %175 = vector.load %arg19[%c32, %c0_66] : memref<64x16xf32, #tpu.memory_space<vmem>>, vector<8x16xf32>
    tpu.vector_store %arg19[%c32, %c0_66], %174 {strides = array<i32>} : memref<64x16xf32, #tpu.memory_space<vmem>>, vector<8x16xf32>,
    %176 = vector.extract_strided_slice %7 {offsets = [40, 0], sizes = [8, 16], strides = [1, 1]} : vector<64x16xf32> to vector<8x16xf32>
    %cst_67 = arith.constant dense<0.000000e+00> : vector<8x16xf32>
    %177 = tpu.matmul %174, %23, %cst_67 {dimension_numbers = #tpu.dot_dimension_numbers<[1], [0], [0], [1], [0, 0, 1, 1], [], []>} : vector<8x16xf32>, vector<16x16xf32>, vector<8x16xf32> -> vector<8x16xf32>
    %178 = arith.addf %176, %177 : vector<8x16xf32>
    %179 = arith.negf %178 : vector<8x16xf32>
    %180 = math.exp %179 : vector<8x16xf32>
    %cst_68 = arith.constant 1.000000e+00 : f32
    %181 = vector.broadcast %cst_68 : f32 to vector<8x16xf32>
    %182 = arith.addf %181, %180 : vector<8x16xf32>
    %183 = arith.divf %181, %182 : vector<8x16xf32>
    %184 = vector.extract_strided_slice %14 {offsets = [40, 0], sizes = [8, 16], strides = [1, 1]} : vector<64x16xf32> to vector<8x16xf32>
    %cst_69 = arith.constant dense<0.000000e+00> : vector<8x16xf32>
    %185 = tpu.matmul %174, %25, %cst_69 {dimension_numbers = #tpu.dot_dimension_numbers<[1], [0], [0], [1], [0, 0, 1, 1], [], []>} : vector<8x16xf32>, vector<16x16xf32>, vector<8x16xf32> -> vector<8x16xf32>
    %186 = arith.addf %184, %185 : vector<8x16xf32>
    %187 = arith.negf %186 : vector<8x16xf32>
    %188 = math.exp %187 : vector<8x16xf32>
    %cst_70 = arith.constant 1.000000e+00 : f32
    %189 = vector.broadcast %cst_70 : f32 to vector<8x16xf32>
    %190 = arith.addf %189, %188 : vector<8x16xf32>
    %191 = arith.divf %189, %190 : vector<8x16xf32>
    %192 = vector.extract_strided_slice %21 {offsets = [40, 0], sizes = [8, 16], strides = [1, 1]} : vector<64x16xf32> to vector<8x16xf32>
    %cst_71 = arith.constant dense<0.000000e+00> : vector<8x16xf32>
    %193 = tpu.matmul %174, %27, %cst_71 {dimension_numbers = #tpu.dot_dimension_numbers<[1], [0], [0], [1], [0, 0, 1, 1], [], []>} : vector<8x16xf32>, vector<16x16xf32>, vector<8x16xf32> -> vector<8x16xf32>
    %194 = vector.broadcast %29 : vector<1x16xf32> to vector<8x16xf32>
    %195 = arith.addf %193, %194 : vector<8x16xf32>
    %196 = arith.mulf %183, %195 : vector<8x16xf32>
    %197 = arith.addf %192, %196 : vector<8x16xf32>
    %198 = math.tanh %197 : vector<8x16xf32>
    %cst_72 = arith.constant 1.000000e+00 : f32
    %199 = vector.broadcast %cst_72 : f32 to vector<8x16xf32>
    %200 = arith.subf %199, %191 : vector<8x16xf32>
    %201 = arith.mulf %200, %198 : vector<8x16xf32>
    %202 = arith.mulf %191, %174 : vector<8x16xf32>
    %203 = arith.addf %201, %202 : vector<8x16xf32>
    %c40 = arith.constant 40 : index
    %c0_73 = arith.constant 0 : index
    %204 = vector.load %arg19[%c40, %c0_73] : memref<64x16xf32, #tpu.memory_space<vmem>>, vector<8x16xf32>
    tpu.vector_store %arg19[%c40, %c0_73], %203 {strides = array<i32>} : memref<64x16xf32, #tpu.memory_space<vmem>>, vector<8x16xf32>,
    %205 = vector.extract_strided_slice %7 {offsets = [48, 0], sizes = [8, 16], strides = [1, 1]} : vector<64x16xf32> to vector<8x16xf32>
    %cst_74 = arith.constant dense<0.000000e+00> : vector<8x16xf32>
    %206 = tpu.matmul %203, %23, %cst_74 {dimension_numbers = #tpu.dot_dimension_numbers<[1], [0], [0], [1], [0, 0, 1, 1], [], []>} : vector<8x16xf32>, vector<16x16xf32>, vector<8x16xf32> -> vector<8x16xf32>
    %207 = arith.addf %205, %206 : vector<8x16xf32>
    %208 = arith.negf %207 : vector<8x16xf32>
    %209 = math.exp %208 : vector<8x16xf32>
    %cst_75 = arith.constant 1.000000e+00 : f32
    %210 = vector.broadcast %cst_75 : f32 to vector<8x16xf32>
    %211 = arith.addf %210, %209 : vector<8x16xf32>
    %212 = arith.divf %210, %211 : vector<8x16xf32>
    %213 = vector.extract_strided_slice %14 {offsets = [48, 0], sizes = [8, 16], strides = [1, 1]} : vector<64x16xf32> to vector<8x16xf32>
    %cst_76 = arith.constant dense<0.000000e+00> : vector<8x16xf32>
    %214 = tpu.matmul %203, %25, %cst_76 {dimension_numbers = #tpu.dot_dimension_numbers<[1], [0], [0], [1], [0, 0, 1, 1], [], []>} : vector<8x16xf32>, vector<16x16xf32>, vector<8x16xf32> -> vector<8x16xf32>
    %215 = arith.addf %213, %214 : vector<8x16xf32>
    %216 = arith.negf %215 : vector<8x16xf32>
    %217 = math.exp %216 : vector<8x16xf32>
    %cst_77 = arith.constant 1.000000e+00 : f32
    %218 = vector.broadcast %cst_77 : f32 to vector<8x16xf32>
    %219 = arith.addf %218, %217 : vector<8x16xf32>
    %220 = arith.divf %218, %219 : vector<8x16xf32>
    %221 = vector.extract_strided_slice %21 {offsets = [48, 0], sizes = [8, 16], strides = [1, 1]} : vector<64x16xf32> to vector<8x16xf32>
    %cst_78 = arith.constant dense<0.000000e+00> : vector<8x16xf32>
    %222 = tpu.matmul %203, %27, %cst_78 {dimension_numbers = #tpu.dot_dimension_numbers<[1], [0], [0], [1], [0, 0, 1, 1], [], []>} : vector<8x16xf32>, vector<16x16xf32>, vector<8x16xf32> -> vector<8x16xf32>
    %223 = vector.broadcast %29 : vector<1x16xf32> to vector<8x16xf32>
    %224 = arith.addf %222, %223 : vector<8x16xf32>
    %225 = arith.mulf %212, %224 : vector<8x16xf32>
    %226 = arith.addf %221, %225 : vector<8x16xf32>
    %227 = math.tanh %226 : vector<8x16xf32>
    %cst_79 = arith.constant 1.000000e+00 : f32
    %228 = vector.broadcast %cst_79 : f32 to vector<8x16xf32>
    %229 = arith.subf %228, %220 : vector<8x16xf32>
    %230 = arith.mulf %229, %227 : vector<8x16xf32>
    %231 = arith.mulf %220, %203 : vector<8x16xf32>
    %232 = arith.addf %230, %231 : vector<8x16xf32>
    %c48 = arith.constant 48 : index
    %c0_80 = arith.constant 0 : index
    %233 = vector.load %arg19[%c48, %c0_80] : memref<64x16xf32, #tpu.memory_space<vmem>>, vector<8x16xf32>
    tpu.vector_store %arg19[%c48, %c0_80], %232 {strides = array<i32>} : memref<64x16xf32, #tpu.memory_space<vmem>>, vector<8x16xf32>,
    %234 = vector.extract_strided_slice %7 {offsets = [56, 0], sizes = [8, 16], strides = [1, 1]} : vector<64x16xf32> to vector<8x16xf32>
    %cst_81 = arith.constant dense<0.000000e+00> : vector<8x16xf32>
    %235 = tpu.matmul %232, %23, %cst_81 {dimension_numbers = #tpu.dot_dimension_numbers<[1], [0], [0], [1], [0, 0, 1, 1], [], []>} : vector<8x16xf32>, vector<16x16xf32>, vector<8x16xf32> -> vector<8x16xf32>
    %236 = arith.addf %234, %235 : vector<8x16xf32>
    %237 = arith.negf %236 : vector<8x16xf32>
    %238 = math.exp %237 : vector<8x16xf32>
    %cst_82 = arith.constant 1.000000e+00 : f32
    %239 = vector.broadcast %cst_82 : f32 to vector<8x16xf32>
    %240 = arith.addf %239, %238 : vector<8x16xf32>
    %241 = arith.divf %239, %240 : vector<8x16xf32>
    %242 = vector.extract_strided_slice %14 {offsets = [56, 0], sizes = [8, 16], strides = [1, 1]} : vector<64x16xf32> to vector<8x16xf32>
    %cst_83 = arith.constant dense<0.000000e+00> : vector<8x16xf32>
    %243 = tpu.matmul %232, %25, %cst_83 {dimension_numbers = #tpu.dot_dimension_numbers<[1], [0], [0], [1], [0, 0, 1, 1], [], []>} : vector<8x16xf32>, vector<16x16xf32>, vector<8x16xf32> -> vector<8x16xf32>
    %244 = arith.addf %242, %243 : vector<8x16xf32>
    %245 = arith.negf %244 : vector<8x16xf32>
    %246 = math.exp %245 : vector<8x16xf32>
    %cst_84 = arith.constant 1.000000e+00 : f32
    %247 = vector.broadcast %cst_84 : f32 to vector<8x16xf32>
    %248 = arith.addf %247, %246 : vector<8x16xf32>
    %249 = arith.divf %247, %248 : vector<8x16xf32>
    %250 = vector.extract_strided_slice %21 {offsets = [56, 0], sizes = [8, 16], strides = [1, 1]} : vector<64x16xf32> to vector<8x16xf32>
    %cst_85 = arith.constant dense<0.000000e+00> : vector<8x16xf32>
    %251 = tpu.matmul %232, %27, %cst_85 {dimension_numbers = #tpu.dot_dimension_numbers<[1], [0], [0], [1], [0, 0, 1, 1], [], []>} : vector<8x16xf32>, vector<16x16xf32>, vector<8x16xf32> -> vector<8x16xf32>
    %252 = vector.broadcast %29 : vector<1x16xf32> to vector<8x16xf32>
    %253 = arith.addf %251, %252 : vector<8x16xf32>
    %254 = arith.mulf %241, %253 : vector<8x16xf32>
    %255 = arith.addf %250, %254 : vector<8x16xf32>
    %256 = math.tanh %255 : vector<8x16xf32>
    %cst_86 = arith.constant 1.000000e+00 : f32
    %257 = vector.broadcast %cst_86 : f32 to vector<8x16xf32>
    %258 = arith.subf %257, %249 : vector<8x16xf32>
    %259 = arith.mulf %258, %256 : vector<8x16xf32>
    %260 = arith.mulf %249, %232 : vector<8x16xf32>
    %261 = arith.addf %259, %260 : vector<8x16xf32>
    %c56 = arith.constant 56 : index
    %c0_87 = arith.constant 0 : index
    %262 = vector.load %arg19[%c56, %c0_87] : memref<64x16xf32, #tpu.memory_space<vmem>>, vector<8x16xf32>
    tpu.vector_store %arg19[%c56, %c0_87], %261 {strides = array<i32>} : memref<64x16xf32, #tpu.memory_space<vmem>>, vector<8x16xf32>,
    %c0_88 = arith.constant 0 : index
    %c0_89 = arith.constant 0 : index
    %263 = vector.load %arg19[%c0_88, %c0_89] : memref<64x16xf32, #tpu.memory_space<vmem>>, vector<64x16xf32>
    %c0_90 = arith.constant 0 : index
    %c0_91 = arith.constant 0 : index
    %c0_92 = arith.constant 0 : index
    %264 = vector.load %arg6[%c0_90, %c0_91, %c0_92] : memref<3x16x16xf32, #tpu.memory_space<vmem>>, vector<1x16x16xf32>
    %265 = vector.shape_cast %264 : vector<1x16x16xf32> to vector<16x16xf32>
    %cst_93 = arith.constant dense<0.000000e+00> : vector<64x16xf32>
    %266 = tpu.matmul %263, %265, %cst_93 {dimension_numbers = #tpu.dot_dimension_numbers<[1], [0], [0], [1], [0, 0, 1, 1], [], []>} : vector<64x16xf32>, vector<16x16xf32>, vector<64x16xf32> -> vector<64x16xf32>
    %c0_94 = arith.constant 0 : index
    %c0_95 = arith.constant 0 : index
    %c0_96 = arith.constant 0 : index
    %267 = vector.load %arg8[%c0_94, %c0_95, %c0_96] : memref<4x1x16xf32, #tpu.memory_space<vmem>>, vector<1x1x16xf32>
    %268 = vector.shape_cast %267 : vector<1x1x16xf32> to vector<1x16xf32>
    %269 = vector.broadcast %268 : vector<1x16xf32> to vector<64x16xf32>
    %270 = arith.addf %266, %269 : vector<64x16xf32>
    %c1_97 = arith.constant 1 : index
    %c0_98 = arith.constant 0 : index
    %c0_99 = arith.constant 0 : index
    %271 = vector.load %arg6[%c1_97, %c0_98, %c0_99] : memref<3x16x16xf32, #tpu.memory_space<vmem>>, vector<1x16x16xf32>
    %272 = vector.shape_cast %271 : vector<1x16x16xf32> to vector<16x16xf32>
    %cst_100 = arith.constant dense<0.000000e+00> : vector<64x16xf32>
    %273 = tpu.matmul %263, %272, %cst_100 {dimension_numbers = #tpu.dot_dimension_numbers<[1], [0], [0], [1], [0, 0, 1, 1], [], []>} : vector<64x16xf32>, vector<16x16xf32>, vector<64x16xf32> -> vector<64x16xf32>
    %c1_101 = arith.constant 1 : index
    %c0_102 = arith.constant 0 : index
    %c0_103 = arith.constant 0 : index
    %274 = vector.load %arg8[%c1_101, %c0_102, %c0_103] : memref<4x1x16xf32, #tpu.memory_space<vmem>>, vector<1x1x16xf32>
    %275 = vector.shape_cast %274 : vector<1x1x16xf32> to vector<1x16xf32>
    %276 = vector.broadcast %275 : vector<1x16xf32> to vector<64x16xf32>
    %277 = arith.addf %273, %276 : vector<64x16xf32>
    %c2_104 = arith.constant 2 : index
    %c0_105 = arith.constant 0 : index
    %c0_106 = arith.constant 0 : index
    %278 = vector.load %arg6[%c2_104, %c0_105, %c0_106] : memref<3x16x16xf32, #tpu.memory_space<vmem>>, vector<1x16x16xf32>
    %279 = vector.shape_cast %278 : vector<1x16x16xf32> to vector<16x16xf32>
    %cst_107 = arith.constant dense<0.000000e+00> : vector<64x16xf32>
    %280 = tpu.matmul %263, %279, %cst_107 {dimension_numbers = #tpu.dot_dimension_numbers<[1], [0], [0], [1], [0, 0, 1, 1], [], []>} : vector<64x16xf32>, vector<16x16xf32>, vector<64x16xf32> -> vector<64x16xf32>
    %c2_108 = arith.constant 2 : index
    %c0_109 = arith.constant 0 : index
    %c0_110 = arith.constant 0 : index
    %281 = vector.load %arg8[%c2_108, %c0_109, %c0_110] : memref<4x1x16xf32, #tpu.memory_space<vmem>>, vector<1x1x16xf32>
    %282 = vector.shape_cast %281 : vector<1x1x16xf32> to vector<1x16xf32>
    %283 = vector.broadcast %282 : vector<1x16xf32> to vector<64x16xf32>
    %284 = arith.addf %280, %283 : vector<64x16xf32>
    %c0_111 = arith.constant 0 : index
    %c0_112 = arith.constant 0 : index
    %c0_113 = arith.constant 0 : index
    %285 = vector.load %arg7[%c0_111, %c0_112, %c0_113] : memref<3x16x16xf32, #tpu.memory_space<vmem>>, vector<1x16x16xf32>
    %286 = vector.shape_cast %285 : vector<1x16x16xf32> to vector<16x16xf32>
    %c1_114 = arith.constant 1 : index
    %c0_115 = arith.constant 0 : index
    %c0_116 = arith.constant 0 : index
    %287 = vector.load %arg7[%c1_114, %c0_115, %c0_116] : memref<3x16x16xf32, #tpu.memory_space<vmem>>, vector<1x16x16xf32>
    %288 = vector.shape_cast %287 : vector<1x16x16xf32> to vector<16x16xf32>
    %c2_117 = arith.constant 2 : index
    %c0_118 = arith.constant 0 : index
    %c0_119 = arith.constant 0 : index
    %289 = vector.load %arg7[%c2_117, %c0_118, %c0_119] : memref<3x16x16xf32, #tpu.memory_space<vmem>>, vector<1x16x16xf32>
    %290 = vector.shape_cast %289 : vector<1x16x16xf32> to vector<16x16xf32>
    %c3_120 = arith.constant 3 : index
    %c0_121 = arith.constant 0 : index
    %c0_122 = arith.constant 0 : index
    %291 = vector.load %arg8[%c3_120, %c0_121, %c0_122] : memref<4x1x16xf32, #tpu.memory_space<vmem>>, vector<1x1x16xf32>
    %292 = vector.shape_cast %291 : vector<1x1x16xf32> to vector<1x16xf32>
    %cst_123 = arith.constant 0.000000e+00 : f32
    %293 = vector.broadcast %cst_123 : f32 to vector<8x16xf32>
    %294 = vector.extract_strided_slice %270 {offsets = [0, 0], sizes = [8, 16], strides = [1, 1]} : vector<64x16xf32> to vector<8x16xf32>
    %cst_124 = arith.constant dense<0.000000e+00> : vector<8x16xf32>
    %295 = tpu.matmul %293, %286, %cst_124 {dimension_numbers = #tpu.dot_dimension_numbers<[1], [0], [0], [1], [0, 0, 1, 1], [], []>} : vector<8x16xf32>, vector<16x16xf32>, vector<8x16xf32> -> vector<8x16xf32>
    %296 = arith.addf %294, %295 : vector<8x16xf32>
    %297 = arith.negf %296 : vector<8x16xf32>
    %298 = math.exp %297 : vector<8x16xf32>
    %cst_125 = arith.constant 1.000000e+00 : f32
    %299 = vector.broadcast %cst_125 : f32 to vector<8x16xf32>
    %300 = arith.addf %299, %298 : vector<8x16xf32>
    %301 = arith.divf %299, %300 : vector<8x16xf32>
    %302 = vector.extract_strided_slice %277 {offsets = [0, 0], sizes = [8, 16], strides = [1, 1]} : vector<64x16xf32> to vector<8x16xf32>
    %cst_126 = arith.constant dense<0.000000e+00> : vector<8x16xf32>
    %303 = tpu.matmul %293, %288, %cst_126 {dimension_numbers = #tpu.dot_dimension_numbers<[1], [0], [0], [1], [0, 0, 1, 1], [], []>} : vector<8x16xf32>, vector<16x16xf32>, vector<8x16xf32> -> vector<8x16xf32>
    %304 = arith.addf %302, %303 : vector<8x16xf32>
    %305 = arith.negf %304 : vector<8x16xf32>
    %306 = math.exp %305 : vector<8x16xf32>
    %cst_127 = arith.constant 1.000000e+00 : f32
    %307 = vector.broadcast %cst_127 : f32 to vector<8x16xf32>
    %308 = arith.addf %307, %306 : vector<8x16xf32>
    %309 = arith.divf %307, %308 : vector<8x16xf32>
    %310 = vector.extract_strided_slice %284 {offsets = [0, 0], sizes = [8, 16], strides = [1, 1]} : vector<64x16xf32> to vector<8x16xf32>
    %cst_128 = arith.constant dense<0.000000e+00> : vector<8x16xf32>
    %311 = tpu.matmul %293, %290, %cst_128 {dimension_numbers = #tpu.dot_dimension_numbers<[1], [0], [0], [1], [0, 0, 1, 1], [], []>} : vector<8x16xf32>, vector<16x16xf32>, vector<8x16xf32> -> vector<8x16xf32>
    %312 = vector.broadcast %292 : vector<1x16xf32> to vector<8x16xf32>
    %313 = arith.addf %311, %312 : vector<8x16xf32>
    %314 = arith.mulf %301, %313 : vector<8x16xf32>
    %315 = arith.addf %310, %314 : vector<8x16xf32>
    %316 = math.tanh %315 : vector<8x16xf32>
    %cst_129 = arith.constant 1.000000e+00 : f32
    %317 = vector.broadcast %cst_129 : f32 to vector<8x16xf32>
    %318 = arith.subf %317, %309 : vector<8x16xf32>
    %319 = arith.mulf %318, %316 : vector<8x16xf32>
    %320 = arith.mulf %309, %293 : vector<8x16xf32>
    %321 = arith.addf %319, %320 : vector<8x16xf32>
    %322 = vector.extract_strided_slice %270 {offsets = [8, 0], sizes = [8, 16], strides = [1, 1]} : vector<64x16xf32> to vector<8x16xf32>
    %cst_130 = arith.constant dense<0.000000e+00> : vector<8x16xf32>
    %323 = tpu.matmul %321, %286, %cst_130 {dimension_numbers = #tpu.dot_dimension_numbers<[1], [0], [0], [1], [0, 0, 1, 1], [], []>} : vector<8x16xf32>, vector<16x16xf32>, vector<8x16xf32> -> vector<8x16xf32>
    %324 = arith.addf %322, %323 : vector<8x16xf32>
    %325 = arith.negf %324 : vector<8x16xf32>
    %326 = math.exp %325 : vector<8x16xf32>
    %cst_131 = arith.constant 1.000000e+00 : f32
    %327 = vector.broadcast %cst_131 : f32 to vector<8x16xf32>
    %328 = arith.addf %327, %326 : vector<8x16xf32>
    %329 = arith.divf %327, %328 : vector<8x16xf32>
    %330 = vector.extract_strided_slice %277 {offsets = [8, 0], sizes = [8, 16], strides = [1, 1]} : vector<64x16xf32> to vector<8x16xf32>
    %cst_132 = arith.constant dense<0.000000e+00> : vector<8x16xf32>
    %331 = tpu.matmul %321, %288, %cst_132 {dimension_numbers = #tpu.dot_dimension_numbers<[1], [0], [0], [1], [0, 0, 1, 1], [], []>} : vector<8x16xf32>, vector<16x16xf32>, vector<8x16xf32> -> vector<8x16xf32>
    %332 = arith.addf %330, %331 : vector<8x16xf32>
    %333 = arith.negf %332 : vector<8x16xf32>
    %334 = math.exp %333 : vector<8x16xf32>
    %cst_133 = arith.constant 1.000000e+00 : f32
    %335 = vector.broadcast %cst_133 : f32 to vector<8x16xf32>
    %336 = arith.addf %335, %334 : vector<8x16xf32>
    %337 = arith.divf %335, %336 : vector<8x16xf32>
    %338 = vector.extract_strided_slice %284 {offsets = [8, 0], sizes = [8, 16], strides = [1, 1]} : vector<64x16xf32> to vector<8x16xf32>
    %cst_134 = arith.constant dense<0.000000e+00> : vector<8x16xf32>
    %339 = tpu.matmul %321, %290, %cst_134 {dimension_numbers = #tpu.dot_dimension_numbers<[1], [0], [0], [1], [0, 0, 1, 1], [], []>} : vector<8x16xf32>, vector<16x16xf32>, vector<8x16xf32> -> vector<8x16xf32>
    %340 = vector.broadcast %292 : vector<1x16xf32> to vector<8x16xf32>
    %341 = arith.addf %339, %340 : vector<8x16xf32>
    %342 = arith.mulf %329, %341 : vector<8x16xf32>
    %343 = arith.addf %338, %342 : vector<8x16xf32>
    %344 = math.tanh %343 : vector<8x16xf32>
    %cst_135 = arith.constant 1.000000e+00 : f32
    %345 = vector.broadcast %cst_135 : f32 to vector<8x16xf32>
    %346 = arith.subf %345, %337 : vector<8x16xf32>
    %347 = arith.mulf %346, %344 : vector<8x16xf32>
    %348 = arith.mulf %337, %321 : vector<8x16xf32>
    %349 = arith.addf %347, %348 : vector<8x16xf32>
    %350 = vector.extract_strided_slice %270 {offsets = [16, 0], sizes = [8, 16], strides = [1, 1]} : vector<64x16xf32> to vector<8x16xf32>
    %cst_136 = arith.constant dense<0.000000e+00> : vector<8x16xf32>
    %351 = tpu.matmul %349, %286, %cst_136 {dimension_numbers = #tpu.dot_dimension_numbers<[1], [0], [0], [1], [0, 0, 1, 1], [], []>} : vector<8x16xf32>, vector<16x16xf32>, vector<8x16xf32> -> vector<8x16xf32>
    %352 = arith.addf %350, %351 : vector<8x16xf32>
    %353 = arith.negf %352 : vector<8x16xf32>
    %354 = math.exp %353 : vector<8x16xf32>
    %cst_137 = arith.constant 1.000000e+00 : f32
    %355 = vector.broadcast %cst_137 : f32 to vector<8x16xf32>
    %356 = arith.addf %355, %354 : vector<8x16xf32>
    %357 = arith.divf %355, %356 : vector<8x16xf32>
    %358 = vector.extract_strided_slice %277 {offsets = [16, 0], sizes = [8, 16], strides = [1, 1]} : vector<64x16xf32> to vector<8x16xf32>
    %cst_138 = arith.constant dense<0.000000e+00> : vector<8x16xf32>
    %359 = tpu.matmul %349, %288, %cst_138 {dimension_numbers = #tpu.dot_dimension_numbers<[1], [0], [0], [1], [0, 0, 1, 1], [], []>} : vector<8x16xf32>, vector<16x16xf32>, vector<8x16xf32> -> vector<8x16xf32>
    %360 = arith.addf %358, %359 : vector<8x16xf32>
    %361 = arith.negf %360 : vector<8x16xf32>
    %362 = math.exp %361 : vector<8x16xf32>
    %cst_139 = arith.constant 1.000000e+00 : f32
    %363 = vector.broadcast %cst_139 : f32 to vector<8x16xf32>
    %364 = arith.addf %363, %362 : vector<8x16xf32>
    %365 = arith.divf %363, %364 : vector<8x16xf32>
    %366 = vector.extract_strided_slice %284 {offsets = [16, 0], sizes = [8, 16], strides = [1, 1]} : vector<64x16xf32> to vector<8x16xf32>
    %cst_140 = arith.constant dense<0.000000e+00> : vector<8x16xf32>
    %367 = tpu.matmul %349, %290, %cst_140 {dimension_numbers = #tpu.dot_dimension_numbers<[1], [0], [0], [1], [0, 0, 1, 1], [], []>} : vector<8x16xf32>, vector<16x16xf32>, vector<8x16xf32> -> vector<8x16xf32>
    %368 = vector.broadcast %292 : vector<1x16xf32> to vector<8x16xf32>
    %369 = arith.addf %367, %368 : vector<8x16xf32>
    %370 = arith.mulf %357, %369 : vector<8x16xf32>
    %371 = arith.addf %366, %370 : vector<8x16xf32>
    %372 = math.tanh %371 : vector<8x16xf32>
    %cst_141 = arith.constant 1.000000e+00 : f32
    %373 = vector.broadcast %cst_141 : f32 to vector<8x16xf32>
    %374 = arith.subf %373, %365 : vector<8x16xf32>
    %375 = arith.mulf %374, %372 : vector<8x16xf32>
    %376 = arith.mulf %365, %349 : vector<8x16xf32>
    %377 = arith.addf %375, %376 : vector<8x16xf32>
    %378 = vector.extract_strided_slice %270 {offsets = [24, 0], sizes = [8, 16], strides = [1, 1]} : vector<64x16xf32> to vector<8x16xf32>
    %cst_142 = arith.constant dense<0.000000e+00> : vector<8x16xf32>
    %379 = tpu.matmul %377, %286, %cst_142 {dimension_numbers = #tpu.dot_dimension_numbers<[1], [0], [0], [1], [0, 0, 1, 1], [], []>} : vector<8x16xf32>, vector<16x16xf32>, vector<8x16xf32> -> vector<8x16xf32>
    %380 = arith.addf %378, %379 : vector<8x16xf32>
    %381 = arith.negf %380 : vector<8x16xf32>
    %382 = math.exp %381 : vector<8x16xf32>
    %cst_143 = arith.constant 1.000000e+00 : f32
    %383 = vector.broadcast %cst_143 : f32 to vector<8x16xf32>
    %384 = arith.addf %383, %382 : vector<8x16xf32>
    %385 = arith.divf %383, %384 : vector<8x16xf32>
    %386 = vector.extract_strided_slice %277 {offsets = [24, 0], sizes = [8, 16], strides = [1, 1]} : vector<64x16xf32> to vector<8x16xf32>
    %cst_144 = arith.constant dense<0.000000e+00> : vector<8x16xf32>
    %387 = tpu.matmul %377, %288, %cst_144 {dimension_numbers = #tpu.dot_dimension_numbers<[1], [0], [0], [1], [0, 0, 1, 1], [], []>} : vector<8x16xf32>, vector<16x16xf32>, vector<8x16xf32> -> vector<8x16xf32>
    %388 = arith.addf %386, %387 : vector<8x16xf32>
    %389 = arith.negf %388 : vector<8x16xf32>
    %390 = math.exp %389 : vector<8x16xf32>
    %cst_145 = arith.constant 1.000000e+00 : f32
    %391 = vector.broadcast %cst_145 : f32 to vector<8x16xf32>
    %392 = arith.addf %391, %390 : vector<8x16xf32>
    %393 = arith.divf %391, %392 : vector<8x16xf32>
    %394 = vector.extract_strided_slice %284 {offsets = [24, 0], sizes = [8, 16], strides = [1, 1]} : vector<64x16xf32> to vector<8x16xf32>
    %cst_146 = arith.constant dense<0.000000e+00> : vector<8x16xf32>
    %395 = tpu.matmul %377, %290, %cst_146 {dimension_numbers = #tpu.dot_dimension_numbers<[1], [0], [0], [1], [0, 0, 1, 1], [], []>} : vector<8x16xf32>, vector<16x16xf32>, vector<8x16xf32> -> vector<8x16xf32>
    %396 = vector.broadcast %292 : vector<1x16xf32> to vector<8x16xf32>
    %397 = arith.addf %395, %396 : vector<8x16xf32>
    %398 = arith.mulf %385, %397 : vector<8x16xf32>
    %399 = arith.addf %394, %398 : vector<8x16xf32>
    %400 = math.tanh %399 : vector<8x16xf32>
    %cst_147 = arith.constant 1.000000e+00 : f32
    %401 = vector.broadcast %cst_147 : f32 to vector<8x16xf32>
    %402 = arith.subf %401, %393 : vector<8x16xf32>
    %403 = arith.mulf %402, %400 : vector<8x16xf32>
    %404 = arith.mulf %393, %377 : vector<8x16xf32>
    %405 = arith.addf %403, %404 : vector<8x16xf32>
    %406 = vector.extract_strided_slice %270 {offsets = [32, 0], sizes = [8, 16], strides = [1, 1]} : vector<64x16xf32> to vector<8x16xf32>
    %cst_148 = arith.constant dense<0.000000e+00> : vector<8x16xf32>
    %407 = tpu.matmul %405, %286, %cst_148 {dimension_numbers = #tpu.dot_dimension_numbers<[1], [0], [0], [1], [0, 0, 1, 1], [], []>} : vector<8x16xf32>, vector<16x16xf32>, vector<8x16xf32> -> vector<8x16xf32>
    %408 = arith.addf %406, %407 : vector<8x16xf32>
    %409 = arith.negf %408 : vector<8x16xf32>
    %410 = math.exp %409 : vector<8x16xf32>
    %cst_149 = arith.constant 1.000000e+00 : f32
    %411 = vector.broadcast %cst_149 : f32 to vector<8x16xf32>
    %412 = arith.addf %411, %410 : vector<8x16xf32>
    %413 = arith.divf %411, %412 : vector<8x16xf32>
    %414 = vector.extract_strided_slice %277 {offsets = [32, 0], sizes = [8, 16], strides = [1, 1]} : vector<64x16xf32> to vector<8x16xf32>
    %cst_150 = arith.constant dense<0.000000e+00> : vector<8x16xf32>
    %415 = tpu.matmul %405, %288, %cst_150 {dimension_numbers = #tpu.dot_dimension_numbers<[1], [0], [0], [1], [0, 0, 1, 1], [], []>} : vector<8x16xf32>, vector<16x16xf32>, vector<8x16xf32> -> vector<8x16xf32>
    %416 = arith.addf %414, %415 : vector<8x16xf32>
    %417 = arith.negf %416 : vector<8x16xf32>
    %418 = math.exp %417 : vector<8x16xf32>
    %cst_151 = arith.constant 1.000000e+00 : f32
    %419 = vector.broadcast %cst_151 : f32 to vector<8x16xf32>
    %420 = arith.addf %419, %418 : vector<8x16xf32>
    %421 = arith.divf %419, %420 : vector<8x16xf32>
    %422 = vector.extract_strided_slice %284 {offsets = [32, 0], sizes = [8, 16], strides = [1, 1]} : vector<64x16xf32> to vector<8x16xf32>
    %cst_152 = arith.constant dense<0.000000e+00> : vector<8x16xf32>
    %423 = tpu.matmul %405, %290, %cst_152 {dimension_numbers = #tpu.dot_dimension_numbers<[1], [0], [0], [1], [0, 0, 1, 1], [], []>} : vector<8x16xf32>, vector<16x16xf32>, vector<8x16xf32> -> vector<8x16xf32>
    %424 = vector.broadcast %292 : vector<1x16xf32> to vector<8x16xf32>
    %425 = arith.addf %423, %424 : vector<8x16xf32>
    %426 = arith.mulf %413, %425 : vector<8x16xf32>
    %427 = arith.addf %422, %426 : vector<8x16xf32>
    %428 = math.tanh %427 : vector<8x16xf32>
    %cst_153 = arith.constant 1.000000e+00 : f32
    %429 = vector.broadcast %cst_153 : f32 to vector<8x16xf32>
    %430 = arith.subf %429, %421 : vector<8x16xf32>
    %431 = arith.mulf %430, %428 : vector<8x16xf32>
    %432 = arith.mulf %421, %405 : vector<8x16xf32>
    %433 = arith.addf %431, %432 : vector<8x16xf32>
    %434 = vector.extract_strided_slice %270 {offsets = [40, 0], sizes = [8, 16], strides = [1, 1]} : vector<64x16xf32> to vector<8x16xf32>
    %cst_154 = arith.constant dense<0.000000e+00> : vector<8x16xf32>
    %435 = tpu.matmul %433, %286, %cst_154 {dimension_numbers = #tpu.dot_dimension_numbers<[1], [0], [0], [1], [0, 0, 1, 1], [], []>} : vector<8x16xf32>, vector<16x16xf32>, vector<8x16xf32> -> vector<8x16xf32>
    %436 = arith.addf %434, %435 : vector<8x16xf32>
    %437 = arith.negf %436 : vector<8x16xf32>
    %438 = math.exp %437 : vector<8x16xf32>
    %cst_155 = arith.constant 1.000000e+00 : f32
    %439 = vector.broadcast %cst_155 : f32 to vector<8x16xf32>
    %440 = arith.addf %439, %438 : vector<8x16xf32>
    %441 = arith.divf %439, %440 : vector<8x16xf32>
    %442 = vector.extract_strided_slice %277 {offsets = [40, 0], sizes = [8, 16], strides = [1, 1]} : vector<64x16xf32> to vector<8x16xf32>
    %cst_156 = arith.constant dense<0.000000e+00> : vector<8x16xf32>
    %443 = tpu.matmul %433, %288, %cst_156 {dimension_numbers = #tpu.dot_dimension_numbers<[1], [0], [0], [1], [0, 0, 1, 1], [], []>} : vector<8x16xf32>, vector<16x16xf32>, vector<8x16xf32> -> vector<8x16xf32>
    %444 = arith.addf %442, %443 : vector<8x16xf32>
    %445 = arith.negf %444 : vector<8x16xf32>
    %446 = math.exp %445 : vector<8x16xf32>
    %cst_157 = arith.constant 1.000000e+00 : f32
    %447 = vector.broadcast %cst_157 : f32 to vector<8x16xf32>
    %448 = arith.addf %447, %446 : vector<8x16xf32>
    %449 = arith.divf %447, %448 : vector<8x16xf32>
    %450 = vector.extract_strided_slice %284 {offsets = [40, 0], sizes = [8, 16], strides = [1, 1]} : vector<64x16xf32> to vector<8x16xf32>
    %cst_158 = arith.constant dense<0.000000e+00> : vector<8x16xf32>
    %451 = tpu.matmul %433, %290, %cst_158 {dimension_numbers = #tpu.dot_dimension_numbers<[1], [0], [0], [1], [0, 0, 1, 1], [], []>} : vector<8x16xf32>, vector<16x16xf32>, vector<8x16xf32> -> vector<8x16xf32>
    %452 = vector.broadcast %292 : vector<1x16xf32> to vector<8x16xf32>
    %453 = arith.addf %451, %452 : vector<8x16xf32>
    %454 = arith.mulf %441, %453 : vector<8x16xf32>
    %455 = arith.addf %450, %454 : vector<8x16xf32>
    %456 = math.tanh %455 : vector<8x16xf32>
    %cst_159 = arith.constant 1.000000e+00 : f32
    %457 = vector.broadcast %cst_159 : f32 to vector<8x16xf32>
    %458 = arith.subf %457, %449 : vector<8x16xf32>
    %459 = arith.mulf %458, %456 : vector<8x16xf32>
    %460 = arith.mulf %449, %433 : vector<8x16xf32>
    %461 = arith.addf %459, %460 : vector<8x16xf32>
    %462 = vector.extract_strided_slice %270 {offsets = [48, 0], sizes = [8, 16], strides = [1, 1]} : vector<64x16xf32> to vector<8x16xf32>
    %cst_160 = arith.constant dense<0.000000e+00> : vector<8x16xf32>
    %463 = tpu.matmul %461, %286, %cst_160 {dimension_numbers = #tpu.dot_dimension_numbers<[1], [0], [0], [1], [0, 0, 1, 1], [], []>} : vector<8x16xf32>, vector<16x16xf32>, vector<8x16xf32> -> vector<8x16xf32>
    %464 = arith.addf %462, %463 : vector<8x16xf32>
    %465 = arith.negf %464 : vector<8x16xf32>
    %466 = math.exp %465 : vector<8x16xf32>
    %cst_161 = arith.constant 1.000000e+00 : f32
    %467 = vector.broadcast %cst_161 : f32 to vector<8x16xf32>
    %468 = arith.addf %467, %466 : vector<8x16xf32>
    %469 = arith.divf %467, %468 : vector<8x16xf32>
    %470 = vector.extract_strided_slice %277 {offsets = [48, 0], sizes = [8, 16], strides = [1, 1]} : vector<64x16xf32> to vector<8x16xf32>
    %cst_162 = arith.constant dense<0.000000e+00> : vector<8x16xf32>
    %471 = tpu.matmul %461, %288, %cst_162 {dimension_numbers = #tpu.dot_dimension_numbers<[1], [0], [0], [1], [0, 0, 1, 1], [], []>} : vector<8x16xf32>, vector<16x16xf32>, vector<8x16xf32> -> vector<8x16xf32>
    %472 = arith.addf %470, %471 : vector<8x16xf32>
    %473 = arith.negf %472 : vector<8x16xf32>
    %474 = math.exp %473 : vector<8x16xf32>
    %cst_163 = arith.constant 1.000000e+00 : f32
    %475 = vector.broadcast %cst_163 : f32 to vector<8x16xf32>
    %476 = arith.addf %475, %474 : vector<8x16xf32>
    %477 = arith.divf %475, %476 : vector<8x16xf32>
    %478 = vector.extract_strided_slice %284 {offsets = [48, 0], sizes = [8, 16], strides = [1, 1]} : vector<64x16xf32> to vector<8x16xf32>
    %cst_164 = arith.constant dense<0.000000e+00> : vector<8x16xf32>
    %479 = tpu.matmul %461, %290, %cst_164 {dimension_numbers = #tpu.dot_dimension_numbers<[1], [0], [0], [1], [0, 0, 1, 1], [], []>} : vector<8x16xf32>, vector<16x16xf32>, vector<8x16xf32> -> vector<8x16xf32>
    %480 = vector.broadcast %292 : vector<1x16xf32> to vector<8x16xf32>
    %481 = arith.addf %479, %480 : vector<8x16xf32>
    %482 = arith.mulf %469, %481 : vector<8x16xf32>
    %483 = arith.addf %478, %482 : vector<8x16xf32>
    %484 = math.tanh %483 : vector<8x16xf32>
    %cst_165 = arith.constant 1.000000e+00 : f32
    %485 = vector.broadcast %cst_165 : f32 to vector<8x16xf32>
    %486 = arith.subf %485, %477 : vector<8x16xf32>
    %487 = arith.mulf %486, %484 : vector<8x16xf32>
    %488 = arith.mulf %477, %461 : vector<8x16xf32>
    %489 = arith.addf %487, %488 : vector<8x16xf32>
    %490 = vector.extract_strided_slice %270 {offsets = [56, 0], sizes = [8, 16], strides = [1, 1]} : vector<64x16xf32> to vector<8x16xf32>
    %cst_166 = arith.constant dense<0.000000e+00> : vector<8x16xf32>
    %491 = tpu.matmul %489, %286, %cst_166 {dimension_numbers = #tpu.dot_dimension_numbers<[1], [0], [0], [1], [0, 0, 1, 1], [], []>} : vector<8x16xf32>, vector<16x16xf32>, vector<8x16xf32> -> vector<8x16xf32>
    %492 = arith.addf %490, %491 : vector<8x16xf32>
    %493 = arith.negf %492 : vector<8x16xf32>
    %494 = math.exp %493 : vector<8x16xf32>
    %cst_167 = arith.constant 1.000000e+00 : f32
    %495 = vector.broadcast %cst_167 : f32 to vector<8x16xf32>
    %496 = arith.addf %495, %494 : vector<8x16xf32>
    %497 = arith.divf %495, %496 : vector<8x16xf32>
    %498 = vector.extract_strided_slice %277 {offsets = [56, 0], sizes = [8, 16], strides = [1, 1]} : vector<64x16xf32> to vector<8x16xf32>
    %cst_168 = arith.constant dense<0.000000e+00> : vector<8x16xf32>
    %499 = tpu.matmul %489, %288, %cst_168 {dimension_numbers = #tpu.dot_dimension_numbers<[1], [0], [0], [1], [0, 0, 1, 1], [], []>} : vector<8x16xf32>, vector<16x16xf32>, vector<8x16xf32> -> vector<8x16xf32>
    %500 = arith.addf %498, %499 : vector<8x16xf32>
    %501 = arith.negf %500 : vector<8x16xf32>
    %502 = math.exp %501 : vector<8x16xf32>
    %cst_169 = arith.constant 1.000000e+00 : f32
    %503 = vector.broadcast %cst_169 : f32 to vector<8x16xf32>
    %504 = arith.addf %503, %502 : vector<8x16xf32>
    %505 = arith.divf %503, %504 : vector<8x16xf32>
    %506 = vector.extract_strided_slice %284 {offsets = [56, 0], sizes = [8, 16], strides = [1, 1]} : vector<64x16xf32> to vector<8x16xf32>
    %cst_170 = arith.constant dense<0.000000e+00> : vector<8x16xf32>
    %507 = tpu.matmul %489, %290, %cst_170 {dimension_numbers = #tpu.dot_dimension_numbers<[1], [0], [0], [1], [0, 0, 1, 1], [], []>} : vector<8x16xf32>, vector<16x16xf32>, vector<8x16xf32> -> vector<8x16xf32>
    %508 = vector.broadcast %292 : vector<1x16xf32> to vector<8x16xf32>
    %509 = arith.addf %507, %508 : vector<8x16xf32>
    %510 = arith.mulf %497, %509 : vector<8x16xf32>
    %511 = arith.addf %506, %510 : vector<8x16xf32>
    %512 = math.tanh %511 : vector<8x16xf32>
    %cst_171 = arith.constant 1.000000e+00 : f32
    %513 = vector.broadcast %cst_171 : f32 to vector<8x16xf32>
    %514 = arith.subf %513, %505 : vector<8x16xf32>
    %515 = arith.mulf %514, %512 : vector<8x16xf32>
    %516 = arith.mulf %505, %489 : vector<8x16xf32>
    %517 = arith.addf %515, %516 : vector<8x16xf32>
    %c0_172 = arith.constant 0 : index
    %c0_173 = arith.constant 0 : index
    %518 = vector.load %arg9[%c0_172, %c0_173] : memref<16x16xf32, #tpu.memory_space<vmem>>, vector<16x16xf32>
    %cst_174 = arith.constant dense<0.000000e+00> : vector<8x16xf32>
    %519 = tpu.matmul %517, %518, %cst_174 {dimension_numbers = #tpu.dot_dimension_numbers<[1], [0], [0], [1], [0, 0, 1, 1], [], []>} : vector<8x16xf32>, vector<16x16xf32>, vector<8x16xf32> -> vector<8x16xf32>
    %c0_175 = arith.constant 0 : index
    %c0_176 = arith.constant 0 : index
    %520 = vector.load %arg10[%c0_175, %c0_176] : memref<1x16xf32, #tpu.memory_space<vmem>>, vector<1x16xf32>
    %521 = vector.broadcast %520 : vector<1x16xf32> to vector<8x16xf32>
    %522 = arith.addf %519, %521 : vector<8x16xf32>
    %c0_177 = arith.constant 0 : index
    %c0_178 = arith.constant 0 : index
    %523 = vector.load %arg1[%c0_177, %c0_178] : memref<8x16xf32, #tpu.memory_space<vmem>>, vector<8x16xf32>
    %c0_179 = arith.constant 0 : index
    %c0_180 = arith.constant 0 : index
    %524 = vector.load %arg11[%c0_179, %c0_180] : memref<16x32xf32, #tpu.memory_space<vmem>>, vector<16x32xf32>
    %cst_181 = arith.constant dense<0.000000e+00> : vector<8x32xf32>
    %525 = tpu.matmul %523, %524, %cst_181 {dimension_numbers = #tpu.dot_dimension_numbers<[1], [0], [0], [1], [0, 0, 1, 1], [], []>} : vector<8x16xf32>, vector<16x32xf32>, vector<8x32xf32> -> vector<8x32xf32>
    %c0_182 = arith.constant 0 : index
    %c0_183 = arith.constant 0 : index
    %526 = vector.load %arg12[%c0_182, %c0_183] : memref<1x32xf32, #tpu.memory_space<vmem>>, vector<1x32xf32>
    %527 = vector.broadcast %526 : vector<1x32xf32> to vector<8x32xf32>
    %528 = arith.addf %525, %527 : vector<8x32xf32>
    %cst_184 = arith.constant 0.000000e+00 : f32
    %529 = vector.broadcast %cst_184 : f32 to vector<8x32xf32>
    %530 = arith.maximumf %528, %529 : vector<8x32xf32>
    %c0_185 = arith.constant 0 : index
    %c0_186 = arith.constant 0 : index
    %531 = vector.load %arg13[%c0_185, %c0_186] : memref<32x32xf32, #tpu.memory_space<vmem>>, vector<32x32xf32>
    %cst_187 = arith.constant dense<0.000000e+00> : vector<8x32xf32>
    %532 = tpu.matmul %530, %531, %cst_187 {dimension_numbers = #tpu.dot_dimension_numbers<[1], [0], [0], [1], [0, 0, 1, 1], [], []>} : vector<8x32xf32>, vector<32x32xf32>, vector<8x32xf32> -> vector<8x32xf32>
    %c0_188 = arith.constant 0 : index
    %c0_189 = arith.constant 0 : index
    %533 = vector.load %arg14[%c0_188, %c0_189] : memref<16x32xf32, #tpu.memory_space<vmem>>, vector<16x32xf32>
    %cst_190 = arith.constant dense<0.000000e+00> : vector<8x32xf32>
    %534 = tpu.matmul %522, %533, %cst_190 {dimension_numbers = #tpu.dot_dimension_numbers<[1], [0], [0], [1], [0, 0, 1, 1], [], []>} : vector<8x16xf32>, vector<16x32xf32>, vector<8x32xf32> -> vector<8x32xf32>
    %535 = arith.addf %532, %534 : vector<8x32xf32>
    %c0_191 = arith.constant 0 : index
    %c0_192 = arith.constant 0 : index
    %536 = vector.load %arg15[%c0_191, %c0_192] : memref<1x32xf32, #tpu.memory_space<vmem>>, vector<1x32xf32>
    %537 = vector.broadcast %536 : vector<1x32xf32> to vector<8x32xf32>
    %538 = arith.addf %535, %537 : vector<8x32xf32>
    %cst_193 = arith.constant 0.000000e+00 : f32
    %539 = vector.broadcast %cst_193 : f32 to vector<8x32xf32>
    %540 = arith.maximumf %538, %539 : vector<8x32xf32>
    %c0_194 = arith.constant 0 : index
    %c0_195 = arith.constant 0 : index
    %541 = vector.load %arg16[%c0_194, %c0_195] : memref<32x4xf32, #tpu.memory_space<vmem>>, vector<32x4xf32>
    %cst_196 = arith.constant dense<0.000000e+00> : vector<8x4xf32>
    %542 = tpu.matmul %540, %541, %cst_196 {dimension_numbers = #tpu.dot_dimension_numbers<[1], [0], [0], [1], [0, 0, 1, 1], [], []>} : vector<8x32xf32>, vector<32x4xf32>, vector<8x4xf32> -> vector<8x4xf32>
    %c0_197 = arith.constant 0 : index
    %c0_198 = arith.constant 0 : index
    %543 = vector.load %arg17[%c0_197, %c0_198] : memref<1x4xf32, #tpu.memory_space<vmem>>, vector<1x4xf32>
    %544 = vector.broadcast %543 : vector<1x4xf32> to vector<8x4xf32>
    %545 = arith.addf %542, %544 : vector<8x4xf32>
    %546 = math.tanh %545 : vector<8x4xf32>
    %c0_199 = arith.constant 0 : index
    %c0_200 = arith.constant 0 : index
    %547 = vector.load %arg18[%c0_199, %c0_200] : memref<8x4xf32, #tpu.memory_space<vmem>>, vector<8x4xf32>
    tpu.vector_store %arg18[%c0_199, %c0_200], %546 {strides = array<i32>} : memref<8x4xf32, #tpu.memory_space<vmem>>, vector<8x4xf32>,
    return
  }
  func.func @transform_0(%arg0: i32) -> (i32, i32) {
    %c0_i32 = arith.constant 0 : i32
    %c0_i32_0 = arith.constant 0 : i32
    %c0_i32_1 = arith.constant 0 : i32
    return %c0_i32, %c0_i32_0 : i32, i32
  }
  func.func @transform_1(%arg0: i32) -> (i32, i32) {
    %c0_i32 = arith.constant 0 : i32
    %c0_i32_0 = arith.constant 0 : i32
    %c0_i32_1 = arith.constant 0 : i32
    return %c0_i32, %c0_i32_0 : i32, i32
  }
  func.func @transform_2(%arg0: i32) -> (i32, i32, i32) {
    %c0_i32 = arith.constant 0 : i32
    %c0_i32_0 = arith.constant 0 : i32
    %c0_i32_1 = arith.constant 0 : i32
    %c0_i32_2 = arith.constant 0 : i32
    return %c0_i32, %c0_i32_0, %c0_i32_1 : i32, i32, i32
  }
  func.func @transform_3(%arg0: i32) -> (i32, i32, i32) {
    %c0_i32 = arith.constant 0 : i32
    %c0_i32_0 = arith.constant 0 : i32
    %c0_i32_1 = arith.constant 0 : i32
    %c0_i32_2 = arith.constant 0 : i32
    return %c0_i32, %c0_i32_0, %c0_i32_1 : i32, i32, i32
  }
  func.func @transform_4(%arg0: i32) -> (i32, i32, i32) {
    %c0_i32 = arith.constant 0 : i32
    %c0_i32_0 = arith.constant 0 : i32
    %c0_i32_1 = arith.constant 0 : i32
    %c0_i32_2 = arith.constant 0 : i32
    return %c0_i32, %c0_i32_0, %c0_i32_1 : i32, i32, i32
  }
  func.func @transform_5(%arg0: i32) -> (i32, i32, i32) {
    %c0_i32 = arith.constant 0 : i32
    %c0_i32_0 = arith.constant 0 : i32
    %c0_i32_1 = arith.constant 0 : i32
    %c0_i32_2 = arith.constant 0 : i32
    return %c0_i32, %c0_i32_0, %c0_i32_1 : i32, i32, i32
  }
  func.func @transform_6(%arg0: i32) -> (i32, i32, i32) {
    %c0_i32 = arith.constant 0 : i32
    %c0_i32_0 = arith.constant 0 : i32
    %c0_i32_1 = arith.constant 0 : i32
    %c0_i32_2 = arith.constant 0 : i32
    return %c0_i32, %c0_i32_0, %c0_i32_1 : i32, i32, i32
  }
  func.func @transform_7(%arg0: i32) -> (i32, i32, i32) {
    %c0_i32 = arith.constant 0 : i32
    %c0_i32_0 = arith.constant 0 : i32
    %c0_i32_1 = arith.constant 0 : i32
    %c0_i32_2 = arith.constant 0 : i32
    return %c0_i32, %c0_i32_0, %c0_i32_1 : i32, i32, i32
  }
  func.func @transform_8(%arg0: i32) -> (i32, i32) {
    %c0_i32 = arith.constant 0 : i32
    %c0_i32_0 = arith.constant 0 : i32
    %c0_i32_1 = arith.constant 0 : i32
    return %c0_i32, %c0_i32_0 : i32, i32
  }
  func.func @transform_9(%arg0: i32) -> (i32, i32) {
    %c0_i32 = arith.constant 0 : i32
    %c0_i32_0 = arith.constant 0 : i32
    %c0_i32_1 = arith.constant 0 : i32
    return %c0_i32, %c0_i32_0 : i32, i32
  }
  func.func @transform_10(%arg0: i32) -> (i32, i32) {
    %c0_i32 = arith.constant 0 : i32
    %c0_i32_0 = arith.constant 0 : i32
    %c0_i32_1 = arith.constant 0 : i32
    return %c0_i32, %c0_i32_0 : i32, i32
  }
  func.func @transform_11(%arg0: i32) -> (i32, i32) {
    %c0_i32 = arith.constant 0 : i32
    %c0_i32_0 = arith.constant 0 : i32
    %c0_i32_1 = arith.constant 0 : i32
    return %c0_i32, %c0_i32_0 : i32, i32
  }
  func.func @transform_12(%arg0: i32) -> (i32, i32) {
    %c0_i32 = arith.constant 0 : i32
    %c0_i32_0 = arith.constant 0 : i32
    %c0_i32_1 = arith.constant 0 : i32
    return %c0_i32, %c0_i32_0 : i32, i32
  }
  func.func @transform_13(%arg0: i32) -> (i32, i32) {
    %c0_i32 = arith.constant 0 : i32
    %c0_i32_0 = arith.constant 0 : i32
    %c0_i32_1 = arith.constant 0 : i32
    return %c0_i32, %c0_i32_0 : i32, i32
  }
  func.func @transform_14(%arg0: i32) -> (i32, i32) {
    %c0_i32 = arith.constant 0 : i32
    %c0_i32_0 = arith.constant 0 : i32
    %c0_i32_1 = arith.constant 0 : i32
    return %c0_i32, %c0_i32_0 : i32, i32
  }
  func.func @transform_15(%arg0: i32) -> (i32, i32) {
    %c0_i32 = arith.constant 0 : i32
    %c0_i32_0 = arith.constant 0 : i32
    %c0_i32_1 = arith.constant 0 : i32
    return %c0_i32, %c0_i32_0 : i32, i32
  }
  func.func @transform_16(%arg0: i32) -> (i32, i32) {
    %c0_i32 = arith.constant 0 : i32
    %c0_i32_0 = arith.constant 0 : i32
    %c0_i32_1 = arith.constant 0 : i32
    return %c0_i32, %c0_i32_0 : i32, i32
  }
  func.func @transform_17(%arg0: i32) -> (i32, i32) {
    %c0_i32 = arith.constant 0 : i32
    %c0_i32_0 = arith.constant 0 : i32
    %c0_i32_1 = arith.constant 0 : i32
    return %c0_i32, %c0_i32_0 : i32, i32
  }
}

</mosaic_0001>

<llo_original>
// kernel: tpu_custom_call.1
$region0: #{tpu_custom_call.1}
  #allocation0 [shape = 'u32[]', space=smem, size = 0x4, offset = 0x4, fixed_abs, tag = 'smem constant byte address 0x4 - core index']
  #allocation1 [shape = 'u32[72,128]{1,0:T(1,128)}', space=vmem, size = 0x9000, scoped, tag = 'internal scratch']
  #allocation2 [shape = 'f32[64,16]{1,0:T(8,128)}', space=vmem, size = 0x8000, scoped, tag = 'scratch operand']
  %s0 = inlined_call_operand.hbm [shape: f32[8,16], index: 0, kind: input, shape index: {}]
  %s1 = inlined_call_operand.vmem [shape: f32[64,8], index: 1, kind: input, shape index: {}]
  %s2 = inlined_call_operand.hbm [shape: f32[3,8,16], index: 2, kind: input, shape index: {}]
  %s3 = inlined_call_operand.vmem [shape: f32[3,16,16], index: 3, kind: input, shape index: {}]
  %s4 = inlined_call_operand.vmem [shape: f32[4,1,16], index: 4, kind: input, shape index: {}]
  %s5 = inlined_call_operand.vmem [shape: f32[3,16,16], index: 5, kind: input, shape index: {}]
  %s6 = inlined_call_operand.hbm [shape: f32[3,16,16], index: 6, kind: input, shape index: {}]
  %s7 = inlined_call_operand.hbm [shape: f32[4,1,16], index: 7, kind: input, shape index: {}]
  %s8 = inlined_call_operand.hbm [shape: f32[16,16], index: 8, kind: input, shape index: {}]
  %s9 = inlined_call_operand.vmem [shape: f32[1,16], index: 9, kind: input, shape index: {}]
  %s10 = inlined_call_operand.hbm [shape: f32[16,32], index: 10, kind: input, shape index: {}]
  %s11 = inlined_call_operand.vmem [shape: f32[1,32], index: 11, kind: input, shape index: {}]
  %s12 = inlined_call_operand.hbm [shape: f32[32,32], index: 12, kind: input, shape index: {}]
  %s13 = inlined_call_operand.hbm [shape: f32[16,32], index: 13, kind: input, shape index: {}]
  %s14 = inlined_call_operand.vmem [shape: f32[1,32], index: 14, kind: input, shape index: {}]
  %s15 = inlined_call_operand.vmem [shape: f32[32,4], index: 15, kind: input, shape index: {}]
  %s16 = inlined_call_operand.vmem [shape: f32[1,4], index: 16, kind: input, shape index: {}]
  %s17 = inlined_call_operand.vmem [shape: f32[8,4], index: 17, kind: output, shape index: {}]
  %s18 = sld [smem:[#allocation0]]
  $region110: #{tpu_custom_call.1} parent=0
    _
  %s20 = ssub.s32 1, %s18
  %s21 = scalar_select 0, %s20, %s18
  $region1: #{tpu_custom_call.1} parent=0
    #allocation3 [shape = 'u8[4096]{0}', space=vmem, size = 0x1000, scoped, tag = 'input window, operand 0, single buffered']
    #allocation4 [shape = 's32[1]{0}', space=sflag, size = 0x4, scoped, tag = 'scoped memory for tpu_custom_call.1']
    #allocation5 [shape = 'u8[12288]{0}', space=vmem, size = 0x3000, scoped, tag = 'input window, operand 2, single buffered']
    #allocation6 [shape = 's32[1]{0}', space=sflag, size = 0x4, scoped, tag = 'scoped memory for tpu_custom_call.1']
    #allocation7 [shape = 'u8[24576]{0}', space=vmem, size = 0x6000, scoped, tag = 'input window, operand 6, single buffered']
    #allocation8 [shape = 'u8[2048]{0}', space=vmem, size = 0x800, scoped, tag = 'input window, operand 7, single buffered']
    #allocation9 [shape = 's32[1]{0}', space=sflag, size = 0x4, scoped, tag = 'scoped memory for tpu_custom_call.1']
    #allocation10 [shape = 'u8[8192]{0}', space=vmem, size = 0x2000, scoped, tag = 'input window, operand 8, single buffered']
    #allocation11 [shape = 'u8[8192]{0}', space=vmem, size = 0x2000, scoped, tag = 'input window, operand 10, single buffered']
    #allocation12 [shape = 's32[1]{0}', space=sflag, size = 0x4, scoped, tag = 'scoped memory for tpu_custom_call.1']
    #allocation13 [shape = 'u8[16384]{0}', space=vmem, size = 0x4000, scoped, tag = 'input window, operand 12, single buffered']
    #allocation14 [shape = 'u8[8192]{0}', space=vmem, size = 0x2000, scoped, tag = 'input window, operand 13, single buffered']
    #allocation15 [shape = 's32[1]{0}', space=sflag, size = 0x4, scoped, tag = 'scoped memory for tpu_custom_call.1']
    %22 = vsyncpa [#allocation4], 0
    %23 = vsyncpa [#allocation6], 0
    %24 = vsyncpa [#allocation9], 0
    %25 = vsyncpa [#allocation12], 0
    %26 = vsyncpa [#allocation15], 0
    // Predicated region
    $region2: #{tpu_custom_call.1} parent=1 // pred_check
      _
    $region3: #{tpu_custom_call.1} parent=1 // pred_check_branch
      %28 = sbr.rel (0) target = $region5
    $region4: #{tpu_custom_call.1} parent=1 // pred_region
      %30 = vsyncadd [#allocation4], 0
      %s32 = sshll.u32 %s0, 4
      %s33 = int_to_ptr.hbm [resolvable:$true] %s32
      %s34 = sshll.u32 [#allocation3], 4
      %s35 = int_to_ptr.vmem [resolvable:$true] %s34
      %37 = dma.hbm_to_vmem [thread:$0]  %s33, 128, %s35, [#allocation4]
    $region5: #{tpu_custom_call.1} parent=1 // pred_fallthru
      _
    // Predicated region
    $region6: #{tpu_custom_call.1} parent=1 // pred_check
      _
    $region7: #{tpu_custom_call.1} parent=1 // pred_check_branch
      %39 = sbr.rel (0) target = $region9
    $region8: #{tpu_custom_call.1} parent=1 // pred_region
      _
    $region9: #{tpu_custom_call.1} parent=1 // pred_fallthru
      _
    // Predicated region
    $region10: #{tpu_custom_call.1} parent=1 // pred_check
      _
    $region11: #{tpu_custom_call.1} parent=1 // pred_check_branch
      %41 = sbr.rel (0) target = $region13
    $region12: #{tpu_custom_call.1} parent=1 // pred_region
      %43 = vsyncadd [#allocation6], 0
      %s44 = sshll.u32 %s2, 4
      %s45 = int_to_ptr.hbm [resolvable:$true] %s44
      %s46 = sshll.u32 [#allocation5], 4
      %s47 = int_to_ptr.vmem [resolvable:$true] %s46
      %52 = dma.hbm_to_vmem [thread:$0]  %s45, 384, %s47, [#allocation6], 128, 128, 8
    $region13: #{tpu_custom_call.1} parent=1 // pred_fallthru
      _
    // Predicated region
    $region14: #{tpu_custom_call.1} parent=1 // pred_check
      _
    $region15: #{tpu_custom_call.1} parent=1 // pred_check_branch
      %54 = sbr.rel (0) target = $region17
    $region16: #{tpu_custom_call.1} parent=1 // pred_region
      _
    $region17: #{tpu_custom_call.1} parent=1 // pred_fallthru
      _
    // Predicated region
    $region18: #{tpu_custom_call.1} parent=1 // pred_check
      _
    $region19: #{tpu_custom_call.1} parent=1 // pred_check_branch
      %56 = sbr.rel (0) target = $region21
    $region20: #{tpu_custom_call.1} parent=1 // pred_region
      _
    $region21: #{tpu_custom_call.1} parent=1 // pred_fallthru
      _
    // Predicated region
    $region22: #{tpu_custom_call.1} parent=1 // pred_check
      _
    $region23: #{tpu_custom_call.1} parent=1 // pred_check_branch
      %58 = sbr.rel (0) target = $region25
    $region24: #{tpu_custom_call.1} parent=1 // pred_region
      _
    $region25: #{tpu_custom_call.1} parent=1 // pred_fallthru
      _
    // Predicated region
    $region26: #{tpu_custom_call.1} parent=1 // pred_check
      _
    $region27: #{tpu_custom_call.1} parent=1 // pred_check_branch
      %60 = sbr.rel (0) target = $region29
    $region28: #{tpu_custom_call.1} parent=1 // pred_region
      %62 = vsyncadd [#allocation6], 0
      %s63 = sshll.u32 %s6, 4
      %s64 = int_to_ptr.hbm [resolvable:$true] %s63
      %s65 = sshll.u32 [#allocation7], 4
      %s66 = int_to_ptr.vmem [resolvable:$true] %s65
      %71 = dma.hbm_to_vmem [thread:$0]  %s64, 768, %s66, [#allocation6], 128, 128, 8
    $region29: #{tpu_custom_call.1} parent=1 // pred_fallthru
      _
    // Predicated region
    $region30: #{tpu_custom_call.1} parent=1 // pred_check
      _
    $region31: #{tpu_custom_call.1} parent=1 // pred_check_branch
      %73 = sbr.rel (0) target = $region33
    $region32: #{tpu_custom_call.1} parent=1 // pred_region
      %75 = vsyncadd [#allocation9], 0
      %s76 = sshll.u32 %s7, 4
      %s77 = int_to_ptr.hbm [resolvable:$true] %s76
      %s78 = sshll.u32 [#allocation8], 4
      %s79 = int_to_ptr.vmem [resolvable:$true] %s78
      %84 = dma.hbm_to_vmem [thread:$0]  %s77, 64, %s79, [#allocation9], 16, 16, 1
    $region33: #{tpu_custom_call.1} parent=1 // pred_fallthru
      _
    // Predicated region
    $region34: #{tpu_custom_call.1} parent=1 // pred_check
      _
    $region35: #{tpu_custom_call.1} parent=1 // pred_check_branch
      %86 = sbr.rel (0) target = $region37
    $region36: #{tpu_custom_call.1} parent=1 // pred_region
      %88 = vsyncadd [#allocation9], 0
      %s89 = sshll.u32 %s8, 4
      %s90 = int_to_ptr.hbm [resolvable:$true] %s89
      %s91 = sshll.u32 [#allocation10], 4
      %s92 = int_to_ptr.vmem [resolvable:$true] %s91
      %97 = dma.hbm_to_vmem [thread:$0]  %s90, 256, %s92, [#allocation9], 128, 128, 8
    $region37: #{tpu_custom_call.1} parent=1 // pred_fallthru
      _
    // Predicated region
    $region38: #{tpu_custom_call.1} parent=1 // pred_check
      _
    $region39: #{tpu_custom_call.1} parent=1 // pred_check_branch
      %99 = sbr.rel (0) target = $region41
    $region40: #{tpu_custom_call.1} parent=1 // pred_region
      _
    $region41: #{tpu_custom_call.1} parent=1 // pred_fallthru
      _
    // Predicated region
    $region42: #{tpu_custom_call.1} parent=1 // pred_check
      _
    $region43: #{tpu_custom_call.1} parent=1 // pred_check_branch
      %101 = sbr.rel (0) target = $region45
    $region44: #{tpu_custom_call.1} parent=1 // pred_region
      %103 = vsyncadd [#allocation12], 0
      %s104 = sshll.u32 %s10, 4
      %s105 = int_to_ptr.hbm [resolvable:$true] %s104
      %s106 = sshll.u32 [#allocation11], 4
      %s107 = int_to_ptr.vmem [resolvable:$true] %s106
      %112 = dma.hbm_to_vmem [thread:$0]  %s105, 256, %s107, [#allocation12], 128, 128, 8
    $region45: #{tpu_custom_call.1} parent=1 // pred_fallthru
      _
    // Predicated region
    $region46: #{tpu_custom_call.1} parent=1 // pred_check
      _
    $region47: #{tpu_custom_call.1} parent=1 // pred_check_branch
      %114 = sbr.rel (0) target = $region49
    $region48: #{tpu_custom_call.1} parent=1 // pred_region
      _
    $region49: #{tpu_custom_call.1} parent=1 // pred_fallthru
      _
    // Predicated region
    $region50: #{tpu_custom_call.1} parent=1 // pred_check
      _
    $region51: #{tpu_custom_call.1} parent=1 // pred_check_branch
      %116 = sbr.rel (0) target = $region53
    $region52: #{tpu_custom_call.1} parent=1 // pred_region
      %118 = vsyncadd [#allocation12], 0
      %s119 = sshll.u32 %s12, 4
      %s120 = int_to_ptr.hbm [resolvable:$true] %s119
      %s121 = sshll.u32 [#allocation13], 4
      %s122 = int_to_ptr.vmem [resolvable:$true] %s121
      %127 = dma.hbm_to_vmem [thread:$0]  %s120, 512, %s122, [#allocation12], 128, 128, 8
    $region53: #{tpu_custom_call.1} parent=1 // pred_fallthru
      _
    // Predicated region
    $region54: #{tpu_custom_call.1} parent=1 // pred_check
      _
    $region55: #{tpu_custom_call.1} parent=1 // pred_check_branch
      %129 = sbr.rel (0) target = $region57
    $region56: #{tpu_custom_call.1} parent=1 // pred_region
      %131 = vsyncadd [#allocation15], 0
      %s132 = sshll.u32 %s13, 4
      %s133 = int_to_ptr.hbm [resolvable:$true] %s132
      %s134 = sshll.u32 [#allocation14], 4
      %s135 = int_to_ptr.vmem [resolvable:$true] %s134
      %140 = dma.hbm_to_vmem [thread:$0]  %s133, 256, %s135, [#allocation15], 128, 128, 8
    $region57: #{tpu_custom_call.1} parent=1 // pred_fallthru
      _
    // Predicated region
    $region58: #{tpu_custom_call.1} parent=1 // pred_check
      _
    $region59: #{tpu_custom_call.1} parent=1 // pred_check_branch
      %142 = sbr.rel (0) target = $region61
    $region60: #{tpu_custom_call.1} parent=1 // pred_region
      _
    $region61: #{tpu_custom_call.1} parent=1 // pred_fallthru
      _
    // Predicated region
    $region62: #{tpu_custom_call.1} parent=1 // pred_check
      _
    $region63: #{tpu_custom_call.1} parent=1 // pred_check_branch
      %144 = sbr.rel (0) target = $region65
    $region64: #{tpu_custom_call.1} parent=1 // pred_region
      _
    $region65: #{tpu_custom_call.1} parent=1 // pred_fallthru
      _
    // Predicated region
    $region66: #{tpu_custom_call.1} parent=1 // pred_check
      _
    $region67: #{tpu_custom_call.1} parent=1 // pred_check_branch
      %146 = sbr.rel (0) target = $region69
    $region68: #{tpu_custom_call.1} parent=1 // pred_region
      _
    $region69: #{tpu_custom_call.1} parent=1 // pred_fallthru
      _
    // Predicated region
    $region70: #{tpu_custom_call.1} parent=1 // pred_check
      _
    $region71: #{tpu_custom_call.1} parent=1 // pred_check_branch
      %148 = sbr.rel (0) target = $region73
    $region72: #{tpu_custom_call.1} parent=1 // pred_region
      %150 = dma.done [#allocation4], 128
    $region73: #{tpu_custom_call.1} parent=1 // pred_fallthru
      _
    // Predicated region
    $region74: #{tpu_custom_call.1} parent=1 // pred_check
      _
    $region75: #{tpu_custom_call.1} parent=1 // pred_check_branch
      %152 = sbr.rel (0) target = $region77
    $region76: #{tpu_custom_call.1} parent=1 // pred_region
      %154 = dma.done [#allocation6], 384
    $region77: #{tpu_custom_call.1} parent=1 // pred_fallthru
      _
    // Predicated region
    $region78: #{tpu_custom_call.1} parent=1 // pred_check
      _
    $region79: #{tpu_custom_call.1} parent=1 // pred_check_branch
      %156 = sbr.rel (0) target = $region81
    $region80: #{tpu_custom_call.1} parent=1 // pred_region
      %158 = dma.done [#allocation6], 768
    $region81: #{tpu_custom_call.1} parent=1 // pred_fallthru
      _
    // Predicated region
    $region82: #{tpu_custom_call.1} parent=1 // pred_check
      _
    $region83: #{tpu_custom_call.1} parent=1 // pred_check_branch
      %160 = sbr.rel (0) target = $region85
    $region84: #{tpu_custom_call.1} parent=1 // pred_region
      %162 = dma.done [#allocation9], 64
    $region85: #{tpu_custom_call.1} parent=1 // pred_fallthru
      _
    // Predicated region
    $region86: #{tpu_custom_call.1} parent=1 // pred_check
      _
    $region87: #{tpu_custom_call.1} parent=1 // pred_check_branch
      %164 = sbr.rel (0) target = $region89
    $region88: #{tpu_custom_call.1} parent=1 // pred_region
      %166 = dma.done [#allocation9], 256
    $region89: #{tpu_custom_call.1} parent=1 // pred_fallthru
      _
    // Predicated region
    $region90: #{tpu_custom_call.1} parent=1 // pred_check
      _
    $region91: #{tpu_custom_call.1} parent=1 // pred_check_branch
      %168 = sbr.rel (0) target = $region93
    $region92: #{tpu_custom_call.1} parent=1 // pred_region
      %170 = dma.done [#allocation12], 256
    $region93: #{tpu_custom_call.1} parent=1 // pred_fallthru
      _
    // Predicated region
    $region94: #{tpu_custom_call.1} parent=1 // pred_check
      _
    $region95: #{tpu_custom_call.1} parent=1 // pred_check_branch
      %172 = sbr.rel (0) target = $region97
    $region96: #{tpu_custom_call.1} parent=1 // pred_region
      %174 = dma.done [#allocation12], 512
    $region97: #{tpu_custom_call.1} parent=1 // pred_fallthru
      _
    // Predicated region
    $region98: #{tpu_custom_call.1} parent=1 // pred_check
      _
    $region99: #{tpu_custom_call.1} parent=1 // pred_check_branch
      %176 = sbr.rel (0) target = $region101
    $region100: #{tpu_custom_call.1} parent=1 // pred_region
      %178 = dma.done [#allocation15], 256
    $region101: #{tpu_custom_call.1} parent=1 // pred_fallthru
      _
    %v179 = vld [vmem:[%s1] sm:$0xff]
    %v180 = vld [vmem:[%s1 + $0x8] sm:$0xff]
    %v181 = vld [vmem:[%s1 + $0x10] sm:$0xff]
    %v182 = vld [vmem:[%s1 + $0x18] sm:$0xff]
    %v183 = vld [vmem:[%s1 + $0x20] sm:$0xff]
    %v184 = vld [vmem:[%s1 + $0x28] sm:$0xff]
    %v185 = vld [vmem:[%s1 + $0x30] sm:$0xff]
    %v186 = vld [vmem:[%s1 + $0x38] sm:$0xff]
    %v187 = vld [vmem:[#allocation5] sm:$0xff]
    %v188 = vld [vmem:[%s4] sm:$0x1]
    %v190 = vperm.slane %v188, 0
    %vm192 = vcmask 64512
    %v194 = vsel %vm192, %v179, 0
    %v197 = vsel %vm192, %v180, 0
    %v200 = vsel %vm192, %v181, 0
    %v203 = vsel %vm192, %v182, 0
    %v206 = vsel %vm192, %v183, 0
    %v209 = vsel %vm192, %v184, 0
    %v212 = vsel %vm192, %v185, 0
    %v215 = vsel %vm192, %v186, 0
    %217 = vmatpush.msra.mxu0 0.0
    %218 = vmatpush.msra.mxu0 0.0
    %219 = vmatpush.msra.mxu0 0.0
    %220 = vmatpush.msra.mxu0 0.0
    %221 = vmatpush.msra.mxu0 0.0
    %222 = vmatpush.msra.mxu0 0.0
    %223 = vmatpush.msra.mxu0 0.0
    %224 = vmatpush.msra.mxu0 0.0
    %225 = vmatpush.msra.mxu0 0.0
    %226 = vmatpush.msra.mxu0 0.0
    %227 = vmatpush.msra.mxu0 0.0
    %228 = vmatpush.msra.mxu0 0.0
    %229 = vmatpush.msra.mxu0 0.0
    %230 = vmatpush.msra.mxu0 0.0
    %231 = vmatpush.msra.mxu0 0.0
    %232 = vmatpush.msra.mxu0 %v187
    %233 = vmatmul.f32.gmra.mxu0 %v194
    %v234 = vpop.f32.mrf.mxu0
    %v235 = vadd.f32 %v190, %v234
    %236 = vmatmul.f32.gmra.mxu0 %v197
    %v237 = vpop.f32.mrf.mxu0
    %v238 = vadd.f32 %v190, %v237
    %239 = vmatmul.f32.gmra.mxu0 %v200
    %v240 = vpop.f32.mrf.mxu0
    %v241 = vadd.f32 %v190, %v240
    %242 = vmatmul.f32.gmra.mxu0 %v203
    %v243 = vpop.f32.mrf.mxu0
    %v244 = vadd.f32 %v190, %v243
    %245 = vmatmul.f32.gmra.mxu0 %v206
    %v246 = vpop.f32.mrf.mxu0
    %v247 = vadd.f32 %v190, %v246
    %248 = vmatmul.f32.gmra.mxu0 %v209
    %v249 = vpop.f32.mrf.mxu0
    %v250 = vadd.f32 %v190, %v249
    %251 = vmatmul.f32.gmra.mxu0 %v212
    %v252 = vpop.f32.mrf.mxu0
    %v253 = vadd.f32 %v190, %v252
    %254 = vmatmul.f32.gmra.mxu0 %v215
    %v255 = vpop.f32.mrf.mxu0
    %v256 = vadd.f32 %v190, %v255
    %257 = vdwg.mxu0
    %s258 = scalar_lea.vmem [#allocation5], 8
    %v259 = vld [vmem:[%s258] sm:$0xff]
    %s260 = scalar_lea.vmem %s4, 1
    %v261 = vld [vmem:[%s260] sm:$0x1]
    %v263 = vperm.slane %v261, 0
    %265 = vmatpush.msra.mxu0 0.0
    %266 = vmatpush.msra.mxu0 0.0
    %267 = vmatpush.msra.mxu0 0.0
    %268 = vmatpush.msra.mxu0 0.0
    %269 = vmatpush.msra.mxu0 0.0
    %270 = vmatpush.msra.mxu0 0.0
    %271 = vmatpush.msra.mxu0 0.0
    %272 = vmatpush.msra.mxu0 0.0
    %273 = vmatpush.msra.mxu0 0.0
    %274 = vmatpush.msra.mxu0 0.0
    %275 = vmatpush.msra.mxu0 0.0
    %276 = vmatpush.msra.mxu0 0.0
    %277 = vmatpush.msra.mxu0 0.0
    %278 = vmatpush.msra.mxu0 0.0
    %279 = vmatpush.msra.mxu0 0.0
    %280 = vmatpush.msra.mxu0 %v259
    %281 = vmatmul.f32.gmra.mxu0 %v194
    %v282 = vpop.f32.mrf.mxu0
    %v283 = vadd.f32 %v263, %v282
    %284 = vmatmul.f32.gmra.mxu0 %v197
    %v285 = vpop.f32.mrf.mxu0
    %v286 = vadd.f32 %v263, %v285
    %287 = vmatmul.f32.gmra.mxu0 %v200
    %v288 = vpop.f32.mrf.mxu0
    %v289 = vadd.f32 %v263, %v288
    %290 = vmatmul.f32.gmra.mxu0 %v203
    %v291 = vpop.f32.mrf.mxu0
    %v292 = vadd.f32 %v263, %v291
    %293 = vmatmul.f32.gmra.mxu0 %v206
    %v294 = vpop.f32.mrf.mxu0
    %v295 = vadd.f32 %v263, %v294
    %296 = vmatmul.f32.gmra.mxu0 %v209
    %v297 = vpop.f32.mrf.mxu0
    %v298 = vadd.f32 %v263, %v297
    %299 = vmatmul.f32.gmra.mxu0 %v212
    %v300 = vpop.f32.mrf.mxu0
    %v301 = vadd.f32 %v263, %v300
    %302 = vmatmul.f32.gmra.mxu0 %v215
    %v303 = vpop.f32.mrf.mxu0
    %v304 = vadd.f32 %v263, %v303
    %305 = vdwg.mxu0
    %s306 = scalar_lea.vmem [#allocation5], 16
    %v307 = vld [vmem:[%s306] sm:$0xff]
    %s308 = scalar_lea.vmem %s4, 2
    %v309 = vld [vmem:[%s308] sm:$0x1]
    %v311 = vperm.slane %v309, 0
    %313 = vmatpush.msra.mxu0 0.0
    %314 = vmatpush.msra.mxu0 0.0
    %315 = vmatpush.msra.mxu0 0.0
    %316 = vmatpush.msra.mxu0 0.0
    %317 = vmatpush.msra.mxu0 0.0
    %318 = vmatpush.msra.mxu0 0.0
    %319 = vmatpush.msra.mxu0 0.0
    %320 = vmatpush.msra.mxu0 0.0
    %321 = vmatpush.msra.mxu0 0.0
    %322 = vmatpush.msra.mxu0 0.0
    %323 = vmatpush.msra.mxu0 0.0
    %324 = vmatpush.msra.mxu0 0.0
    %325 = vmatpush.msra.mxu0 0.0
    %326 = vmatpush.msra.mxu0 0.0
    %327 = vmatpush.msra.mxu0 0.0
    %328 = vmatpush.msra.mxu0 %v307
    %329 = vmatmul.f32.gmra.mxu0 %v194
    %v330 = vpop.f32.mrf.mxu0
    %v331 = vadd.f32 %v311, %v330
    %332 = vmatmul.f32.gmra.mxu0 %v197
    %v333 = vpop.f32.mrf.mxu0
    %v334 = vadd.f32 %v311, %v333
    %335 = vmatmul.f32.gmra.mxu0 %v200
    %v336 = vpop.f32.mrf.mxu0
    %v337 = vadd.f32 %v311, %v336
    %338 = vmatmul.f32.gmra.mxu0 %v203
    %v339 = vpop.f32.mrf.mxu0
    %v340 = vadd.f32 %v311, %v339
    %341 = vmatmul.f32.gmra.mxu0 %v206
    %v342 = vpop.f32.mrf.mxu0
    %v343 = vadd.f32 %v311, %v342
    %344 = vmatmul.f32.gmra.mxu0 %v209
    %v345 = vpop.f32.mrf.mxu0
    %v346 = vadd.f32 %v311, %v345
    %347 = vmatmul.f32.gmra.mxu0 %v212
    %v348 = vpop.f32.mrf.mxu0
    %v349 = vadd.f32 %v311, %v348
    %350 = vmatmul.f32.gmra.mxu0 %v215
    %v351 = vpop.f32.mrf.mxu0
    %v352 = vadd.f32 %v311, %v351
    %353 = vdwg.mxu0
    %v354 = vld [vmem:[%s3] sm:$0xff]
    %v355 = vld [vmem:[%s3 + $0x8] sm:$0xff]
    %s356 = scalar_lea.vmem %s3, 16
    %v357 = vld [vmem:[%s356] sm:$0xff]
    %v358 = vld [vmem:[%s356 + $0x8] sm:$0xff]
    %s359 = scalar_lea.vmem %s3, 32
    %v360 = vld [vmem:[%s359] sm:$0xff]
    %v361 = vld [vmem:[%s359 + $0x8] sm:$0xff]
    %s362 = scalar_lea.vmem %s4, 3
    %v363 = vld [vmem:[%s362] sm:$0x1]
    %vm364 = vcmask 130048
    %v366 = vsel %vm364, 0.0, 0
    %368 = vmatpush.msra.mxu0 0.0
    %369 = vmatpush.msra.mxu0 0.0
    %370 = vmatpush.msra.mxu0 0.0
    %371 = vmatpush.msra.mxu0 0.0
    %372 = vmatpush.msra.mxu0 0.0
    %373 = vmatpush.msra.mxu0 0.0
    %374 = vmatpush.msra.mxu0 0.0
    %375 = vmatpush.msra.mxu0 0.0
    %376 = vmatpush.msra.mxu0 0.0
    %377 = vmatpush.msra.mxu0 0.0
    %378 = vmatpush.msra.mxu0 0.0
    %379 = vmatpush.msra.mxu0 0.0
    %380 = vmatpush.msra.mxu0 0.0
    %381 = vmatpush.msra.mxu0 0.0
    %382 = vmatpush.msra.mxu0 %v355
    %383 = vmatpush.msra.mxu0 %v354
    %384 = vmatmul.f32.gmra.mxu0 %v366
    %v385 = vpop.f32.mrf.mxu0
    %v386 = vadd.f32 0.0, %v385
    %387 = vdwg.mxu0
    %v388 = vadd.f32 %v235, %v386
    %v389 = vxor.u32 %v388, 2147483648
    %v390 = vmul.f32 %v389, 1.442695
    %v391 = vpow.pop %v390
    %v392 = vadd.f32 %v391, 1.0
    %v393 = vrcp.pop %v392
    %v394 = vmul.f32 %v392, %v393
    %v395 = vsub.f32 1.0, %v394
    %v396 = vmul.f32 %v393, %v395
    %v397 = vadd.f32 %v393, %v396
    %vm398 = vweird.f32 %v392
    %vm399 = vweird.f32 %v393
    %vm400 = vmor %vm398, %vm399
    %v401 = vsel %vm400, %v393, %v397
    %v402 = vand.u32 2147483647, %v392
    %vm403 = vcmp.eq.f32.partialorder %v402, 8.507059e+37
    %v404 = vand.u32 %v392, 2147483648
    %v405 = vor.u32 1.1754944e-38, %v404
    %v406 = vsel %vm403, %v405, %v401
    %v407 = vmul.f32 1.0, %v406
    %408 = vmatpush.msra.mxu0 0.0
    %409 = vmatpush.msra.mxu0 0.0
    %410 = vmatpush.msra.mxu0 0.0
    %411 = vmatpush.msra.mxu0 0.0
    %412 = vmatpush.msra.mxu0 0.0
    %413 = vmatpush.msra.mxu0 0.0
    %414 = vmatpush.msra.mxu0 0.0
    %415 = vmatpush.msra.mxu0 0.0
    %416 = vmatpush.msra.mxu0 0.0
    %417 = vmatpush.msra.mxu0 0.0
    %418 = vmatpush.msra.mxu0 0.0
    %419 = vmatpush.msra.mxu0 0.0
    %420 = vmatpush.msra.mxu0 0.0
    %421 = vmatpush.msra.mxu0 0.0
    %422 = vmatpush.msra.mxu0 %v358
    %423 = vmatpush.msra.mxu0 %v357
    %424 = vmatmul.f32.gmra.mxu0 %v366
    %v425 = vpop.f32.mrf.mxu0
    %v426 = vadd.f32 0.0, %v425
    %427 = vdwg.mxu0
    %v428 = vadd.f32 %v283, %v426
    %v429 = vxor.u32 %v428, 2147483648
    %v430 = vmul.f32 %v429, 1.442695
    %v431 = vpow.pop %v430
    %v432 = vadd.f32 %v431, 1.0
    %v433 = vrcp.pop %v432
    %v434 = vmul.f32 %v432, %v433
    %v435 = vsub.f32 1.0, %v434
    %v436 = vmul.f32 %v433, %v435
    %v437 = vadd.f32 %v433, %v436
    %vm438 = vweird.f32 %v432
    %vm439 = vweird.f32 %v433
    %vm440 = vmor %vm438, %vm439
    %v441 = vsel %vm440, %v433, %v437
    %v442 = vand.u32 2147483647, %v432
    %vm443 = vcmp.eq.f32.partialorder %v442, 8.507059e+37
    %v444 = vand.u32 %v432, 2147483648
    %v445 = vor.u32 1.1754944e-38, %v444
    %v446 = vsel %vm443, %v445, %v441
    %v447 = vmul.f32 1.0, %v446
    %v449 = vperm.slane %v363, 0
    %451 = vmatpush.msra.mxu0 0.0
    %452 = vmatpush.msra.mxu0 0.0
    %453 = vmatpush.msra.mxu0 0.0
    %454 = vmatpush.msra.mxu0 0.0
    %455 = vmatpush.msra.mxu0 0.0
    %456 = vmatpush.msra.mxu0 0.0
    %457 = vmatpush.msra.mxu0 0.0
    %458 = vmatpush.msra.mxu0 0.0
    %459 = vmatpush.msra.mxu0 0.0
    %460 = vmatpush.msra.mxu0 0.0
    %461 = vmatpush.msra.mxu0 0.0
    %462 = vmatpush.msra.mxu0 0.0
    %463 = vmatpush.msra.mxu0 0.0
    %464 = vmatpush.msra.mxu0 0.0
    %465 = vmatpush.msra.mxu0 %v361
    %466 = vmatpush.msra.mxu0 %v360
    %467 = vmatmul.f32.gmra.mxu0 %v366
    %v468 = vpop.f32.mrf.mxu0
    %v469 = vadd.f32 %v449, %v468
    %470 = vdwg.mxu0
    %v471 = vmul.f32 %v407, %v469
    %v472 = vadd.f32 %v331, %v471
    %v473 = vtanh.pop %v472
    %v474 = vsub.f32 1.0, %v447
    %v475 = vmul.f32 %v474, %v473
    %v476 = vmul.f32 %v447, 0.0
    %v477 = vadd.f32 %v475, %v476
    %478 = vst.msk [vmem:[#allocation2] sm:$0xff] %vm364, %v477
    %v480 = vsel %vm364, %v477, 0
    %482 = vmatpush.msra.mxu0 0.0
    %483 = vmatpush.msra.mxu0 0.0
    %484 = vmatpush.msra.mxu0 0.0
    %485 = vmatpush.msra.mxu0 0.0
    %486 = vmatpush.msra.mxu0 0.0
    %487 = vmatpush.msra.mxu0 0.0
    %488 = vmatpush.msra.mxu0 0.0
    %489 = vmatpush.msra.mxu0 0.0
    %490 = vmatpush.msra.mxu0 0.0
    %491 = vmatpush.msra.mxu0 0.0
    %492 = vmatpush.msra.mxu0 0.0
    %493 = vmatpush.msra.mxu0 0.0
    %494 = vmatpush.msra.mxu0 0.0
    %495 = vmatpush.msra.mxu0 0.0
    %496 = vmatpush.msra.mxu0 %v355
    %497 = vmatpush.msra.mxu0 %v354
    %498 = vmatmul.f32.gmra.mxu0 %v480
    %v499 = vpop.f32.mrf.mxu0
    %v500 = vadd.f32 0.0, %v499
    %501 = vdwg.mxu0
    %v502 = vadd.f32 %v238, %v500
    %v503 = vxor.u32 %v502, 2147483648
    %v504 = vmul.f32 %v503, 1.442695
    %v505 = vpow.pop %v504
    %v506 = vadd.f32 %v505, 1.0
    %v507 = vrcp.pop %v506
    %v508 = vmul.f32 %v506, %v507
    %v509 = vsub.f32 1.0, %v508
    %v510 = vmul.f32 %v507, %v509
    %v511 = vadd.f32 %v507, %v510
    %vm512 = vweird.f32 %v506
    %vm513 = vweird.f32 %v507
    %vm514 = vmor %vm512, %vm513
    %v515 = vsel %vm514, %v507, %v511
    %v516 = vand.u32 2147483647, %v506
    %vm517 = vcmp.eq.f32.partialorder %v516, 8.507059e+37
    %v518 = vand.u32 %v506, 2147483648
    %v519 = vor.u32 1.1754944e-38, %v518
    %v520 = vsel %vm517, %v519, %v515
    %v521 = vmul.f32 1.0, %v520
    %522 = vmatpush.msra.mxu0 0.0
    %523 = vmatpush.msra.mxu0 0.0
    %524 = vmatpush.msra.mxu0 0.0
    %525 = vmatpush.msra.mxu0 0.0
    %526 = vmatpush.msra.mxu0 0.0
    %527 = vmatpush.msra.mxu0 0.0
    %528 = vmatpush.msra.mxu0 0.0
    %529 = vmatpush.msra.mxu0 0.0
    %530 = vmatpush.msra.mxu0 0.0
    %531 = vmatpush.msra.mxu0 0.0
    %532 = vmatpush.msra.mxu0 0.0
    %533 = vmatpush.msra.mxu0 0.0
    %534 = vmatpush.msra.mxu0 0.0
    %535 = vmatpush.msra.mxu0 0.0
    %536 = vmatpush.msra.mxu0 %v358
    %537 = vmatpush.msra.mxu0 %v357
    %538 = vmatmul.f32.gmra.mxu0 %v480
    %v539 = vpop.f32.mrf.mxu0
    %v540 = vadd.f32 0.0, %v539
    %541 = vdwg.mxu0
    %v542 = vadd.f32 %v286, %v540
    %v543 = vxor.u32 %v542, 2147483648
    %v544 = vmul.f32 %v543, 1.442695
    %v545 = vpow.pop %v544
    %v546 = vadd.f32 %v545, 1.0
    %v547 = vrcp.pop %v546
    %v548 = vmul.f32 %v546, %v547
    %v549 = vsub.f32 1.0, %v548
    %v550 = vmul.f32 %v547, %v549
    %v551 = vadd.f32 %v547, %v550
    %vm552 = vweird.f32 %v546
    %vm553 = vweird.f32 %v547
    %vm554 = vmor %vm552, %vm553
    %v555 = vsel %vm554, %v547, %v551
    %v556 = vand.u32 2147483647, %v546
    %vm557 = vcmp.eq.f32.partialorder %v556, 8.507059e+37
    %v558 = vand.u32 %v546, 2147483648
    %v559 = vor.u32 1.1754944e-38, %v558
    %v560 = vsel %vm557, %v559, %v555
    %v561 = vmul.f32 1.0, %v560
    %562 = vmatpush.msra.mxu0 0.0
    %563 = vmatpush.msra.mxu0 0.0
    %564 = vmatpush.msra.mxu0 0.0
    %565 = vmatpush.msra.mxu0 0.0
    %566 = vmatpush.msra.mxu0 0.0
    %567 = vmatpush.msra.mxu0 0.0
    %568 = vmatpush.msra.mxu0 0.0
    %569 = vmatpush.msra.mxu0 0.0
    %570 = vmatpush.msra.mxu0 0.0
    %571 = vmatpush.msra.mxu0 0.0
    %572 = vmatpush.msra.mxu0 0.0
    %573 = vmatpush.msra.mxu0 0.0
    %574 = vmatpush.msra.mxu0 0.0
    %575 = vmatpush.msra.mxu0 0.0
    %576 = vmatpush.msra.mxu0 %v361
    %577 = vmatpush.msra.mxu0 %v360
    %578 = vmatmul.f32.gmra.mxu0 %v480
    %v579 = vpop.f32.mrf.mxu0
    %v580 = vadd.f32 %v449, %v579
    %581 = vdwg.mxu0
    %v582 = vmul.f32 %v521, %v580
    %v583 = vadd.f32 %v334, %v582
    %v584 = vtanh.pop %v583
    %v585 = vsub.f32 1.0, %v561
    %v586 = vmul.f32 %v585, %v584
    %v587 = vmul.f32 %v561, %v477
    %v588 = vadd.f32 %v586, %v587
    %589 = vst.msk [vmem:[#allocation2 + $0x8] sm:$0xff] %vm364, %v588
    %v591 = vsel %vm364, %v588, 0
    %593 = vmatpush.msra.mxu0 0.0
    %594 = vmatpush.msra.mxu0 0.0
    %595 = vmatpush.msra.mxu0 0.0
    %596 = vmatpush.msra.mxu0 0.0
    %597 = vmatpush.msra.mxu0 0.0
    %598 = vmatpush.msra.mxu0 0.0
    %599 = vmatpush.msra.mxu0 0.0
    %600 = vmatpush.msra.mxu0 0.0
    %601 = vmatpush.msra.mxu0 0.0
    %602 = vmatpush.msra.mxu0 0.0
    %603 = vmatpush.msra.mxu0 0.0
    %604 = vmatpush.msra.mxu0 0.0
    %605 = vmatpush.msra.mxu0 0.0
    %606 = vmatpush.msra.mxu0 0.0
    %607 = vmatpush.msra.mxu0 %v355
    %608 = vmatpush.msra.mxu0 %v354
    %609 = vmatmul.f32.gmra.mxu0 %v591
    %v610 = vpop.f32.mrf.mxu0
    %v611 = vadd.f32 0.0, %v610
    %612 = vdwg.mxu0
    %v613 = vadd.f32 %v241, %v611
    %v614 = vxor.u32 %v613, 2147483648
    %v615 = vmul.f32 %v614, 1.442695
    %v616 = vpow.pop %v615
    %v617 = vadd.f32 %v616, 1.0
    %v618 = vrcp.pop %v617
    %v619 = vmul.f32 %v617, %v618
    %v620 = vsub.f32 1.0, %v619
    %v621 = vmul.f32 %v618, %v620
    %v622 = vadd.f32 %v618, %v621
    %vm623 = vweird.f32 %v617
    %vm624 = vweird.f32 %v618
    %vm625 = vmor %vm623, %vm624
    %v626 = vsel %vm625, %v618, %v622
    %v627 = vand.u32 2147483647, %v617
    %vm628 = vcmp.eq.f32.partialorder %v627, 8.507059e+37
    %v629 = vand.u32 %v617, 2147483648
    %v630 = vor.u32 1.1754944e-38, %v629
    %v631 = vsel %vm628, %v630, %v626
    %v632 = vmul.f32 1.0, %v631
    %633 = vmatpush.msra.mxu0 0.0
    %634 = vmatpush.msra.mxu0 0.0
    %635 = vmatpush.msra.mxu0 0.0
    %636 = vmatpush.msra.mxu0 0.0
    %637 = vmatpush.msra.mxu0 0.0
    %638 = vmatpush.msra.mxu0 0.0
    %639 = vmatpush.msra.mxu0 0.0
    %640 = vmatpush.msra.mxu0 0.0
    %641 = vmatpush.msra.mxu0 0.0
    %642 = vmatpush.msra.mxu0 0.0
    %643 = vmatpush.msra.mxu0 0.0
    %644 = vmatpush.msra.mxu0 0.0
    %645 = vmatpush.msra.mxu0 0.0
    %646 = vmatpush.msra.mxu0 0.0
    %647 = vmatpush.msra.mxu0 %v358
    %648 = vmatpush.msra.mxu0 %v357
    %649 = vmatmul.f32.gmra.mxu0 %v591
    %v650 = vpop.f32.mrf.mxu0
    %v651 = vadd.f32 0.0, %v650
    %652 = vdwg.mxu0
    %v653 = vadd.f32 %v289, %v651
    %v654 = vxor.u32 %v653, 2147483648
    %v655 = vmul.f32 %v654, 1.442695
    %v656 = vpow.pop %v655
    %v657 = vadd.f32 %v656, 1.0
    %v658 = vrcp.pop %v657
    %v659 = vmul.f32 %v657, %v658
    %v660 = vsub.f32 1.0, %v659
    %v661 = vmul.f32 %v658, %v660
    %v662 = vadd.f32 %v658, %v661
    %vm663 = vweird.f32 %v657
    %vm664 = vweird.f32 %v658
    %vm665 = vmor %vm663, %vm664
    %v666 = vsel %vm665, %v658, %v662
    %v667 = vand.u32 2147483647, %v657
    %vm668 = vcmp.eq.f32.partialorder %v667, 8.507059e+37
    %v669 = vand.u32 %v657, 2147483648
    %v670 = vor.u32 1.1754944e-38, %v669
    %v671 = vsel %vm668, %v670, %v666
    %v672 = vmul.f32 1.0, %v671
    %673 = vmatpush.msra.mxu0 0.0
    %674 = vmatpush.msra.mxu0 0.0
    %675 = vmatpush.msra.mxu0 0.0
    %676 = vmatpush.msra.mxu0 0.0
    %677 = vmatpush.msra.mxu0 0.0
    %678 = vmatpush.msra.mxu0 0.0
    %679 = vmatpush.msra.mxu0 0.0
    %680 = vmatpush.msra.mxu0 0.0
    %681 = vmatpush.msra.mxu0 0.0
    %682 = vmatpush.msra.mxu0 0.0
    %683 = vmatpush.msra.mxu0 0.0
    %684 = vmatpush.msra.mxu0 0.0
    %685 = vmatpush.msra.mxu0 0.0
    %686 = vmatpush.msra.mxu0 0.0
    %687 = vmatpush.msra.mxu0 %v361
    %688 = vmatpush.msra.mxu0 %v360
    %689 = vmatmul.f32.gmra.mxu0 %v591
    %v690 = vpop.f32.mrf.mxu0
    %v691 = vadd.f32 %v449, %v690
    %692 = vdwg.mxu0
    %v693 = vmul.f32 %v632, %v691
    %v694 = vadd.f32 %v337, %v693
    %v695 = vtanh.pop %v694
    %v696 = vsub.f32 1.0, %v672
    %v697 = vmul.f32 %v696, %v695
    %v698 = vmul.f32 %v672, %v588
    %v699 = vadd.f32 %v697, %v698
    %700 = vst.msk [vmem:[#allocation2 + $0x10] sm:$0xff] %vm364, %v699
    %v702 = vsel %vm364, %v699, 0
    %704 = vmatpush.msra.mxu0 0.0
    %705 = vmatpush.msra.mxu0 0.0
    %706 = vmatpush.msra.mxu0 0.0
    %707 = vmatpush.msra.mxu0 0.0
    %708 = vmatpush.msra.mxu0 0.0
    %709 = vmatpush.msra.mxu0 0.0
    %710 = vmatpush.msra.mxu0 0.0
    %711 = vmatpush.msra.mxu0 0.0
    %712 = vmatpush.msra.mxu0 0.0
    %713 = vmatpush.msra.mxu0 0.0
    %714 = vmatpush.msra.mxu0 0.0
    %715 = vmatpush.msra.mxu0 0.0
    %716 = vmatpush.msra.mxu0 0.0
    %717 = vmatpush.msra.mxu0 0.0
    %718 = vmatpush.msra.mxu0 %v355
    %719 = vmatpush.msra.mxu0 %v354
    %720 = vmatmul.f32.gmra.mxu0 %v702
    %v721 = vpop.f32.mrf.mxu0
    %v722 = vadd.f32 0.0, %v721
    %723 = vdwg.mxu0
    %v724 = vadd.f32 %v244, %v722
    %v725 = vxor.u32 %v724, 2147483648
    %v726 = vmul.f32 %v725, 1.442695
    %v727 = vpow.pop %v726
    %v728 = vadd.f32 %v727, 1.0
    %v729 = vrcp.pop %v728
    %v730 = vmul.f32 %v728, %v729
    %v731 = vsub.f32 1.0, %v730
    %v732 = vmul.f32 %v729, %v731
    %v733 = vadd.f32 %v729, %v732
    %vm734 = vweird.f32 %v728
    %vm735 = vweird.f32 %v729
    %vm736 = vmor %vm734, %vm735
    %v737 = vsel %vm736, %v729, %v733
    %v738 = vand.u32 2147483647, %v728
    %vm739 = vcmp.eq.f32.partialorder %v738, 8.507059e+37
    %v740 = vand.u32 %v728, 2147483648
    %v741 = vor.u32 1.1754944e-38, %v740
    %v742 = vsel %vm739, %v741, %v737
    %v743 = vmul.f32 1.0, %v742
    %744 = vmatpush.msra.mxu0 0.0
    %745 = vmatpush.msra.mxu0 0.0
    %746 = vmatpush.msra.mxu0 0.0
    %747 = vmatpush.msra.mxu0 0.0
    %748 = vmatpush.msra.mxu0 0.0
    %749 = vmatpush.msra.mxu0 0.0
    %750 = vmatpush.msra.mxu0 0.0
    %751 = vmatpush.msra.mxu0 0.0
    %752 = vmatpush.msra.mxu0 0.0
    %753 = vmatpush.msra.mxu0 0.0
    %754 = vmatpush.msra.mxu0 0.0
    %755 = vmatpush.msra.mxu0 0.0
    %756 = vmatpush.msra.mxu0 0.0
    %757 = vmatpush.msra.mxu0 0.0
    %758 = vmatpush.msra.mxu0 %v358
    %759 = vmatpush.msra.mxu0 %v357
    %760 = vmatmul.f32.gmra.mxu0 %v702
    %v761 = vpop.f32.mrf.mxu0
    %v762 = vadd.f32 0.0, %v761
    %763 = vdwg.mxu0
    %v764 = vadd.f32 %v292, %v762
    %v765 = vxor.u32 %v764, 2147483648
    %v766 = vmul.f32 %v765, 1.442695
    %v767 = vpow.pop %v766
    %v768 = vadd.f32 %v767, 1.0
    %v769 = vrcp.pop %v768
    %v770 = vmul.f32 %v768, %v769
    %v771 = vsub.f32 1.0, %v770
    %v772 = vmul.f32 %v769, %v771
    %v773 = vadd.f32 %v769, %v772
    %vm774 = vweird.f32 %v768
    %vm775 = vweird.f32 %v769
    %vm776 = vmor %vm774, %vm775
    %v777 = vsel %vm776, %v769, %v773
    %v778 = vand.u32 2147483647, %v768
    %vm779 = vcmp.eq.f32.partialorder %v778, 8.507059e+37
    %v780 = vand.u32 %v768, 2147483648
    %v781 = vor.u32 1.1754944e-38, %v780
    %v782 = vsel %vm779, %v781, %v777
    %v783 = vmul.f32 1.0, %v782
    %784 = vmatpush.msra.mxu0 0.0
    %785 = vmatpush.msra.mxu0 0.0
    %786 = vmatpush.msra.mxu0 0.0
    %787 = vmatpush.msra.mxu0 0.0
    %788 = vmatpush.msra.mxu0 0.0
    %789 = vmatpush.msra.mxu0 0.0
    %790 = vmatpush.msra.mxu0 0.0
    %791 = vmatpush.msra.mxu0 0.0
    %792 = vmatpush.msra.mxu0 0.0
    %793 = vmatpush.msra.mxu0 0.0
    %794 = vmatpush.msra.mxu0 0.0
    %795 = vmatpush.msra.mxu0 0.0
    %796 = vmatpush.msra.mxu0 0.0
    %797 = vmatpush.msra.mxu0 0.0
    %798 = vmatpush.msra.mxu0 %v361
    %799 = vmatpush.msra.mxu0 %v360
    %800 = vmatmul.f32.gmra.mxu0 %v702
    %v801 = vpop.f32.mrf.mxu0
    %v802 = vadd.f32 %v449, %v801
    %803 = vdwg.mxu0
    %v804 = vmul.f32 %v743, %v802
    %v805 = vadd.f32 %v340, %v804
    %v806 = vtanh.pop %v805
    %v807 = vsub.f32 1.0, %v783
    %v808 = vmul.f32 %v807, %v806
    %v809 = vmul.f32 %v783, %v699
    %v810 = vadd.f32 %v808, %v809
    %811 = vst.msk [vmem:[#allocation2 + $0x18] sm:$0xff] %vm364, %v810
    %v813 = vsel %vm364, %v810, 0
    %815 = vmatpush.msra.mxu0 0.0
    %816 = vmatpush.msra.mxu0 0.0
    %817 = vmatpush.msra.mxu0 0.0
    %818 = vmatpush.msra.mxu0 0.0
    %819 = vmatpush.msra.mxu0 0.0
    %820 = vmatpush.msra.mxu0 0.0
    %821 = vmatpush.msra.mxu0 0.0
    %822 = vmatpush.msra.mxu0 0.0
    %823 = vmatpush.msra.mxu0 0.0
    %824 = vmatpush.msra.mxu0 0.0
    %825 = vmatpush.msra.mxu0 0.0
    %826 = vmatpush.msra.mxu0 0.0
    %827 = vmatpush.msra.mxu0 0.0
    %828 = vmatpush.msra.mxu0 0.0
    %829 = vmatpush.msra.mxu0 %v355
    %830 = vmatpush.msra.mxu0 %v354
    %831 = vmatmul.f32.gmra.mxu0 %v813
    %v832 = vpop.f32.mrf.mxu0
    %v833 = vadd.f32 0.0, %v832
    %834 = vdwg.mxu0
    %v835 = vadd.f32 %v247, %v833
    %v836 = vxor.u32 %v835, 2147483648
    %v837 = vmul.f32 %v836, 1.442695
    %v838 = vpow.pop %v837
    %v839 = vadd.f32 %v838, 1.0
    %v840 = vrcp.pop %v839
    %v841 = vmul.f32 %v839, %v840
    %v842 = vsub.f32 1.0, %v841
    %v843 = vmul.f32 %v840, %v842
    %v844 = vadd.f32 %v840, %v843
    %vm845 = vweird.f32 %v839
    %vm846 = vweird.f32 %v840
    %vm847 = vmor %vm845, %vm846
    %v848 = vsel %vm847, %v840, %v844
    %v849 = vand.u32 2147483647, %v839
    %vm850 = vcmp.eq.f32.partialorder %v849, 8.507059e+37
    %v851 = vand.u32 %v839, 2147483648
    %v852 = vor.u32 1.1754944e-38, %v851
    %v853 = vsel %vm850, %v852, %v848
    %v854 = vmul.f32 1.0, %v853
    %855 = vmatpush.msra.mxu0 0.0
    %856 = vmatpush.msra.mxu0 0.0
    %857 = vmatpush.msra.mxu0 0.0
    %858 = vmatpush.msra.mxu0 0.0
    %859 = vmatpush.msra.mxu0 0.0
    %860 = vmatpush.msra.mxu0 0.0
    %861 = vmatpush.msra.mxu0 0.0
    %862 = vmatpush.msra.mxu0 0.0
    %863 = vmatpush.msra.mxu0 0.0
    %864 = vmatpush.msra.mxu0 0.0
    %865 = vmatpush.msra.mxu0 0.0
    %866 = vmatpush.msra.mxu0 0.0
    %867 = vmatpush.msra.mxu0 0.0
    %868 = vmatpush.msra.mxu0 0.0
    %869 = vmatpush.msra.mxu0 %v358
    %870 = vmatpush.msra.mxu0 %v357
    %871 = vmatmul.f32.gmra.mxu0 %v813
    %v872 = vpop.f32.mrf.mxu0
    %v873 = vadd.f32 0.0, %v872
    %874 = vdwg.mxu0
    %v875 = vadd.f32 %v295, %v873
    %v876 = vxor.u32 %v875, 2147483648
    %v877 = vmul.f32 %v876, 1.442695
    %v878 = vpow.pop %v877
    %v879 = vadd.f32 %v878, 1.0
    %v880 = vrcp.pop %v879
    %v881 = vmul.f32 %v879, %v880
    %v882 = vsub.f32 1.0, %v881
    %v883 = vmul.f32 %v880, %v882
    %v884 = vadd.f32 %v880, %v883
    %vm885 = vweird.f32 %v879
    %vm886 = vweird.f32 %v880
    %vm887 = vmor %vm885, %vm886
    %v888 = vsel %vm887, %v880, %v884
    %v889 = vand.u32 2147483647, %v879
    %vm890 = vcmp.eq.f32.partialorder %v889, 8.507059e+37
    %v891 = vand.u32 %v879, 2147483648
    %v892 = vor.u32 1.1754944e-38, %v891
    %v893 = vsel %vm890, %v892, %v888
    %v894 = vmul.f32 1.0, %v893
    %895 = vmatpush.msra.mxu0 0.0
    %896 = vmatpush.msra.mxu0 0.0
    %897 = vmatpush.msra.mxu0 0.0
    %898 = vmatpush.msra.mxu0 0.0
    %899 = vmatpush.msra.mxu0 0.0
    %900 = vmatpush.msra.mxu0 0.0
    %901 = vmatpush.msra.mxu0 0.0
    %902 = vmatpush.msra.mxu0 0.0
    %903 = vmatpush.msra.mxu0 0.0
    %904 = vmatpush.msra.mxu0 0.0
    %905 = vmatpush.msra.mxu0 0.0
    %906 = vmatpush.msra.mxu0 0.0
    %907 = vmatpush.msra.mxu0 0.0
    %908 = vmatpush.msra.mxu0 0.0
    %909 = vmatpush.msra.mxu0 %v361
    %910 = vmatpush.msra.mxu0 %v360
    %911 = vmatmul.f32.gmra.mxu0 %v813
    %v912 = vpop.f32.mrf.mxu0
    %v913 = vadd.f32 %v449, %v912
    %914 = vdwg.mxu0
    %v915 = vmul.f32 %v854, %v913
    %v916 = vadd.f32 %v343, %v915
    %v917 = vtanh.pop %v916
    %v918 = vsub.f32 1.0, %v894
    %v919 = vmul.f32 %v918, %v917
    %v920 = vmul.f32 %v894, %v810
    %v921 = vadd.f32 %v919, %v920
    %922 = vst.msk [vmem:[#allocation2 + $0x20] sm:$0xff] %vm364, %v921
    %v924 = vsel %vm364, %v921, 0
    %926 = vmatpush.msra.mxu0 0.0
    %927 = vmatpush.msra.mxu0 0.0
    %928 = vmatpush.msra.mxu0 0.0
    %929 = vmatpush.msra.mxu0 0.0
    %930 = vmatpush.msra.mxu0 0.0
    %931 = vmatpush.msra.mxu0 0.0
    %932 = vmatpush.msra.mxu0 0.0
    %933 = vmatpush.msra.mxu0 0.0
    %934 = vmatpush.msra.mxu0 0.0
    %935 = vmatpush.msra.mxu0 0.0
    %936 = vmatpush.msra.mxu0 0.0
    %937 = vmatpush.msra.mxu0 0.0
    %938 = vmatpush.msra.mxu0 0.0
    %939 = vmatpush.msra.mxu0 0.0
    %940 = vmatpush.msra.mxu0 %v355
    %941 = vmatpush.msra.mxu0 %v354
    %942 = vmatmul.f32.gmra.mxu0 %v924
    %v943 = vpop.f32.mrf.mxu0
    %v944 = vadd.f32 0.0, %v943
    %945 = vdwg.mxu0
    %v946 = vadd.f32 %v250, %v944
    %v947 = vxor.u32 %v946, 2147483648
    %v948 = vmul.f32 %v947, 1.442695
    %v949 = vpow.pop %v948
    %v950 = vadd.f32 %v949, 1.0
    %v951 = vrcp.pop %v950
    %v952 = vmul.f32 %v950, %v951
    %v953 = vsub.f32 1.0, %v952
    %v954 = vmul.f32 %v951, %v953
    %v955 = vadd.f32 %v951, %v954
    %vm956 = vweird.f32 %v950
    %vm957 = vweird.f32 %v951
    %vm958 = vmor %vm956, %vm957
    %v959 = vsel %vm958, %v951, %v955
    %v960 = vand.u32 2147483647, %v950
    %vm961 = vcmp.eq.f32.partialorder %v960, 8.507059e+37
    %v962 = vand.u32 %v950, 2147483648
    %v963 = vor.u32 1.1754944e-38, %v962
    %v964 = vsel %vm961, %v963, %v959
    %v965 = vmul.f32 1.0, %v964
    %966 = vmatpush.msra.mxu0 0.0
    %967 = vmatpush.msra.mxu0 0.0
    %968 = vmatpush.msra.mxu0 0.0
    %969 = vmatpush.msra.mxu0 0.0
    %970 = vmatpush.msra.mxu0 0.0
    %971 = vmatpush.msra.mxu0 0.0
    %972 = vmatpush.msra.mxu0 0.0
    %973 = vmatpush.msra.mxu0 0.0
    %974 = vmatpush.msra.mxu0 0.0
    %975 = vmatpush.msra.mxu0 0.0
    %976 = vmatpush.msra.mxu0 0.0
    %977 = vmatpush.msra.mxu0 0.0
    %978 = vmatpush.msra.mxu0 0.0
    %979 = vmatpush.msra.mxu0 0.0
    %980 = vmatpush.msra.mxu0 %v358
    %981 = vmatpush.msra.mxu0 %v357
    %982 = vmatmul.f32.gmra.mxu0 %v924
    %v983 = vpop.f32.mrf.mxu0
    %v984 = vadd.f32 0.0, %v983
    %985 = vdwg.mxu0
    %v986 = vadd.f32 %v298, %v984
    %v987 = vxor.u32 %v986, 2147483648
    %v988 = vmul.f32 %v987, 1.442695
    %v989 = vpow.pop %v988
    %v990 = vadd.f32 %v989, 1.0
    %v991 = vrcp.pop %v990
    %v992 = vmul.f32 %v990, %v991
    %v993 = vsub.f32 1.0, %v992
    %v994 = vmul.f32 %v991, %v993
    %v995 = vadd.f32 %v991, %v994
    %vm996 = vweird.f32 %v990
    %vm997 = vweird.f32 %v991
    %vm998 = vmor %vm996, %vm997
    %v999 = vsel %vm998, %v991, %v995
    %v1000 = vand.u32 2147483647, %v990
    %vm1001 = vcmp.eq.f32.partialorder %v1000, 8.507059e+37
    %v1002 = vand.u32 %v990, 2147483648
    %v1003 = vor.u32 1.1754944e-38, %v1002
    %v1004 = vsel %vm1001, %v1003, %v999
    %v1005 = vmul.f32 1.0, %v1004
    %1006 = vmatpush.msra.mxu0 0.0
    %1007 = vmatpush.msra.mxu0 0.0
    %1008 = vmatpush.msra.mxu0 0.0
    %1009 = vmatpush.msra.mxu0 0.0
    %1010 = vmatpush.msra.mxu0 0.0
    %1011 = vmatpush.msra.mxu0 0.0
    %1012 = vmatpush.msra.mxu0 0.0
    %1013 = vmatpush.msra.mxu0 0.0
    %1014 = vmatpush.msra.mxu0 0.0
    %1015 = vmatpush.msra.mxu0 0.0
    %1016 = vmatpush.msra.mxu0 0.0
    %1017 = vmatpush.msra.mxu0 0.0
    %1018 = vmatpush.msra.mxu0 0.0
    %1019 = vmatpush.msra.mxu0 0.0
    %1020 = vmatpush.msra.mxu0 %v361
    %1021 = vmatpush.msra.mxu0 %v360
    %1022 = vmatmul.f32.gmra.mxu0 %v924
    %v1023 = vpop.f32.mrf.mxu0
    %v1024 = vadd.f32 %v449, %v1023
    %1025 = vdwg.mxu0
    %v1026 = vmul.f32 %v965, %v1024
    %v1027 = vadd.f32 %v346, %v1026
    %v1028 = vtanh.pop %v1027
    %v1029 = vsub.f32 1.0, %v1005
    %v1030 = vmul.f32 %v1029, %v1028
    %v1031 = vmul.f32 %v1005, %v921
    %v1032 = vadd.f32 %v1030, %v1031
    %1033 = vst.msk [vmem:[#allocation2 + $0x28] sm:$0xff] %vm364, %v1032
    %v1035 = vsel %vm364, %v1032, 0
    %1037 = vmatpush.msra.mxu0 0.0
    %1038 = vmatpush.msra.mxu0 0.0
    %1039 = vmatpush.msra.mxu0 0.0
    %1040 = vmatpush.msra.mxu0 0.0
    %1041 = vmatpush.msra.mxu0 0.0
    %1042 = vmatpush.msra.mxu0 0.0
    %1043 = vmatpush.msra.mxu0 0.0
    %1044 = vmatpush.msra.mxu0 0.0
    %1045 = vmatpush.msra.mxu0 0.0
    %1046 = vmatpush.msra.mxu0 0.0
    %1047 = vmatpush.msra.mxu0 0.0
    %1048 = vmatpush.msra.mxu0 0.0
    %1049 = vmatpush.msra.mxu0 0.0
    %1050 = vmatpush.msra.mxu0 0.0
    %1051 = vmatpush.msra.mxu0 %v355
    %1052 = vmatpush.msra.mxu0 %v354
    %1053 = vmatmul.f32.gmra.mxu0 %v1035
    %v1054 = vpop.f32.mrf.mxu0
    %v1055 = vadd.f32 0.0, %v1054
    %1056 = vdwg.mxu0
    %v1057 = vadd.f32 %v253, %v1055
    %v1058 = vxor.u32 %v1057, 2147483648
    %v1059 = vmul.f32 %v1058, 1.442695
    %v1060 = vpow.pop %v1059
    %v1061 = vadd.f32 %v1060, 1.0
    %v1062 = vrcp.pop %v1061
    %v1063 = vmul.f32 %v1061, %v1062
    %v1064 = vsub.f32 1.0, %v1063
    %v1065 = vmul.f32 %v1062, %v1064
    %v1066 = vadd.f32 %v1062, %v1065
    %vm1067 = vweird.f32 %v1061
    %vm1068 = vweird.f32 %v1062
    %vm1069 = vmor %vm1067, %vm1068
    %v1070 = vsel %vm1069, %v1062, %v1066
    %v1071 = vand.u32 2147483647, %v1061
    %vm1072 = vcmp.eq.f32.partialorder %v1071, 8.507059e+37
    %v1073 = vand.u32 %v1061, 2147483648
    %v1074 = vor.u32 1.1754944e-38, %v1073
    %v1075 = vsel %vm1072, %v1074, %v1070
    %v1076 = vmul.f32 1.0, %v1075
    %1077 = vmatpush.msra.mxu0 0.0
    %1078 = vmatpush.msra.mxu0 0.0
    %1079 = vmatpush.msra.mxu0 0.0
    %1080 = vmatpush.msra.mxu0 0.0
    %1081 = vmatpush.msra.mxu0 0.0
    %1082 = vmatpush.msra.mxu0 0.0
    %1083 = vmatpush.msra.mxu0 0.0
    %1084 = vmatpush.msra.mxu0 0.0
    %1085 = vmatpush.msra.mxu0 0.0
    %1086 = vmatpush.msra.mxu0 0.0
    %1087 = vmatpush.msra.mxu0 0.0
    %1088 = vmatpush.msra.mxu0 0.0
    %1089 = vmatpush.msra.mxu0 0.0
    %1090 = vmatpush.msra.mxu0 0.0
    %1091 = vmatpush.msra.mxu0 %v358
    %1092 = vmatpush.msra.mxu0 %v357
    %1093 = vmatmul.f32.gmra.mxu0 %v1035
    %v1094 = vpop.f32.mrf.mxu0
    %v1095 = vadd.f32 0.0, %v1094
    %1096 = vdwg.mxu0
    %v1097 = vadd.f32 %v301, %v1095
    %v1098 = vxor.u32 %v1097, 2147483648
    %v1099 = vmul.f32 %v1098, 1.442695
    %v1100 = vpow.pop %v1099
    %v1101 = vadd.f32 %v1100, 1.0
    %v1102 = vrcp.pop %v1101
    %v1103 = vmul.f32 %v1101, %v1102
    %v1104 = vsub.f32 1.0, %v1103
    %v1105 = vmul.f32 %v1102, %v1104
    %v1106 = vadd.f32 %v1102, %v1105
    %vm1107 = vweird.f32 %v1101
    %vm1108 = vweird.f32 %v1102
    %vm1109 = vmor %vm1107, %vm1108
    %v1110 = vsel %vm1109, %v1102, %v1106
    %v1111 = vand.u32 2147483647, %v1101
    %vm1112 = vcmp.eq.f32.partialorder %v1111, 8.507059e+37
    %v1113 = vand.u32 %v1101, 2147483648
    %v1114 = vor.u32 1.1754944e-38, %v1113
    %v1115 = vsel %vm1112, %v1114, %v1110
    %v1116 = vmul.f32 1.0, %v1115
    %1117 = vmatpush.msra.mxu0 0.0
    %1118 = vmatpush.msra.mxu0 0.0
    %1119 = vmatpush.msra.mxu0 0.0
    %1120 = vmatpush.msra.mxu0 0.0
    %1121 = vmatpush.msra.mxu0 0.0
    %1122 = vmatpush.msra.mxu0 0.0
    %1123 = vmatpush.msra.mxu0 0.0
    %1124 = vmatpush.msra.mxu0 0.0
    %1125 = vmatpush.msra.mxu0 0.0
    %1126 = vmatpush.msra.mxu0 0.0
    %1127 = vmatpush.msra.mxu0 0.0
    %1128 = vmatpush.msra.mxu0 0.0
    %1129 = vmatpush.msra.mxu0 0.0
    %1130 = vmatpush.msra.mxu0 0.0
    %1131 = vmatpush.msra.mxu0 %v361
    %1132 = vmatpush.msra.mxu0 %v360
    %1133 = vmatmul.f32.gmra.mxu0 %v1035
    %v1134 = vpop.f32.mrf.mxu0
    %v1135 = vadd.f32 %v449, %v1134
    %1136 = vdwg.mxu0
    %v1137 = vmul.f32 %v1076, %v1135
    %v1138 = vadd.f32 %v349, %v1137
    %v1139 = vtanh.pop %v1138
    %v1140 = vsub.f32 1.0, %v1116
    %v1141 = vmul.f32 %v1140, %v1139
    %v1142 = vmul.f32 %v1116, %v1032
    %v1143 = vadd.f32 %v1141, %v1142
    %1144 = vst.msk [vmem:[#allocation2 + $0x30] sm:$0xff] %vm364, %v1143
    %v1146 = vsel %vm364, %v1143, 0
    %1148 = vmatpush.msra.mxu0 0.0
    %1149 = vmatpush.msra.mxu0 0.0
    %1150 = vmatpush.msra.mxu0 0.0
    %1151 = vmatpush.msra.mxu0 0.0
    %1152 = vmatpush.msra.mxu0 0.0
    %1153 = vmatpush.msra.mxu0 0.0
    %1154 = vmatpush.msra.mxu0 0.0
    %1155 = vmatpush.msra.mxu0 0.0
    %1156 = vmatpush.msra.mxu0 0.0
    %1157 = vmatpush.msra.mxu0 0.0
    %1158 = vmatpush.msra.mxu0 0.0
    %1159 = vmatpush.msra.mxu0 0.0
    %1160 = vmatpush.msra.mxu0 0.0
    %1161 = vmatpush.msra.mxu0 0.0
    %1162 = vmatpush.msra.mxu0 %v355
    %1163 = vmatpush.msra.mxu0 %v354
    %1164 = vmatmul.f32.gmra.mxu0 %v1146
    %v1165 = vpop.f32.mrf.mxu0
    %v1166 = vadd.f32 0.0, %v1165
    %1167 = vdwg.mxu0
    %v1168 = vadd.f32 %v256, %v1166
    %v1169 = vxor.u32 %v1168, 2147483648
    %v1170 = vmul.f32 %v1169, 1.442695
    %v1171 = vpow.pop %v1170
    %v1172 = vadd.f32 %v1171, 1.0
    %v1173 = vrcp.pop %v1172
    %v1174 = vmul.f32 %v1172, %v1173
    %v1175 = vsub.f32 1.0, %v1174
    %v1176 = vmul.f32 %v1173, %v1175
    %v1177 = vadd.f32 %v1173, %v1176
    %vm1178 = vweird.f32 %v1172
    %vm1179 = vweird.f32 %v1173
    %vm1180 = vmor %vm1178, %vm1179
    %v1181 = vsel %vm1180, %v1173, %v1177
    %v1182 = vand.u32 2147483647, %v1172
    %vm1183 = vcmp.eq.f32.partialorder %v1182, 8.507059e+37
    %v1184 = vand.u32 %v1172, 2147483648
    %v1185 = vor.u32 1.1754944e-38, %v1184
    %v1186 = vsel %vm1183, %v1185, %v1181
    %v1187 = vmul.f32 1.0, %v1186
    %1188 = vmatpush.msra.mxu0 0.0
    %1189 = vmatpush.msra.mxu0 0.0
    %1190 = vmatpush.msra.mxu0 0.0
    %1191 = vmatpush.msra.mxu0 0.0
    %1192 = vmatpush.msra.mxu0 0.0
    %1193 = vmatpush.msra.mxu0 0.0
    %1194 = vmatpush.msra.mxu0 0.0
    %1195 = vmatpush.msra.mxu0 0.0
    %1196 = vmatpush.msra.mxu0 0.0
    %1197 = vmatpush.msra.mxu0 0.0
    %1198 = vmatpush.msra.mxu0 0.0
    %1199 = vmatpush.msra.mxu0 0.0
    %1200 = vmatpush.msra.mxu0 0.0
    %1201 = vmatpush.msra.mxu0 0.0
    %1202 = vmatpush.msra.mxu0 %v358
    %1203 = vmatpush.msra.mxu0 %v357
    %1204 = vmatmul.f32.gmra.mxu0 %v1146
    %v1205 = vpop.f32.mrf.mxu0
    %v1206 = vadd.f32 0.0, %v1205
    %1207 = vdwg.mxu0
    %v1208 = vadd.f32 %v304, %v1206
    %v1209 = vxor.u32 %v1208, 2147483648
    %v1210 = vmul.f32 %v1209, 1.442695
    %v1211 = vpow.pop %v1210
    %v1212 = vadd.f32 %v1211, 1.0
    %v1213 = vrcp.pop %v1212
    %v1214 = vmul.f32 %v1212, %v1213
    %v1215 = vsub.f32 1.0, %v1214
    %v1216 = vmul.f32 %v1213, %v1215
    %v1217 = vadd.f32 %v1213, %v1216
    %vm1218 = vweird.f32 %v1212
    %vm1219 = vweird.f32 %v1213
    %vm1220 = vmor %vm1218, %vm1219
    %v1221 = vsel %vm1220, %v1213, %v1217
    %v1222 = vand.u32 2147483647, %v1212
    %vm1223 = vcmp.eq.f32.partialorder %v1222, 8.507059e+37
    %v1224 = vand.u32 %v1212, 2147483648
    %v1225 = vor.u32 1.1754944e-38, %v1224
    %v1226 = vsel %vm1223, %v1225, %v1221
    %v1227 = vmul.f32 1.0, %v1226
    %1228 = vmatpush.msra.mxu0 0.0
    %1229 = vmatpush.msra.mxu0 0.0
    %1230 = vmatpush.msra.mxu0 0.0
    %1231 = vmatpush.msra.mxu0 0.0
    %1232 = vmatpush.msra.mxu0 0.0
    %1233 = vmatpush.msra.mxu0 0.0
    %1234 = vmatpush.msra.mxu0 0.0
    %1235 = vmatpush.msra.mxu0 0.0
    %1236 = vmatpush.msra.mxu0 0.0
    %1237 = vmatpush.msra.mxu0 0.0
    %1238 = vmatpush.msra.mxu0 0.0
    %1239 = vmatpush.msra.mxu0 0.0
    %1240 = vmatpush.msra.mxu0 0.0
    %1241 = vmatpush.msra.mxu0 0.0
    %1242 = vmatpush.msra.mxu0 %v361
    %1243 = vmatpush.msra.mxu0 %v360
    %1244 = vmatmul.f32.gmra.mxu0 %v1146
    %v1245 = vpop.f32.mrf.mxu0
    %v1246 = vadd.f32 %v449, %v1245
    %1247 = vdwg.mxu0
    %v1248 = vmul.f32 %v1187, %v1246
    %v1249 = vadd.f32 %v352, %v1248
    %v1250 = vtanh.pop %v1249
    %v1251 = vsub.f32 1.0, %v1227
    %v1252 = vmul.f32 %v1251, %v1250
    %v1253 = vmul.f32 %v1227, %v1143
    %v1254 = vadd.f32 %v1252, %v1253
    %1255 = vst.msk [vmem:[#allocation2 + $0x38] sm:$0xff] %vm364, %v1254
    %v1256 = vld [vmem:[#allocation2] sm:$0xff]
    %v1257 = vld [vmem:[#allocation2 + $0x8] sm:$0xff]
    %v1258 = vld [vmem:[#allocation2 + $0x10] sm:$0xff]
    %v1259 = vld [vmem:[#allocation2 + $0x18] sm:$0xff]
    %v1260 = vld [vmem:[#allocation2 + $0x20] sm:$0xff]
    %v1261 = vld [vmem:[#allocation2 + $0x28] sm:$0xff]
    %v1262 = vld [vmem:[#allocation2 + $0x30] sm:$0xff]
    %v1263 = vld [vmem:[#allocation2 + $0x38] sm:$0xff]
    %v1264 = vld [vmem:[%s5] sm:$0xff]
    %v1265 = vld [vmem:[%s5 + $0x8] sm:$0xff]
    %v1266 = vld [vmem:[#allocation8] sm:$0x1]
    %v1268 = vperm.slane %v1266, 0
    %v1271 = vsel %vm364, %v1256, 0
    %v1274 = vsel %vm364, %v1257, 0
    %v1277 = vsel %vm364, %v1258, 0
    %v1280 = vsel %vm364, %v1259, 0
    %v1283 = vsel %vm364, %v1260, 0
    %v1286 = vsel %vm364, %v1261, 0
    %v1289 = vsel %vm364, %v1262, 0
    %v1292 = vsel %vm364, %v1263, 0
    %1294 = vmatpush.msra.mxu0 0.0
    %1295 = vmatpush.msra.mxu0 0.0
    %1296 = vmatpush.msra.mxu0 0.0
    %1297 = vmatpush.msra.mxu0 0.0
    %1298 = vmatpush.msra.mxu0 0.0
    %1299 = vmatpush.msra.mxu0 0.0
    %1300 = vmatpush.msra.mxu0 0.0
    %1301 = vmatpush.msra.mxu0 0.0
    %1302 = vmatpush.msra.mxu0 0.0
    %1303 = vmatpush.msra.mxu0 0.0
    %1304 = vmatpush.msra.mxu0 0.0
    %1305 = vmatpush.msra.mxu0 0.0
    %1306 = vmatpush.msra.mxu0 0.0
    %1307 = vmatpush.msra.mxu0 0.0
    %1308 = vmatpush.msra.mxu0 %v1265
    %1309 = vmatpush.msra.mxu0 %v1264
    %1310 = vmatmul.f32.gmra.mxu0 %v1271
    %v1311 = vpop.f32.mrf.mxu0
    %v1312 = vadd.f32 %v1268, %v1311
    %1313 = vmatmul.f32.gmra.mxu0 %v1274
    %v1314 = vpop.f32.mrf.mxu0
    %v1315 = vadd.f32 %v1268, %v1314
    %1316 = vmatmul.f32.gmra.mxu0 %v1277
    %v1317 = vpop.f32.mrf.mxu0
    %v1318 = vadd.f32 %v1268, %v1317
    %1319 = vmatmul.f32.gmra.mxu0 %v1280
    %v1320 = vpop.f32.mrf.mxu0
    %v1321 = vadd.f32 %v1268, %v1320
    %1322 = vmatmul.f32.gmra.mxu0 %v1283
    %v1323 = vpop.f32.mrf.mxu0
    %v1324 = vadd.f32 %v1268, %v1323
    %1325 = vmatmul.f32.gmra.mxu0 %v1286
    %v1326 = vpop.f32.mrf.mxu0
    %v1327 = vadd.f32 %v1268, %v1326
    %1328 = vmatmul.f32.gmra.mxu0 %v1289
    %v1329 = vpop.f32.mrf.mxu0
    %v1330 = vadd.f32 %v1268, %v1329
    %1331 = vmatmul.f32.gmra.mxu0 %v1292
    %v1332 = vpop.f32.mrf.mxu0
    %v1333 = vadd.f32 %v1268, %v1332
    %1334 = vdwg.mxu0
    %s1335 = scalar_lea.vmem %s5, 16
    %v1336 = vld [vmem:[%s1335] sm:$0xff]
    %v1337 = vld [vmem:[%s1335 + $0x8] sm:$0xff]
    %s1338 = scalar_lea.vmem [#allocation8], 1
    %v1339 = vld [vmem:[%s1338] sm:$0x1]
    %v1341 = vperm.slane %v1339, 0
    %1343 = vmatpush.msra.mxu0 0.0
    %1344 = vmatpush.msra.mxu0 0.0
    %1345 = vmatpush.msra.mxu0 0.0
    %1346 = vmatpush.msra.mxu0 0.0
    %1347 = vmatpush.msra.mxu0 0.0
    %1348 = vmatpush.msra.mxu0 0.0
    %1349 = vmatpush.msra.mxu0 0.0
    %1350 = vmatpush.msra.mxu0 0.0
    %1351 = vmatpush.msra.mxu0 0.0
    %1352 = vmatpush.msra.mxu0 0.0
    %1353 = vmatpush.msra.mxu0 0.0
    %1354 = vmatpush.msra.mxu0 0.0
    %1355 = vmatpush.msra.mxu0 0.0
    %1356 = vmatpush.msra.mxu0 0.0
    %1357 = vmatpush.msra.mxu0 %v1337
    %1358 = vmatpush.msra.mxu0 %v1336
    %1359 = vmatmul.f32.gmra.mxu0 %v1271
    %v1360 = vpop.f32.mrf.mxu0
    %v1361 = vadd.f32 %v1341, %v1360
    %1362 = vmatmul.f32.gmra.mxu0 %v1274
    %v1363 = vpop.f32.mrf.mxu0
    %v1364 = vadd.f32 %v1341, %v1363
    %1365 = vmatmul.f32.gmra.mxu0 %v1277
    %v1366 = vpop.f32.mrf.mxu0
    %v1367 = vadd.f32 %v1341, %v1366
    %1368 = vmatmul.f32.gmra.mxu0 %v1280
    %v1369 = vpop.f32.mrf.mxu0
    %v1370 = vadd.f32 %v1341, %v1369
    %1371 = vmatmul.f32.gmra.mxu0 %v1283
    %v1372 = vpop.f32.mrf.mxu0
    %v1373 = vadd.f32 %v1341, %v1372
    %1374 = vmatmul.f32.gmra.mxu0 %v1286
    %v1375 = vpop.f32.mrf.mxu0
    %v1376 = vadd.f32 %v1341, %v1375
    %1377 = vmatmul.f32.gmra.mxu0 %v1289
    %v1378 = vpop.f32.mrf.mxu0
    %v1379 = vadd.f32 %v1341, %v1378
    %1380 = vmatmul.f32.gmra.mxu0 %v1292
    %v1381 = vpop.f32.mrf.mxu0
    %v1382 = vadd.f32 %v1341, %v1381
    %1383 = vdwg.mxu0
    %s1384 = scalar_lea.vmem %s5, 32
    %v1385 = vld [vmem:[%s1384] sm:$0xff]
    %v1386 = vld [vmem:[%s1384 + $0x8] sm:$0xff]
    %s1387 = scalar_lea.vmem [#allocation8], 2
    %v1388 = vld [vmem:[%s1387] sm:$0x1]
    %v1390 = vperm.slane %v1388, 0
    %1392 = vmatpush.msra.mxu0 0.0
    %1393 = vmatpush.msra.mxu0 0.0
    %1394 = vmatpush.msra.mxu0 0.0
    %1395 = vmatpush.msra.mxu0 0.0
    %1396 = vmatpush.msra.mxu0 0.0
    %1397 = vmatpush.msra.mxu0 0.0
    %1398 = vmatpush.msra.mxu0 0.0
    %1399 = vmatpush.msra.mxu0 0.0
    %1400 = vmatpush.msra.mxu0 0.0
    %1401 = vmatpush.msra.mxu0 0.0
    %1402 = vmatpush.msra.mxu0 0.0
    %1403 = vmatpush.msra.mxu0 0.0
    %1404 = vmatpush.msra.mxu0 0.0
    %1405 = vmatpush.msra.mxu0 0.0
    %1406 = vmatpush.msra.mxu0 %v1386
    %1407 = vmatpush.msra.mxu0 %v1385
    %1408 = vmatmul.f32.gmra.mxu0 %v1271
    %v1409 = vpop.f32.mrf.mxu0
    %v1410 = vadd.f32 %v1390, %v1409
    %1411 = vmatmul.f32.gmra.mxu0 %v1274
    %v1412 = vpop.f32.mrf.mxu0
    %v1413 = vadd.f32 %v1390, %v1412
    %1414 = vmatmul.f32.gmra.mxu0 %v1277
    %v1415 = vpop.f32.mrf.mxu0
    %v1416 = vadd.f32 %v1390, %v1415
    %1417 = vmatmul.f32.gmra.mxu0 %v1280
    %v1418 = vpop.f32.mrf.mxu0
    %v1419 = vadd.f32 %v1390, %v1418
    %1420 = vmatmul.f32.gmra.mxu0 %v1283
    %v1421 = vpop.f32.mrf.mxu0
    %v1422 = vadd.f32 %v1390, %v1421
    %1423 = vmatmul.f32.gmra.mxu0 %v1286
    %v1424 = vpop.f32.mrf.mxu0
    %v1425 = vadd.f32 %v1390, %v1424
    %1426 = vmatmul.f32.gmra.mxu0 %v1289
    %v1427 = vpop.f32.mrf.mxu0
    %v1428 = vadd.f32 %v1390, %v1427
    %1429 = vmatmul.f32.gmra.mxu0 %v1292
    %v1430 = vpop.f32.mrf.mxu0
    %v1431 = vadd.f32 %v1390, %v1430
    %1432 = vdwg.mxu0
    %v1433 = vld [vmem:[#allocation7] sm:$0xff]
    %v1434 = vld [vmem:[#allocation7 + $0x8] sm:$0xff]
    %s1435 = scalar_lea.vmem [#allocation7], 16
    %v1436 = vld [vmem:[%s1435] sm:$0xff]
    %v1437 = vld [vmem:[%s1435 + $0x8] sm:$0xff]
    %s1438 = scalar_lea.vmem [#allocation7], 32
    %v1439 = vld [vmem:[%s1438] sm:$0xff]
    %v1440 = vld [vmem:[%s1438 + $0x8] sm:$0xff]
    %s1441 = scalar_lea.vmem [#allocation8], 3
    %v1442 = vld [vmem:[%s1441] sm:$0x1]
    %1443 = vmatpush.msra.mxu0 0.0
    %1444 = vmatpush.msra.mxu0 0.0
    %1445 = vmatpush.msra.mxu0 0.0
    %1446 = vmatpush.msra.mxu0 0.0
    %1447 = vmatpush.msra.mxu0 0.0
    %1448 = vmatpush.msra.mxu0 0.0
    %1449 = vmatpush.msra.mxu0 0.0
    %1450 = vmatpush.msra.mxu0 0.0
    %1451 = vmatpush.msra.mxu0 0.0
    %1452 = vmatpush.msra.mxu0 0.0
    %1453 = vmatpush.msra.mxu0 0.0
    %1454 = vmatpush.msra.mxu0 0.0
    %1455 = vmatpush.msra.mxu0 0.0
    %1456 = vmatpush.msra.mxu0 0.0
    %1457 = vmatpush.msra.mxu0 %v1434
    %1458 = vmatpush.msra.mxu0 %v1433
    %1459 = vmatmul.f32.gmra.mxu0 %v366
    %v1460 = vpop.f32.mrf.mxu0
    %v1461 = vadd.f32 0.0, %v1460
    %1462 = vdwg.mxu0
    %v1463 = vadd.f32 %v1312, %v1461
    %v1464 = vxor.u32 %v1463, 2147483648
    %v1465 = vmul.f32 %v1464, 1.442695
    %v1466 = vpow.pop %v1465
    %v1467 = vadd.f32 %v1466, 1.0
    %v1468 = vrcp.pop %v1467
    %v1469 = vmul.f32 %v1467, %v1468
    %v1470 = vsub.f32 1.0, %v1469
    %v1471 = vmul.f32 %v1468, %v1470
    %v1472 = vadd.f32 %v1468, %v1471
    %vm1473 = vweird.f32 %v1467
    %vm1474 = vweird.f32 %v1468
    %vm1475 = vmor %vm1473, %vm1474
    %v1476 = vsel %vm1475, %v1468, %v1472
    %v1477 = vand.u32 2147483647, %v1467
    %vm1478 = vcmp.eq.f32.partialorder %v1477, 8.507059e+37
    %v1479 = vand.u32 %v1467, 2147483648
    %v1480 = vor.u32 1.1754944e-38, %v1479
    %v1481 = vsel %vm1478, %v1480, %v1476
    %v1482 = vmul.f32 1.0, %v1481
    %1483 = vmatpush.msra.mxu0 0.0
    %1484 = vmatpush.msra.mxu0 0.0
    %1485 = vmatpush.msra.mxu0 0.0
    %1486 = vmatpush.msra.mxu0 0.0
    %1487 = vmatpush.msra.mxu0 0.0
    %1488 = vmatpush.msra.mxu0 0.0
    %1489 = vmatpush.msra.mxu0 0.0
    %1490 = vmatpush.msra.mxu0 0.0
    %1491 = vmatpush.msra.mxu0 0.0
    %1492 = vmatpush.msra.mxu0 0.0
    %1493 = vmatpush.msra.mxu0 0.0
    %1494 = vmatpush.msra.mxu0 0.0
    %1495 = vmatpush.msra.mxu0 0.0
    %1496 = vmatpush.msra.mxu0 0.0
    %1497 = vmatpush.msra.mxu0 %v1437
    %1498 = vmatpush.msra.mxu0 %v1436
    %1499 = vmatmul.f32.gmra.mxu0 %v366
    %v1500 = vpop.f32.mrf.mxu0
    %v1501 = vadd.f32 0.0, %v1500
    %1502 = vdwg.mxu0
    %v1503 = vadd.f32 %v1361, %v1501
    %v1504 = vxor.u32 %v1503, 2147483648
    %v1505 = vmul.f32 %v1504, 1.442695
    %v1506 = vpow.pop %v1505
    %v1507 = vadd.f32 %v1506, 1.0
    %v1508 = vrcp.pop %v1507
    %v1509 = vmul.f32 %v1507, %v1508
    %v1510 = vsub.f32 1.0, %v1509
    %v1511 = vmul.f32 %v1508, %v1510
    %v1512 = vadd.f32 %v1508, %v1511
    %vm1513 = vweird.f32 %v1507
    %vm1514 = vweird.f32 %v1508
    %vm1515 = vmor %vm1513, %vm1514
    %v1516 = vsel %vm1515, %v1508, %v1512
    %v1517 = vand.u32 2147483647, %v1507
    %vm1518 = vcmp.eq.f32.partialorder %v1517, 8.507059e+37
    %v1519 = vand.u32 %v1507, 2147483648
    %v1520 = vor.u32 1.1754944e-38, %v1519
    %v1521 = vsel %vm1518, %v1520, %v1516
    %v1522 = vmul.f32 1.0, %v1521
    %v1524 = vperm.slane %v1442, 0
    %1526 = vmatpush.msra.mxu0 0.0
    %1527 = vmatpush.msra.mxu0 0.0
    %1528 = vmatpush.msra.mxu0 0.0
    %1529 = vmatpush.msra.mxu0 0.0
    %1530 = vmatpush.msra.mxu0 0.0
    %1531 = vmatpush.msra.mxu0 0.0
    %1532 = vmatpush.msra.mxu0 0.0
    %1533 = vmatpush.msra.mxu0 0.0
    %1534 = vmatpush.msra.mxu0 0.0
    %1535 = vmatpush.msra.mxu0 0.0
    %1536 = vmatpush.msra.mxu0 0.0
    %1537 = vmatpush.msra.mxu0 0.0
    %1538 = vmatpush.msra.mxu0 0.0
    %1539 = vmatpush.msra.mxu0 0.0
    %1540 = vmatpush.msra.mxu0 %v1440
    %1541 = vmatpush.msra.mxu0 %v1439
    %1542 = vmatmul.f32.gmra.mxu0 %v366
    %v1543 = vpop.f32.mrf.mxu0
    %v1544 = vadd.f32 %v1524, %v1543
    %1545 = vdwg.mxu0
    %v1546 = vmul.f32 %v1482, %v1544
    %v1547 = vadd.f32 %v1410, %v1546
    %v1548 = vtanh.pop %v1547
    %v1549 = vsub.f32 1.0, %v1522
    %v1550 = vmul.f32 %v1549, %v1548
    %v1551 = vmul.f32 %v1522, 0.0
    %v1552 = vadd.f32 %v1550, %v1551
    %v1554 = vsel %vm364, %v1552, 0
    %1556 = vmatpush.msra.mxu0 0.0
    %1557 = vmatpush.msra.mxu0 0.0
    %1558 = vmatpush.msra.mxu0 0.0
    %1559 = vmatpush.msra.mxu0 0.0
    %1560 = vmatpush.msra.mxu0 0.0
    %1561 = vmatpush.msra.mxu0 0.0
    %1562 = vmatpush.msra.mxu0 0.0
    %1563 = vmatpush.msra.mxu0 0.0
    %1564 = vmatpush.msra.mxu0 0.0
    %1565 = vmatpush.msra.mxu0 0.0
    %1566 = vmatpush.msra.mxu0 0.0
    %1567 = vmatpush.msra.mxu0 0.0
    %1568 = vmatpush.msra.mxu0 0.0
    %1569 = vmatpush.msra.mxu0 0.0
    %1570 = vmatpush.msra.mxu0 %v1434
    %1571 = vmatpush.msra.mxu0 %v1433
    %1572 = vmatmul.f32.gmra.mxu0 %v1554
    %v1573 = vpop.f32.mrf.mxu0
    %v1574 = vadd.f32 0.0, %v1573
    %1575 = vdwg.mxu0
    %v1576 = vadd.f32 %v1315, %v1574
    %v1577 = vxor.u32 %v1576, 2147483648
    %v1578 = vmul.f32 %v1577, 1.442695
    %v1579 = vpow.pop %v1578
    %v1580 = vadd.f32 %v1579, 1.0
    %v1581 = vrcp.pop %v1580
    %v1582 = vmul.f32 %v1580, %v1581
    %v1583 = vsub.f32 1.0, %v1582
    %v1584 = vmul.f32 %v1581, %v1583
    %v1585 = vadd.f32 %v1581, %v1584
    %vm1586 = vweird.f32 %v1580
    %vm1587 = vweird.f32 %v1581
    %vm1588 = vmor %vm1586, %vm1587
    %v1589 = vsel %vm1588, %v1581, %v1585
    %v1590 = vand.u32 2147483647, %v1580
    %vm1591 = vcmp.eq.f32.partialorder %v1590, 8.507059e+37
    %v1592 = vand.u32 %v1580, 2147483648
    %v1593 = vor.u32 1.1754944e-38, %v1592
    %v1594 = vsel %vm1591, %v1593, %v1589
    %v1595 = vmul.f32 1.0, %v1594
    %1596 = vmatpush.msra.mxu0 0.0
    %1597 = vmatpush.msra.mxu0 0.0
    %1598 = vmatpush.msra.mxu0 0.0
    %1599 = vmatpush.msra.mxu0 0.0
    %1600 = vmatpush.msra.mxu0 0.0
    %1601 = vmatpush.msra.mxu0 0.0
    %1602 = vmatpush.msra.mxu0 0.0
    %1603 = vmatpush.msra.mxu0 0.0
    %1604 = vmatpush.msra.mxu0 0.0
    %1605 = vmatpush.msra.mxu0 0.0
    %1606 = vmatpush.msra.mxu0 0.0
    %1607 = vmatpush.msra.mxu0 0.0
    %1608 = vmatpush.msra.mxu0 0.0
    %1609 = vmatpush.msra.mxu0 0.0
    %1610 = vmatpush.msra.mxu0 %v1437
    %1611 = vmatpush.msra.mxu0 %v1436
    %1612 = vmatmul.f32.gmra.mxu0 %v1554
    %v1613 = vpop.f32.mrf.mxu0
    %v1614 = vadd.f32 0.0, %v1613
    %1615 = vdwg.mxu0
    %v1616 = vadd.f32 %v1364, %v1614
    %v1617 = vxor.u32 %v1616, 2147483648
    %v1618 = vmul.f32 %v1617, 1.442695
    %v1619 = vpow.pop %v1618
    %v1620 = vadd.f32 %v1619, 1.0
    %v1621 = vrcp.pop %v1620
    %v1622 = vmul.f32 %v1620, %v1621
    %v1623 = vsub.f32 1.0, %v1622
    %v1624 = vmul.f32 %v1621, %v1623
    %v1625 = vadd.f32 %v1621, %v1624
    %vm1626 = vweird.f32 %v1620
    %vm1627 = vweird.f32 %v1621
    %vm1628 = vmor %vm1626, %vm1627
    %v1629 = vsel %vm1628, %v1621, %v1625
    %v1630 = vand.u32 2147483647, %v1620
    %vm1631 = vcmp.eq.f32.partialorder %v1630, 8.507059e+37
    %v1632 = vand.u32 %v1620, 2147483648
    %v1633 = vor.u32 1.1754944e-38, %v1632
    %v1634 = vsel %vm1631, %v1633, %v1629
    %v1635 = vmul.f32 1.0, %v1634
    %1636 = vmatpush.msra.mxu0 0.0
    %1637 = vmatpush.msra.mxu0 0.0
    %1638 = vmatpush.msra.mxu0 0.0
    %1639 = vmatpush.msra.mxu0 0.0
    %1640 = vmatpush.msra.mxu0 0.0
    %1641 = vmatpush.msra.mxu0 0.0
    %1642 = vmatpush.msra.mxu0 0.0
    %1643 = vmatpush.msra.mxu0 0.0
    %1644 = vmatpush.msra.mxu0 0.0
    %1645 = vmatpush.msra.mxu0 0.0
    %1646 = vmatpush.msra.mxu0 0.0
    %1647 = vmatpush.msra.mxu0 0.0
    %1648 = vmatpush.msra.mxu0 0.0
    %1649 = vmatpush.msra.mxu0 0.0
    %1650 = vmatpush.msra.mxu0 %v1440
    %1651 = vmatpush.msra.mxu0 %v1439
    %1652 = vmatmul.f32.gmra.mxu0 %v1554
    %v1653 = vpop.f32.mrf.mxu0
    %v1654 = vadd.f32 %v1524, %v1653
    %1655 = vdwg.mxu0
    %v1656 = vmul.f32 %v1595, %v1654
    %v1657 = vadd.f32 %v1413, %v1656
    %v1658 = vtanh.pop %v1657
    %v1659 = vsub.f32 1.0, %v1635
    %v1660 = vmul.f32 %v1659, %v1658
    %v1661 = vmul.f32 %v1635, %v1552
    %v1662 = vadd.f32 %v1660, %v1661
    %v1664 = vsel %vm364, %v1662, 0
    %1666 = vmatpush.msra.mxu0 0.0
    %1667 = vmatpush.msra.mxu0 0.0
    %1668 = vmatpush.msra.mxu0 0.0
    %1669 = vmatpush.msra.mxu0 0.0
    %1670 = vmatpush.msra.mxu0 0.0
    %1671 = vmatpush.msra.mxu0 0.0
    %1672 = vmatpush.msra.mxu0 0.0
    %1673 = vmatpush.msra.mxu0 0.0
    %1674 = vmatpush.msra.mxu0 0.0
    %1675 = vmatpush.msra.mxu0 0.0
    %1676 = vmatpush.msra.mxu0 0.0
    %1677 = vmatpush.msra.mxu0 0.0
    %1678 = vmatpush.msra.mxu0 0.0
    %1679 = vmatpush.msra.mxu0 0.0
    %1680 = vmatpush.msra.mxu0 %v1434
    %1681 = vmatpush.msra.mxu0 %v1433
    %1682 = vmatmul.f32.gmra.mxu0 %v1664
    %v1683 = vpop.f32.mrf.mxu0
    %v1684 = vadd.f32 0.0, %v1683
    %1685 = vdwg.mxu0
    %v1686 = vadd.f32 %v1318, %v1684
    %v1687 = vxor.u32 %v1686, 2147483648
    %v1688 = vmul.f32 %v1687, 1.442695
    %v1689 = vpow.pop %v1688
    %v1690 = vadd.f32 %v1689, 1.0
    %v1691 = vrcp.pop %v1690
    %v1692 = vmul.f32 %v1690, %v1691
    %v1693 = vsub.f32 1.0, %v1692
    %v1694 = vmul.f32 %v1691, %v1693
    %v1695 = vadd.f32 %v1691, %v1694
    %vm1696 = vweird.f32 %v1690
    %vm1697 = vweird.f32 %v1691
    %vm1698 = vmor %vm1696, %vm1697
    %v1699 = vsel %vm1698, %v1691, %v1695
    %v1700 = vand.u32 2147483647, %v1690
    %vm1701 = vcmp.eq.f32.partialorder %v1700, 8.507059e+37
    %v1702 = vand.u32 %v1690, 2147483648
    %v1703 = vor.u32 1.1754944e-38, %v1702
    %v1704 = vsel %vm1701, %v1703, %v1699
    %v1705 = vmul.f32 1.0, %v1704
    %1706 = vmatpush.msra.mxu0 0.0
    %1707 = vmatpush.msra.mxu0 0.0
    %1708 = vmatpush.msra.mxu0 0.0
    %1709 = vmatpush.msra.mxu0 0.0
    %1710 = vmatpush.msra.mxu0 0.0
    %1711 = vmatpush.msra.mxu0 0.0
    %1712 = vmatpush.msra.mxu0 0.0
    %1713 = vmatpush.msra.mxu0 0.0
    %1714 = vmatpush.msra.mxu0 0.0
    %1715 = vmatpush.msra.mxu0 0.0
    %1716 = vmatpush.msra.mxu0 0.0
    %1717 = vmatpush.msra.mxu0 0.0
    %1718 = vmatpush.msra.mxu0 0.0
    %1719 = vmatpush.msra.mxu0 0.0
    %1720 = vmatpush.msra.mxu0 %v1437
    %1721 = vmatpush.msra.mxu0 %v1436
    %1722 = vmatmul.f32.gmra.mxu0 %v1664
    %v1723 = vpop.f32.mrf.mxu0
    %v1724 = vadd.f32 0.0, %v1723
    %1725 = vdwg.mxu0
    %v1726 = vadd.f32 %v1367, %v1724
    %v1727 = vxor.u32 %v1726, 2147483648
    %v1728 = vmul.f32 %v1727, 1.442695
    %v1729 = vpow.pop %v1728
    %v1730 = vadd.f32 %v1729, 1.0
    %v1731 = vrcp.pop %v1730
    %v1732 = vmul.f32 %v1730, %v1731
    %v1733 = vsub.f32 1.0, %v1732
    %v1734 = vmul.f32 %v1731, %v1733
    %v1735 = vadd.f32 %v1731, %v1734
    %vm1736 = vweird.f32 %v1730
    %vm1737 = vweird.f32 %v1731
    %vm1738 = vmor %vm1736, %vm1737
    %v1739 = vsel %vm1738, %v1731, %v1735
    %v1740 = vand.u32 2147483647, %v1730
    %vm1741 = vcmp.eq.f32.partialorder %v1740, 8.507059e+37
    %v1742 = vand.u32 %v1730, 2147483648
    %v1743 = vor.u32 1.1754944e-38, %v1742
    %v1744 = vsel %vm1741, %v1743, %v1739
    %v1745 = vmul.f32 1.0, %v1744
    %1746 = vmatpush.msra.mxu0 0.0
    %1747 = vmatpush.msra.mxu0 0.0
    %1748 = vmatpush.msra.mxu0 0.0
    %1749 = vmatpush.msra.mxu0 0.0
    %1750 = vmatpush.msra.mxu0 0.0
    %1751 = vmatpush.msra.mxu0 0.0
    %1752 = vmatpush.msra.mxu0 0.0
    %1753 = vmatpush.msra.mxu0 0.0
    %1754 = vmatpush.msra.mxu0 0.0
    %1755 = vmatpush.msra.mxu0 0.0
    %1756 = vmatpush.msra.mxu0 0.0
    %1757 = vmatpush.msra.mxu0 0.0
    %1758 = vmatpush.msra.mxu0 0.0
    %1759 = vmatpush.msra.mxu0 0.0
    %1760 = vmatpush.msra.mxu0 %v1440
    %1761 = vmatpush.msra.mxu0 %v1439
    %1762 = vmatmul.f32.gmra.mxu0 %v1664
    %v1763 = vpop.f32.mrf.mxu0
    %v1764 = vadd.f32 %v1524, %v1763
    %1765 = vdwg.mxu0
    %v1766 = vmul.f32 %v1705, %v1764
    %v1767 = vadd.f32 %v1416, %v1766
    %v1768 = vtanh.pop %v1767
    %v1769 = vsub.f32 1.0, %v1745
    %v1770 = vmul.f32 %v1769, %v1768
    %v1771 = vmul.f32 %v1745, %v1662
    %v1772 = vadd.f32 %v1770, %v1771
    %v1774 = vsel %vm364, %v1772, 0
    %1776 = vmatpush.msra.mxu0 0.0
    %1777 = vmatpush.msra.mxu0 0.0
    %1778 = vmatpush.msra.mxu0 0.0
    %1779 = vmatpush.msra.mxu0 0.0
    %1780 = vmatpush.msra.mxu0 0.0
    %1781 = vmatpush.msra.mxu0 0.0
    %1782 = vmatpush.msra.mxu0 0.0
    %1783 = vmatpush.msra.mxu0 0.0
    %1784 = vmatpush.msra.mxu0 0.0
    %1785 = vmatpush.msra.mxu0 0.0
    %1786 = vmatpush.msra.mxu0 0.0
    %1787 = vmatpush.msra.mxu0 0.0
    %1788 = vmatpush.msra.mxu0 0.0
    %1789 = vmatpush.msra.mxu0 0.0
    %1790 = vmatpush.msra.mxu0 %v1434
    %1791 = vmatpush.msra.mxu0 %v1433
    %1792 = vmatmul.f32.gmra.mxu0 %v1774
    %v1793 = vpop.f32.mrf.mxu0
    %v1794 = vadd.f32 0.0, %v1793
    %1795 = vdwg.mxu0
    %v1796 = vadd.f32 %v1321, %v1794
    %v1797 = vxor.u32 %v1796, 2147483648
    %v1798 = vmul.f32 %v1797, 1.442695
    %v1799 = vpow.pop %v1798
    %v1800 = vadd.f32 %v1799, 1.0
    %v1801 = vrcp.pop %v1800
    %v1802 = vmul.f32 %v1800, %v1801
    %v1803 = vsub.f32 1.0, %v1802
    %v1804 = vmul.f32 %v1801, %v1803
    %v1805 = vadd.f32 %v1801, %v1804
    %vm1806 = vweird.f32 %v1800
    %vm1807 = vweird.f32 %v1801
    %vm1808 = vmor %vm1806, %vm1807
    %v1809 = vsel %vm1808, %v1801, %v1805
    %v1810 = vand.u32 2147483647, %v1800
    %vm1811 = vcmp.eq.f32.partialorder %v1810, 8.507059e+37
    %v1812 = vand.u32 %v1800, 2147483648
    %v1813 = vor.u32 1.1754944e-38, %v1812
    %v1814 = vsel %vm1811, %v1813, %v1809
    %v1815 = vmul.f32 1.0, %v1814
    %1816 = vmatpush.msra.mxu0 0.0
    %1817 = vmatpush.msra.mxu0 0.0
    %1818 = vmatpush.msra.mxu0 0.0
    %1819 = vmatpush.msra.mxu0 0.0
    %1820 = vmatpush.msra.mxu0 0.0
    %1821 = vmatpush.msra.mxu0 0.0
    %1822 = vmatpush.msra.mxu0 0.0
    %1823 = vmatpush.msra.mxu0 0.0
    %1824 = vmatpush.msra.mxu0 0.0
    %1825 = vmatpush.msra.mxu0 0.0
    %1826 = vmatpush.msra.mxu0 0.0
    %1827 = vmatpush.msra.mxu0 0.0
    %1828 = vmatpush.msra.mxu0 0.0
    %1829 = vmatpush.msra.mxu0 0.0
    %1830 = vmatpush.msra.mxu0 %v1437
    %1831 = vmatpush.msra.mxu0 %v1436
    %1832 = vmatmul.f32.gmra.mxu0 %v1774
    %v1833 = vpop.f32.mrf.mxu0
    %v1834 = vadd.f32 0.0, %v1833
    %1835 = vdwg.mxu0
    %v1836 = vadd.f32 %v1370, %v1834
    %v1837 = vxor.u32 %v1836, 2147483648
    %v1838 = vmul.f32 %v1837, 1.442695
    %v1839 = vpow.pop %v1838
    %v1840 = vadd.f32 %v1839, 1.0
    %v1841 = vrcp.pop %v1840
    %v1842 = vmul.f32 %v1840, %v1841
    %v1843 = vsub.f32 1.0, %v1842
    %v1844 = vmul.f32 %v1841, %v1843
    %v1845 = vadd.f32 %v1841, %v1844
    %vm1846 = vweird.f32 %v1840
    %vm1847 = vweird.f32 %v1841
    %vm1848 = vmor %vm1846, %vm1847
    %v1849 = vsel %vm1848, %v1841, %v1845
    %v1850 = vand.u32 2147483647, %v1840
    %vm1851 = vcmp.eq.f32.partialorder %v1850, 8.507059e+37
    %v1852 = vand.u32 %v1840, 2147483648
    %v1853 = vor.u32 1.1754944e-38, %v1852
    %v1854 = vsel %vm1851, %v1853, %v1849
    %v1855 = vmul.f32 1.0, %v1854
    %1856 = vmatpush.msra.mxu0 0.0
    %1857 = vmatpush.msra.mxu0 0.0
    %1858 = vmatpush.msra.mxu0 0.0
    %1859 = vmatpush.msra.mxu0 0.0
    %1860 = vmatpush.msra.mxu0 0.0
    %1861 = vmatpush.msra.mxu0 0.0
    %1862 = vmatpush.msra.mxu0 0.0
    %1863 = vmatpush.msra.mxu0 0.0
    %1864 = vmatpush.msra.mxu0 0.0
    %1865 = vmatpush.msra.mxu0 0.0
    %1866 = vmatpush.msra.mxu0 0.0
    %1867 = vmatpush.msra.mxu0 0.0
    %1868 = vmatpush.msra.mxu0 0.0
    %1869 = vmatpush.msra.mxu0 0.0
    %1870 = vmatpush.msra.mxu0 %v1440
    %1871 = vmatpush.msra.mxu0 %v1439
    %1872 = vmatmul.f32.gmra.mxu0 %v1774
    %v1873 = vpop.f32.mrf.mxu0
    %v1874 = vadd.f32 %v1524, %v1873
    %1875 = vdwg.mxu0
    %v1876 = vmul.f32 %v1815, %v1874
    %v1877 = vadd.f32 %v1419, %v1876
    %v1878 = vtanh.pop %v1877
    %v1879 = vsub.f32 1.0, %v1855
    %v1880 = vmul.f32 %v1879, %v1878
    %v1881 = vmul.f32 %v1855, %v1772
    %v1882 = vadd.f32 %v1880, %v1881
    %v1884 = vsel %vm364, %v1882, 0
    %1886 = vmatpush.msra.mxu0 0.0
    %1887 = vmatpush.msra.mxu0 0.0
    %1888 = vmatpush.msra.mxu0 0.0
    %1889 = vmatpush.msra.mxu0 0.0
    %1890 = vmatpush.msra.mxu0 0.0
    %1891 = vmatpush.msra.mxu0 0.0
    %1892 = vmatpush.msra.mxu0 0.0
    %1893 = vmatpush.msra.mxu0 0.0
    %1894 = vmatpush.msra.mxu0 0.0
    %1895 = vmatpush.msra.mxu0 0.0
    %1896 = vmatpush.msra.mxu0 0.0
    %1897 = vmatpush.msra.mxu0 0.0
    %1898 = vmatpush.msra.mxu0 0.0
    %1899 = vmatpush.msra.mxu0 0.0
    %1900 = vmatpush.msra.mxu0 %v1434
    %1901 = vmatpush.msra.mxu0 %v1433
    %1902 = vmatmul.f32.gmra.mxu0 %v1884
    %v1903 = vpop.f32.mrf.mxu0
    %v1904 = vadd.f32 0.0, %v1903
    %1905 = vdwg.mxu0
    %v1906 = vadd.f32 %v1324, %v1904
    %v1907 = vxor.u32 %v1906, 2147483648
    %v1908 = vmul.f32 %v1907, 1.442695
    %v1909 = vpow.pop %v1908
    %v1910 = vadd.f32 %v1909, 1.0
    %v1911 = vrcp.pop %v1910
    %v1912 = vmul.f32 %v1910, %v1911
    %v1913 = vsub.f32 1.0, %v1912
    %v1914 = vmul.f32 %v1911, %v1913
    %v1915 = vadd.f32 %v1911, %v1914
    %vm1916 = vweird.f32 %v1910
    %vm1917 = vweird.f32 %v1911
    %vm1918 = vmor %vm1916, %vm1917
    %v1919 = vsel %vm1918, %v1911, %v1915
    %v1920 = vand.u32 2147483647, %v1910
    %vm1921 = vcmp.eq.f32.partialorder %v1920, 8.507059e+37
    %v1922 = vand.u32 %v1910, 2147483648
    %v1923 = vor.u32 1.1754944e-38, %v1922
    %v1924 = vsel %vm1921, %v1923, %v1919
    %v1925 = vmul.f32 1.0, %v1924
    %1926 = vmatpush.msra.mxu0 0.0
    %1927 = vmatpush.msra.mxu0 0.0
    %1928 = vmatpush.msra.mxu0 0.0
    %1929 = vmatpush.msra.mxu0 0.0
    %1930 = vmatpush.msra.mxu0 0.0
    %1931 = vmatpush.msra.mxu0 0.0
    %1932 = vmatpush.msra.mxu0 0.0
    %1933 = vmatpush.msra.mxu0 0.0
    %1934 = vmatpush.msra.mxu0 0.0
    %1935 = vmatpush.msra.mxu0 0.0
    %1936 = vmatpush.msra.mxu0 0.0
    %1937 = vmatpush.msra.mxu0 0.0
    %1938 = vmatpush.msra.mxu0 0.0
    %1939 = vmatpush.msra.mxu0 0.0
    %1940 = vmatpush.msra.mxu0 %v1437
    %1941 = vmatpush.msra.mxu0 %v1436
    %1942 = vmatmul.f32.gmra.mxu0 %v1884
    %v1943 = vpop.f32.mrf.mxu0
    %v1944 = vadd.f32 0.0, %v1943
    %1945 = vdwg.mxu0
    %v1946 = vadd.f32 %v1373, %v1944
    %v1947 = vxor.u32 %v1946, 2147483648
    %v1948 = vmul.f32 %v1947, 1.442695
    %v1949 = vpow.pop %v1948
    %v1950 = vadd.f32 %v1949, 1.0
    %v1951 = vrcp.pop %v1950
    %v1952 = vmul.f32 %v1950, %v1951
    %v1953 = vsub.f32 1.0, %v1952
    %v1954 = vmul.f32 %v1951, %v1953
    %v1955 = vadd.f32 %v1951, %v1954
    %vm1956 = vweird.f32 %v1950
    %vm1957 = vweird.f32 %v1951
    %vm1958 = vmor %vm1956, %vm1957
    %v1959 = vsel %vm1958, %v1951, %v1955
    %v1960 = vand.u32 2147483647, %v1950
    %vm1961 = vcmp.eq.f32.partialorder %v1960, 8.507059e+37
    %v1962 = vand.u32 %v1950, 2147483648
    %v1963 = vor.u32 1.1754944e-38, %v1962
    %v1964 = vsel %vm1961, %v1963, %v1959
    %v1965 = vmul.f32 1.0, %v1964
    %1966 = vmatpush.msra.mxu0 0.0
    %1967 = vmatpush.msra.mxu0 0.0
    %1968 = vmatpush.msra.mxu0 0.0
    %1969 = vmatpush.msra.mxu0 0.0
    %1970 = vmatpush.msra.mxu0 0.0
    %1971 = vmatpush.msra.mxu0 0.0
    %1972 = vmatpush.msra.mxu0 0.0
    %1973 = vmatpush.msra.mxu0 0.0
    %1974 = vmatpush.msra.mxu0 0.0
    %1975 = vmatpush.msra.mxu0 0.0
    %1976 = vmatpush.msra.mxu0 0.0
    %1977 = vmatpush.msra.mxu0 0.0
    %1978 = vmatpush.msra.mxu0 0.0
    %1979 = vmatpush.msra.mxu0 0.0
    %1980 = vmatpush.msra.mxu0 %v1440
    %1981 = vmatpush.msra.mxu0 %v1439
    %1982 = vmatmul.f32.gmra.mxu0 %v1884
    %v1983 = vpop.f32.mrf.mxu0
    %v1984 = vadd.f32 %v1524, %v1983
    %1985 = vdwg.mxu0
    %v1986 = vmul.f32 %v1925, %v1984
    %v1987 = vadd.f32 %v1422, %v1986
    %v1988 = vtanh.pop %v1987
    %v1989 = vsub.f32 1.0, %v1965
    %v1990 = vmul.f32 %v1989, %v1988
    %v1991 = vmul.f32 %v1965, %v1882
    %v1992 = vadd.f32 %v1990, %v1991
    %v1994 = vsel %vm364, %v1992, 0
    %1996 = vmatpush.msra.mxu0 0.0
    %1997 = vmatpush.msra.mxu0 0.0
    %1998 = vmatpush.msra.mxu0 0.0
    %1999 = vmatpush.msra.mxu0 0.0
    %2000 = vmatpush.msra.mxu0 0.0
    %2001 = vmatpush.msra.mxu0 0.0
    %2002 = vmatpush.msra.mxu0 0.0
    %2003 = vmatpush.msra.mxu0 0.0
    %2004 = vmatpush.msra.mxu0 0.0
    %2005 = vmatpush.msra.mxu0 0.0
    %2006 = vmatpush.msra.mxu0 0.0
    %2007 = vmatpush.msra.mxu0 0.0
    %2008 = vmatpush.msra.mxu0 0.0
    %2009 = vmatpush.msra.mxu0 0.0
    %2010 = vmatpush.msra.mxu0 %v1434
    %2011 = vmatpush.msra.mxu0 %v1433
    %2012 = vmatmul.f32.gmra.mxu0 %v1994
    %v2013 = vpop.f32.mrf.mxu0
    %v2014 = vadd.f32 0.0, %v2013
    %2015 = vdwg.mxu0
    %v2016 = vadd.f32 %v1327, %v2014
    %v2017 = vxor.u32 %v2016, 2147483648
    %v2018 = vmul.f32 %v2017, 1.442695
    %v2019 = vpow.pop %v2018
    %v2020 = vadd.f32 %v2019, 1.0
    %v2021 = vrcp.pop %v2020
    %v2022 = vmul.f32 %v2020, %v2021
    %v2023 = vsub.f32 1.0, %v2022
    %v2024 = vmul.f32 %v2021, %v2023
    %v2025 = vadd.f32 %v2021, %v2024
    %vm2026 = vweird.f32 %v2020
    %vm2027 = vweird.f32 %v2021
    %vm2028 = vmor %vm2026, %vm2027
    %v2029 = vsel %vm2028, %v2021, %v2025
    %v2030 = vand.u32 2147483647, %v2020
    %vm2031 = vcmp.eq.f32.partialorder %v2030, 8.507059e+37
    %v2032 = vand.u32 %v2020, 2147483648
    %v2033 = vor.u32 1.1754944e-38, %v2032
    %v2034 = vsel %vm2031, %v2033, %v2029
    %v2035 = vmul.f32 1.0, %v2034
    %2036 = vmatpush.msra.mxu0 0.0
    %2037 = vmatpush.msra.mxu0 0.0
    %2038 = vmatpush.msra.mxu0 0.0
    %2039 = vmatpush.msra.mxu0 0.0
    %2040 = vmatpush.msra.mxu0 0.0
    %2041 = vmatpush.msra.mxu0 0.0
    %2042 = vmatpush.msra.mxu0 0.0
    %2043 = vmatpush.msra.mxu0 0.0
    %2044 = vmatpush.msra.mxu0 0.0
    %2045 = vmatpush.msra.mxu0 0.0
    %2046 = vmatpush.msra.mxu0 0.0
    %2047 = vmatpush.msra.mxu0 0.0
    %2048 = vmatpush.msra.mxu0 0.0
    %2049 = vmatpush.msra.mxu0 0.0
    %2050 = vmatpush.msra.mxu0 %v1437
    %2051 = vmatpush.msra.mxu0 %v1436
    %2052 = vmatmul.f32.gmra.mxu0 %v1994
    %v2053 = vpop.f32.mrf.mxu0
    %v2054 = vadd.f32 0.0, %v2053
    %2055 = vdwg.mxu0
    %v2056 = vadd.f32 %v1376, %v2054
    %v2057 = vxor.u32 %v2056, 2147483648
    %v2058 = vmul.f32 %v2057, 1.442695
    %v2059 = vpow.pop %v2058
    %v2060 = vadd.f32 %v2059, 1.0
    %v2061 = vrcp.pop %v2060
    %v2062 = vmul.f32 %v2060, %v2061
    %v2063 = vsub.f32 1.0, %v2062
    %v2064 = vmul.f32 %v2061, %v2063
    %v2065 = vadd.f32 %v2061, %v2064
    %vm2066 = vweird.f32 %v2060
    %vm2067 = vweird.f32 %v2061
    %vm2068 = vmor %vm2066, %vm2067
    %v2069 = vsel %vm2068, %v2061, %v2065
    %v2070 = vand.u32 2147483647, %v2060
    %vm2071 = vcmp.eq.f32.partialorder %v2070, 8.507059e+37
    %v2072 = vand.u32 %v2060, 2147483648
    %v2073 = vor.u32 1.1754944e-38, %v2072
    %v2074 = vsel %vm2071, %v2073, %v2069
    %v2075 = vmul.f32 1.0, %v2074
    %2076 = vmatpush.msra.mxu0 0.0
    %2077 = vmatpush.msra.mxu0 0.0
    %2078 = vmatpush.msra.mxu0 0.0
    %2079 = vmatpush.msra.mxu0 0.0
    %2080 = vmatpush.msra.mxu0 0.0
    %2081 = vmatpush.msra.mxu0 0.0
    %2082 = vmatpush.msra.mxu0 0.0
    %2083 = vmatpush.msra.mxu0 0.0
    %2084 = vmatpush.msra.mxu0 0.0
    %2085 = vmatpush.msra.mxu0 0.0
    %2086 = vmatpush.msra.mxu0 0.0
    %2087 = vmatpush.msra.mxu0 0.0
    %2088 = vmatpush.msra.mxu0 0.0
    %2089 = vmatpush.msra.mxu0 0.0
    %2090 = vmatpush.msra.mxu0 %v1440
    %2091 = vmatpush.msra.mxu0 %v1439
    %2092 = vmatmul.f32.gmra.mxu0 %v1994
    %v2093 = vpop.f32.mrf.mxu0
    %v2094 = vadd.f32 %v1524, %v2093
    %2095 = vdwg.mxu0
    %v2096 = vmul.f32 %v2035, %v2094
    %v2097 = vadd.f32 %v1425, %v2096
    %v2098 = vtanh.pop %v2097
    %v2099 = vsub.f32 1.0, %v2075
    %v2100 = vmul.f32 %v2099, %v2098
    %v2101 = vmul.f32 %v2075, %v1992
    %v2102 = vadd.f32 %v2100, %v2101
    %v2104 = vsel %vm364, %v2102, 0
    %2106 = vmatpush.msra.mxu0 0.0
    %2107 = vmatpush.msra.mxu0 0.0
    %2108 = vmatpush.msra.mxu0 0.0
    %2109 = vmatpush.msra.mxu0 0.0
    %2110 = vmatpush.msra.mxu0 0.0
    %2111 = vmatpush.msra.mxu0 0.0
    %2112 = vmatpush.msra.mxu0 0.0
    %2113 = vmatpush.msra.mxu0 0.0
    %2114 = vmatpush.msra.mxu0 0.0
    %2115 = vmatpush.msra.mxu0 0.0
    %2116 = vmatpush.msra.mxu0 0.0
    %2117 = vmatpush.msra.mxu0 0.0
    %2118 = vmatpush.msra.mxu0 0.0
    %2119 = vmatpush.msra.mxu0 0.0
    %2120 = vmatpush.msra.mxu0 %v1434
    %2121 = vmatpush.msra.mxu0 %v1433
    %2122 = vmatmul.f32.gmra.mxu0 %v2104
    %v2123 = vpop.f32.mrf.mxu0
    %v2124 = vadd.f32 0.0, %v2123
    %2125 = vdwg.mxu0
    %v2126 = vadd.f32 %v1330, %v2124
    %v2127 = vxor.u32 %v2126, 2147483648
    %v2128 = vmul.f32 %v2127, 1.442695
    %v2129 = vpow.pop %v2128
    %v2130 = vadd.f32 %v2129, 1.0
    %v2131 = vrcp.pop %v2130
    %v2132 = vmul.f32 %v2130, %v2131
    %v2133 = vsub.f32 1.0, %v2132
    %v2134 = vmul.f32 %v2131, %v2133
    %v2135 = vadd.f32 %v2131, %v2134
    %vm2136 = vweird.f32 %v2130
    %vm2137 = vweird.f32 %v2131
    %vm2138 = vmor %vm2136, %vm2137
    %v2139 = vsel %vm2138, %v2131, %v2135
    %v2140 = vand.u32 2147483647, %v2130
    %vm2141 = vcmp.eq.f32.partialorder %v2140, 8.507059e+37
    %v2142 = vand.u32 %v2130, 2147483648
    %v2143 = vor.u32 1.1754944e-38, %v2142
    %v2144 = vsel %vm2141, %v2143, %v2139
    %v2145 = vmul.f32 1.0, %v2144
    %2146 = vmatpush.msra.mxu0 0.0
    %2147 = vmatpush.msra.mxu0 0.0
    %2148 = vmatpush.msra.mxu0 0.0
    %2149 = vmatpush.msra.mxu0 0.0
    %2150 = vmatpush.msra.mxu0 0.0
    %2151 = vmatpush.msra.mxu0 0.0
    %2152 = vmatpush.msra.mxu0 0.0
    %2153 = vmatpush.msra.mxu0 0.0
    %2154 = vmatpush.msra.mxu0 0.0
    %2155 = vmatpush.msra.mxu0 0.0
    %2156 = vmatpush.msra.mxu0 0.0
    %2157 = vmatpush.msra.mxu0 0.0
    %2158 = vmatpush.msra.mxu0 0.0
    %2159 = vmatpush.msra.mxu0 0.0
    %2160 = vmatpush.msra.mxu0 %v1437
    %2161 = vmatpush.msra.mxu0 %v1436
    %2162 = vmatmul.f32.gmra.mxu0 %v2104
    %v2163 = vpop.f32.mrf.mxu0
    %v2164 = vadd.f32 0.0, %v2163
    %2165 = vdwg.mxu0
    %v2166 = vadd.f32 %v1379, %v2164
    %v2167 = vxor.u32 %v2166, 2147483648
    %v2168 = vmul.f32 %v2167, 1.442695
    %v2169 = vpow.pop %v2168
    %v2170 = vadd.f32 %v2169, 1.0
    %v2171 = vrcp.pop %v2170
    %v2172 = vmul.f32 %v2170, %v2171
    %v2173 = vsub.f32 1.0, %v2172
    %v2174 = vmul.f32 %v2171, %v2173
    %v2175 = vadd.f32 %v2171, %v2174
    %vm2176 = vweird.f32 %v2170
    %vm2177 = vweird.f32 %v2171
    %vm2178 = vmor %vm2176, %vm2177
    %v2179 = vsel %vm2178, %v2171, %v2175
    %v2180 = vand.u32 2147483647, %v2170
    %vm2181 = vcmp.eq.f32.partialorder %v2180, 8.507059e+37
    %v2182 = vand.u32 %v2170, 2147483648
    %v2183 = vor.u32 1.1754944e-38, %v2182
    %v2184 = vsel %vm2181, %v2183, %v2179
    %v2185 = vmul.f32 1.0, %v2184
    %2186 = vmatpush.msra.mxu0 0.0
    %2187 = vmatpush.msra.mxu0 0.0
    %2188 = vmatpush.msra.mxu0 0.0
    %2189 = vmatpush.msra.mxu0 0.0
    %2190 = vmatpush.msra.mxu0 0.0
    %2191 = vmatpush.msra.mxu0 0.0
    %2192 = vmatpush.msra.mxu0 0.0
    %2193 = vmatpush.msra.mxu0 0.0
    %2194 = vmatpush.msra.mxu0 0.0
    %2195 = vmatpush.msra.mxu0 0.0
    %2196 = vmatpush.msra.mxu0 0.0
    %2197 = vmatpush.msra.mxu0 0.0
    %2198 = vmatpush.msra.mxu0 0.0
    %2199 = vmatpush.msra.mxu0 0.0
    %2200 = vmatpush.msra.mxu0 %v1440
    %2201 = vmatpush.msra.mxu0 %v1439
    %2202 = vmatmul.f32.gmra.mxu0 %v2104
    %v2203 = vpop.f32.mrf.mxu0
    %v2204 = vadd.f32 %v1524, %v2203
    %2205 = vdwg.mxu0
    %v2206 = vmul.f32 %v2145, %v2204
    %v2207 = vadd.f32 %v1428, %v2206
    %v2208 = vtanh.pop %v2207
    %v2209 = vsub.f32 1.0, %v2185
    %v2210 = vmul.f32 %v2209, %v2208
    %v2211 = vmul.f32 %v2185, %v2102
    %v2212 = vadd.f32 %v2210, %v2211
    %v2214 = vsel %vm364, %v2212, 0
    %2216 = vmatpush.msra.mxu0 0.0
    %2217 = vmatpush.msra.mxu0 0.0
    %2218 = vmatpush.msra.mxu0 0.0
    %2219 = vmatpush.msra.mxu0 0.0
    %2220 = vmatpush.msra.mxu0 0.0
    %2221 = vmatpush.msra.mxu0 0.0
    %2222 = vmatpush.msra.mxu0 0.0
    %2223 = vmatpush.msra.mxu0 0.0
    %2224 = vmatpush.msra.mxu0 0.0
    %2225 = vmatpush.msra.mxu0 0.0
    %2226 = vmatpush.msra.mxu0 0.0
    %2227 = vmatpush.msra.mxu0 0.0
    %2228 = vmatpush.msra.mxu0 0.0
    %2229 = vmatpush.msra.mxu0 0.0
    %2230 = vmatpush.msra.mxu0 %v1434
    %2231 = vmatpush.msra.mxu0 %v1433
    %2232 = vmatmul.f32.gmra.mxu0 %v2214
    %v2233 = vpop.f32.mrf.mxu0
    %v2234 = vadd.f32 0.0, %v2233
    %2235 = vdwg.mxu0
    %v2236 = vadd.f32 %v1333, %v2234
    %v2237 = vxor.u32 %v2236, 2147483648
    %v2238 = vmul.f32 %v2237, 1.442695
    %v2239 = vpow.pop %v2238
    %v2240 = vadd.f32 %v2239, 1.0
    %v2241 = vrcp.pop %v2240
    %v2242 = vmul.f32 %v2240, %v2241
    %v2243 = vsub.f32 1.0, %v2242
    %v2244 = vmul.f32 %v2241, %v2243
    %v2245 = vadd.f32 %v2241, %v2244
    %vm2246 = vweird.f32 %v2240
    %vm2247 = vweird.f32 %v2241
    %vm2248 = vmor %vm2246, %vm2247
    %v2249 = vsel %vm2248, %v2241, %v2245
    %v2250 = vand.u32 2147483647, %v2240
    %vm2251 = vcmp.eq.f32.partialorder %v2250, 8.507059e+37
    %v2252 = vand.u32 %v2240, 2147483648
    %v2253 = vor.u32 1.1754944e-38, %v2252
    %v2254 = vsel %vm2251, %v2253, %v2249
    %v2255 = vmul.f32 1.0, %v2254
    %2256 = vmatpush.msra.mxu0 0.0
    %2257 = vmatpush.msra.mxu0 0.0
    %2258 = vmatpush.msra.mxu0 0.0
    %2259 = vmatpush.msra.mxu0 0.0
    %2260 = vmatpush.msra.mxu0 0.0
    %2261 = vmatpush.msra.mxu0 0.0
    %2262 = vmatpush.msra.mxu0 0.0
    %2263 = vmatpush.msra.mxu0 0.0
    %2264 = vmatpush.msra.mxu0 0.0
    %2265 = vmatpush.msra.mxu0 0.0
    %2266 = vmatpush.msra.mxu0 0.0
    %2267 = vmatpush.msra.mxu0 0.0
    %2268 = vmatpush.msra.mxu0 0.0
    %2269 = vmatpush.msra.mxu0 0.0
    %2270 = vmatpush.msra.mxu0 %v1437
    %2271 = vmatpush.msra.mxu0 %v1436
    %2272 = vmatmul.f32.gmra.mxu0 %v2214
    %v2273 = vpop.f32.mrf.mxu0
    %v2274 = vadd.f32 0.0, %v2273
    %2275 = vdwg.mxu0
    %v2276 = vadd.f32 %v1382, %v2274
    %v2277 = vxor.u32 %v2276, 2147483648
    %v2278 = vmul.f32 %v2277, 1.442695
    %v2279 = vpow.pop %v2278
    %v2280 = vadd.f32 %v2279, 1.0
    %v2281 = vrcp.pop %v2280
    %v2282 = vmul.f32 %v2280, %v2281
    %v2283 = vsub.f32 1.0, %v2282
    %v2284 = vmul.f32 %v2281, %v2283
    %v2285 = vadd.f32 %v2281, %v2284
    %vm2286 = vweird.f32 %v2280
    %vm2287 = vweird.f32 %v2281
    %vm2288 = vmor %vm2286, %vm2287
    %v2289 = vsel %vm2288, %v2281, %v2285
    %v2290 = vand.u32 2147483647, %v2280
    %vm2291 = vcmp.eq.f32.partialorder %v2290, 8.507059e+37
    %v2292 = vand.u32 %v2280, 2147483648
    %v2293 = vor.u32 1.1754944e-38, %v2292
    %v2294 = vsel %vm2291, %v2293, %v2289
    %v2295 = vmul.f32 1.0, %v2294
    %2296 = vmatpush.msra.mxu0 0.0
    %2297 = vmatpush.msra.mxu0 0.0
    %2298 = vmatpush.msra.mxu0 0.0
    %2299 = vmatpush.msra.mxu0 0.0
    %2300 = vmatpush.msra.mxu0 0.0
    %2301 = vmatpush.msra.mxu0 0.0
    %2302 = vmatpush.msra.mxu0 0.0
    %2303 = vmatpush.msra.mxu0 0.0
    %2304 = vmatpush.msra.mxu0 0.0
    %2305 = vmatpush.msra.mxu0 0.0
    %2306 = vmatpush.msra.mxu0 0.0
    %2307 = vmatpush.msra.mxu0 0.0
    %2308 = vmatpush.msra.mxu0 0.0
    %2309 = vmatpush.msra.mxu0 0.0
    %2310 = vmatpush.msra.mxu0 %v1440
    %2311 = vmatpush.msra.mxu0 %v1439
    %2312 = vmatmul.f32.gmra.mxu0 %v2214
    %v2313 = vpop.f32.mrf.mxu0
    %v2314 = vadd.f32 %v1524, %v2313
    %2315 = vdwg.mxu0
    %v2316 = vmul.f32 %v2255, %v2314
    %v2317 = vadd.f32 %v1431, %v2316
    %v2318 = vtanh.pop %v2317
    %v2319 = vsub.f32 1.0, %v2295
    %v2320 = vmul.f32 %v2319, %v2318
    %v2321 = vmul.f32 %v2295, %v2212
    %v2322 = vadd.f32 %v2320, %v2321
    %v2323 = vld [vmem:[#allocation10] sm:$0xff]
    %v2324 = vld [vmem:[#allocation10 + $0x8] sm:$0xff]
    %v2325 = vld [vmem:[%s9] sm:$0x1]
    %v2327 = vperm.slane %v2325, 0
    %v2330 = vsel %vm364, %v2322, 0
    %2332 = vmatpush.msra.mxu0 0.0
    %2333 = vmatpush.msra.mxu0 0.0
    %2334 = vmatpush.msra.mxu0 0.0
    %2335 = vmatpush.msra.mxu0 0.0
    %2336 = vmatpush.msra.mxu0 0.0
    %2337 = vmatpush.msra.mxu0 0.0
    %2338 = vmatpush.msra.mxu0 0.0
    %2339 = vmatpush.msra.mxu0 0.0
    %2340 = vmatpush.msra.mxu0 0.0
    %2341 = vmatpush.msra.mxu0 0.0
    %2342 = vmatpush.msra.mxu0 0.0
    %2343 = vmatpush.msra.mxu0 0.0
    %2344 = vmatpush.msra.mxu0 0.0
    %2345 = vmatpush.msra.mxu0 0.0
    %2346 = vmatpush.msra.mxu0 %v2324
    %2347 = vmatpush.msra.mxu0 %v2323
    %2348 = vmatmul.f32.gmra.mxu0 %v2330
    %v2349 = vpop.f32.mrf.mxu0
    %v2350 = vadd.f32 %v2327, %v2349
    %2351 = vdwg.mxu0
    %v2352 = vld [vmem:[#allocation3] sm:$0xff]
    %v2353 = vld [vmem:[#allocation11] sm:$0xff]
    %v2354 = vld [vmem:[#allocation11 + $0x8] sm:$0xff]
    %v2355 = vld [vmem:[%s11] sm:$0x1]
    %v2357 = vperm.slane %v2355, 0
    %v2360 = vsel %vm364, %v2352, 0
    %2362 = vmatpush.msra.mxu0 0.0
    %2363 = vmatpush.msra.mxu0 0.0
    %2364 = vmatpush.msra.mxu0 0.0
    %2365 = vmatpush.msra.mxu0 0.0
    %2366 = vmatpush.msra.mxu0 0.0
    %2367 = vmatpush.msra.mxu0 0.0
    %2368 = vmatpush.msra.mxu0 0.0
    %2369 = vmatpush.msra.mxu0 0.0
    %2370 = vmatpush.msra.mxu0 0.0
    %2371 = vmatpush.msra.mxu0 0.0
    %2372 = vmatpush.msra.mxu0 0.0
    %2373 = vmatpush.msra.mxu0 0.0
    %2374 = vmatpush.msra.mxu0 0.0
    %2375 = vmatpush.msra.mxu0 0.0
    %2376 = vmatpush.msra.mxu0 %v2354
    %2377 = vmatpush.msra.mxu0 %v2353
    %2378 = vmatmul.f32.gmra.mxu0 %v2360
    %v2379 = vpop.f32.mrf.mxu0
    %v2380 = vadd.f32 %v2357, %v2379
    %2381 = vdwg.mxu0
    %v2382 = vmax.f32 %v2380, 0.0
    %v2383 = vld [vmem:[#allocation13] sm:$0xff]
    %v2384 = vld [vmem:[#allocation13 + $0x8] sm:$0xff]
    %v2385 = vld [vmem:[#allocation13 + $0x10] sm:$0xff]
    %v2386 = vld [vmem:[#allocation13 + $0x18] sm:$0xff]
    %v2387 = vld [vmem:[#allocation14] sm:$0xff]
    %v2388 = vld [vmem:[#allocation14 + $0x8] sm:$0xff]
    %v2390 = vsel %vm364, %v2350, 0
    %2392 = vmatpush.msra.mxu0 0.0
    %2393 = vmatpush.msra.mxu0 0.0
    %2394 = vmatpush.msra.mxu0 0.0
    %2395 = vmatpush.msra.mxu0 0.0
    %2396 = vmatpush.msra.mxu0 0.0
    %2397 = vmatpush.msra.mxu0 0.0
    %2398 = vmatpush.msra.mxu0 0.0
    %2399 = vmatpush.msra.mxu0 0.0
    %2400 = vmatpush.msra.mxu0 0.0
    %2401 = vmatpush.msra.mxu0 0.0
    %2402 = vmatpush.msra.mxu0 0.0
    %2403 = vmatpush.msra.mxu0 0.0
    %2404 = vmatpush.msra.mxu0 0.0
    %2405 = vmatpush.msra.mxu0 0.0
    %2406 = vmatpush.msra.mxu0 %v2388
    %2407 = vmatpush.msra.mxu0 %v2387
    %2408 = vmatmul.f32.gmra.mxu0 %v2390
    %v2409 = vpop.f32.mrf.mxu0
    %v2410 = vadd.f32 0.0, %v2409
    %2411 = vdwg.mxu0
    %vm2412 = vcmask 261120
    %v2414 = vsel %vm2412, %v2382, 0
    %2416 = vmatpush.msra.mxu0 0.0
    %2417 = vmatpush.msra.mxu0 0.0
    %2418 = vmatpush.msra.mxu0 0.0
    %2419 = vmatpush.msra.mxu0 0.0
    %2420 = vmatpush.msra.mxu0 0.0
    %2421 = vmatpush.msra.mxu0 0.0
    %2422 = vmatpush.msra.mxu0 0.0
    %2423 = vmatpush.msra.mxu0 0.0
    %2424 = vmatpush.msra.mxu0 0.0
    %2425 = vmatpush.msra.mxu0 0.0
    %2426 = vmatpush.msra.mxu0 0.0
    %2427 = vmatpush.msra.mxu0 0.0
    %2428 = vmatpush.msra.mxu0 %v2386
    %2429 = vmatpush.msra.mxu0 %v2385
    %2430 = vmatpush.msra.mxu0 %v2384
    %2431 = vmatpush.msra.mxu0 %v2383
    %2432 = vmatmul.f32.gmra.mxu0 %v2414
    %v2433 = vpop.f32.mrf.mxu0
    %v2434 = vadd.f32 %v2410, %v2433
    %2435 = vdwg.mxu0
    %v2436 = vld [vmem:[%s14] sm:$0x1]
    %v2438 = vperm.slane %v2436, 0
    %v2440 = vadd.f32 %v2434, %v2438
    %v2441 = vmax.f32 %v2440, 0.0
    %v2442 = vld [vmem:[%s15] sm:$0xff]
    %v2443 = vld [vmem:[%s15 + $0x8] sm:$0xff]
    %v2444 = vld [vmem:[%s15 + $0x10] sm:$0xff]
    %v2445 = vld [vmem:[%s15 + $0x18] sm:$0xff]
    %v2446 = vld [vmem:[%s16] sm:$0x1]
    %v2448 = vperm.slane %v2446, 0
    %v2451 = vsel %vm2412, %v2441, 0
    %2453 = vmatpush.msra.mxu0 0.0
    %2454 = vmatpush.msra.mxu0 0.0
    %2455 = vmatpush.msra.mxu0 0.0
    %2456 = vmatpush.msra.mxu0 0.0
    %2457 = vmatpush.msra.mxu0 0.0
    %2458 = vmatpush.msra.mxu0 0.0
    %2459 = vmatpush.msra.mxu0 0.0
    %2460 = vmatpush.msra.mxu0 0.0
    %2461 = vmatpush.msra.mxu0 0.0
    %2462 = vmatpush.msra.mxu0 0.0
    %2463 = vmatpush.msra.mxu0 0.0
    %2464 = vmatpush.msra.mxu0 0.0
    %2465 = vmatpush.msra.mxu0 %v2445
    %2466 = vmatpush.msra.mxu0 %v2444
    %2467 = vmatpush.msra.mxu0 %v2443
    %2468 = vmatpush.msra.mxu0 %v2442
    %2469 = vmatmul.f32.gmra.mxu0 %v2451
    %v2470 = vpop.f32.mrf.mxu0
    %v2471 = vadd.f32 %v2448, %v2470
    %2472 = vdwg.mxu0
    %v2473 = vtanh.pop %v2471
    %vm2474 = vcmask 31744
    %2475 = vst.msk [vmem:[%s17] sm:$0xff] %vm2474, %v2473
    // Predicated region
    $region102: #{tpu_custom_call.1} parent=1 // pred_check
      _
    $region103: #{tpu_custom_call.1} parent=1 // pred_check_branch
      %2477 = sbr.rel (0) target = $region105
    $region104: #{tpu_custom_call.1} parent=1 // pred_region
      _
    $region105: #{tpu_custom_call.1} parent=1 // pred_fallthru
      _
    // Predicated region
    $region106: #{tpu_custom_call.1} parent=1 // pred_check
      _
    $region107: #{tpu_custom_call.1} parent=1 // pred_check_branch
      %2479 = sbr.rel (0) target = $region109
    $region108: #{tpu_custom_call.1} parent=1 // pred_region
      _
    $region109: #{tpu_custom_call.1} parent=1 // pred_fallthru
      _
    %2480 = vsyncpa [#allocation4], 1
    %2481 = vsyncpa [#allocation6], 1
    %2482 = vsyncpa [#allocation9], 1
    %2483 = vsyncpa [#allocation12], 1
    %2484 = vsyncpa [#allocation15], 1

</llo_original>
